<compile_context>
chip_gen: v7x
topology: tpu7x:2x2x1
jax: 0.10.0
libtpu: 0.0.40
codegen_flags: <defaults>
</compile_context>

<pallas_src>
import jax
import jax.numpy as jnp
import numpy as np
from jax import lax
from jax.experimental import pallas as pl
from jax.experimental.pallas import tpu as pltpu

EPS = 1e-5


# ------------------------------- fused kernel ------------------------------- #
def _dqn_fused_kernel(x_ref,
                      rs1_ref, m1_ref, s1_ref,
                      rs2_ref, m2_ref, s2_ref,
                      rs3_ref, m3_ref, s3_ref,
                      hsel_ref, wh_ref, bh_ref,
                      o_ref):
    act_dtype = x_ref.dtype
    a = x_ref[...]                                     # (BT*H, W*C), stays in VMEM

    # --- three conv + BN + ReLU layers, all resident in VMEM ---
    for rs_ref, m_ref, s_ref in ((rs1_ref, m1_ref, s1_ref),
                                 (rs2_ref, m2_ref, s2_ref),
                                 (rs3_ref, m3_ref, s3_ref)):
        acc = None
        for i in range(rs_ref.shape[0]):               # 5 kernel rows, static unroll
            rows = jnp.dot(rs_ref[i], a,               # exact 0/1 row selection (MXU)
                           preferred_element_type=jnp.float32)
            part = jnp.dot(rows.astype(m_ref.dtype), m_ref[i],
                           preferred_element_type=jnp.float32)
            acc = part if acc is None else acc + part
        # BN scale already folded into m; add shift, ReLU (f32 epilogue).
        a = jnp.maximum(acc + s_ref[...], 0.0).astype(act_dtype)

    # --- head Linear (bias only) ---
    q = None
    for r in range(hsel_ref.shape[0]):                 # H3 rows of the 2x2 feature map
        rows = jnp.dot(hsel_ref[r], a, preferred_element_type=jnp.float32)
        part = jnp.dot(rows.astype(wh_ref.dtype), wh_ref[r],
                       preferred_element_type=jnp.float32)
        q = part if q is None else q + part
    o_ref[...] = (q + bh_ref[...]).astype(o_ref.dtype)


# ------------------------- operand / BlockSpec builder ----------------------- #
def _conv_out(s):  # kernel 5, stride 2, valid padding
    return (s - 5) // 2 + 1


def _build_operands(x_nchw, params, batch_tile, compute_dtype):
    N, C0, H0, W0 = x_nchw.shape
    BT = batch_tile

    operands, in_specs = [], []

    # Input as 2-D (N*H, W*C): row = n*H + h, col = w*C + c.
    x2d = jnp.transpose(x_nchw, (0, 2, 3, 1)).reshape(N * H0, W0 * C0)
    operands.append(x2d.astype(compute_dtype))
    in_specs.append(pl.BlockSpec((BT * H0, W0 * C0), lambda b: (b, 0)))

    h, w, cin = H0, W0, C0
    for name in ("l1", "l2", "l3"):
        p = params[name]
        ho, wo = _conv_out(h), _conv_out(w)
        cout = p["w"].shape[0]

        # Fold inference-mode BN into a scale (into weights) and a shift (one add).
        scale = p["gamma"] / jnp.sqrt(p["var"] + EPS)              # (cout,)
        shift = p["beta"] + (p["b"] - p["mean"]) * scale           # (cout,)
        wc = jnp.transpose(p["w"], (2, 3, 1, 0)) * scale           # (5, 5, cin, cout)

        # M_i[w*cin + c, wo*cout + co] = wc[i, w - 2*wo, c, co]  (0 <= w - 2*wo < 5)
        sel = np.zeros((5, w, wo), np.float32)                     # width stride-2 selection
        for j in range(5):
            sel[j, 2 * np.arange(wo) + j, np.arange(wo)] = 1.0
        m = jnp.einsum("jwv,ijco->iwcvo", jnp.asarray(sel), wc)
        m = m.reshape(5, w * cin, wo * cout).astype(compute_dtype)

        # RowSel_i[n*ho + r, n*h + 2*r + i] = 1   (n ranges over the batch tile)
        rs = np.zeros((5, BT * ho, BT * h), np.float32)
        rows = np.arange(BT * ho)
        for i in range(5):
            rs[i, rows, (rows // ho) * h + 2 * (rows % ho) + i] = 1.0
        rs = jnp.asarray(rs, compute_dtype)

        shift_row = jnp.tile(shift, (wo,)).reshape(1, wo * cout).astype(jnp.float32)

        operands += [rs, m, shift_row]
        in_specs += [
            pl.BlockSpec((5, BT * ho, BT * h), lambda b: (0, 0, 0)),
            pl.BlockSpec((5, w * cin, wo * cout), lambda b: (0, 0, 0)),
            pl.BlockSpec((1, wo * cout), lambda b: (0, 0)),
        ]
        h, w, cin = ho, wo, cout

    # Head: PyTorch flattens NCHW; our layout is [n*h + r, w*c + ch] -> permute weights.
    hw_, hb_ = params["head"]["w"], params["head"]["b"]
    n_act = hw_.shape[0]
    wh = (hw_.reshape(n_act, cin, h, w).transpose(2, 3, 1, 0)
          .reshape(h, w * cin, n_act).astype(compute_dtype))
    hsel = np.zeros((h, BT, BT * h), np.float32)
    for r in range(h):
        hsel[r, np.arange(BT), np.arange(BT) * h + r] = 1.0
    operands += [jnp.asarray(hsel, compute_dtype), wh,
                 hb_.reshape(1, n_act).astype(jnp.float32)]
    in_specs += [
        pl.BlockSpec((h, BT, BT * h), lambda b: (0, 0, 0)),
        pl.BlockSpec((h, w * cin, n_act), lambda b: (0, 0, 0)),
        pl.BlockSpec((1, n_act), lambda b: (0, 0)),
    ]
    return operands, in_specs, n_act


def dqn_forward(x_nchw, params, *, batch_tile=None, compute_dtype=jnp.bfloat16):
    N = x_nchw.shape[0]
    bt = batch_tile if batch_tile is not None else (8 if N % 8 == 0 else N)
    assert N % bt == 0, (N, bt)

    operands, in_specs, n_act = _build_operands(x_nchw, params, bt, compute_dtype)
    return pl.pallas_call(
        _dqn_fused_kernel,
        out_shape=jax.ShapeDtypeStruct((N, n_act), jnp.float32),
        grid=(N // bt,),
        in_specs=in_specs,
        out_specs=pl.BlockSpec((bt, n_act), lambda b: (b, 0)),
        compiler_params=pltpu.CompilerParams(
            dimension_semantics=("parallel",),
            vmem_limit_bytes=32 * 1024 * 1024),
    )(*operands)


# ---------------------------- reference (pure JAX) --------------------------- #
def ref_forward(x_nchw, params):
    x = x_nchw
    for name in ("l1", "l2", "l3"):
        p = params[name]
        x = lax.conv_general_dilated(
            x, p["w"], window_strides=(2, 2), padding="VALID",
            dimension_numbers=("NCHW", "OIHW", "NCHW"))
        x = x + p["b"][None, :, None, None]
        x = (x - p["mean"][None, :, None, None]) / jnp.sqrt(p["var"][None, :, None, None] + EPS)
        x = x * p["gamma"][None, :, None, None] + p["beta"][None, :, None, None]
        x = jnp.maximum(x, 0.0)
    flat = x.reshape(x.shape[0], -1)
    return flat @ params["head"]["w"].T + params["head"]["b"]


# ------------------------------- parameter init ------------------------------ #
def init_params(key, h, w):
    convw = _conv_out(_conv_out(_conv_out(w)))
    convh = _conv_out(_conv_out(_conv_out(h)))
    lin_in = convw * convh * 32

    keys = jax.random.split(key, 5)

    def conv_layer(k, cin, cout):
        kw_, kb_ = jax.random.split(k)
        return dict(
            w=0.1 * jax.random.normal(kw_, (cout, cin, 5, 5), jnp.float32),
            b=0.1 * jax.random.normal(kb_, (cout,), jnp.float32),
            gamma=jnp.ones((cout,), jnp.float32),
            beta=jnp.zeros((cout,), jnp.float32),
            mean=jnp.zeros((cout,), jnp.float32),
            var=jnp.ones((cout,), jnp.float32),
        )

    return dict(
        l1=conv_layer(keys[0], 3, 16),
        l2=conv_layer(keys[1], 16, 32),
        l3=conv_layer(keys[2], 32, 32),
        head=dict(
            w=0.1 * jax.random.normal(keys[3], (12, lin_in), jnp.float32),
            b=0.1 * jax.random.normal(keys[4], (12,), jnp.float32),
        ),
    )


if __name__ == "__main__":
    key = jax.random.PRNGKey(0)
    batch, h, w = 2, 40, 40  # 40 -> 18 -> 7 -> 2 spatial; head input = 2*2*32 = 128
    k_in, k_p = jax.random.split(key)
    x = jax.random.normal(k_in, (batch, 3, h, w), jnp.float32)
    params = init_params(k_p, h, w)

    ref = jax.block_until_ready(ref_forward(x, params))

    # f32 operand path: strict numerical check of the fused-kernel structure.
    out_f32 = jax.block_until_ready(dqn_forward(x, params, compute_dtype=jnp.float32))
    assert out_f32.shape == (batch, 12), out_f32.shape
    np.testing.assert_allclose(np.asarray(out_f32), np.asarray(ref), rtol=1e-3, atol=1e-3)

    # Default bf16 fast path (MXU-native operands, f32 accumulation): tolerance
    # loosened to cover ~1% relative error from bf16 operand rounding across 4 layers.
    out_bf16 = jax.block_until_ready(dqn_forward(x, params))
    assert out_bf16.shape == (batch, 12), out_bf16.shape
    np.testing.assert_allclose(np.asarray(out_bf16), np.asarray(ref), rtol=1e-1, atol=1e-1)

    print("KERNEL_OK")
</pallas_src>

<mosaic_0001>
module attributes {stable_mosaic.version = 11 : i64} {
  func.func @_dqn_fused_kernel(%arg0: i32, %arg1: memref<80x120xf32, #tpu.memory_space<vmem>>, %arg2: memref<5x36x80xf32, #tpu.memory_space<vmem>>, %arg3: memref<5x120x288xf32, #tpu.memory_space<vmem>>, %arg4: memref<1x288xf32, #tpu.memory_space<vmem>>, %arg5: memref<5x14x36xf32, #tpu.memory_space<vmem>>, %arg6: memref<5x288x224xf32, #tpu.memory_space<vmem>>, %arg7: memref<1x224xf32, #tpu.memory_space<vmem>>, %arg8: memref<5x4x14xf32, #tpu.memory_space<vmem>>, %arg9: memref<5x224x64xf32, #tpu.memory_space<vmem>>, %arg10: memref<1x64xf32, #tpu.memory_space<vmem>>, %arg11: memref<2x2x4xf32, #tpu.memory_space<vmem>>, %arg12: memref<2x64x12xf32, #tpu.memory_space<vmem>>, %arg13: memref<1x12xf32, #tpu.memory_space<vmem>>, %arg14: memref<2x12xf32, #tpu.memory_space<vmem>>) attributes {dimension_semantics = [#tpu.dimension_semantics<parallel>], iteration_bounds = array<i64: 1>, scalar_prefetch = 0 : i64, scratch_operands = 0 : i64, tpu.core_type = #tpu.core_type<tc>, window_params = [{transform_indices = @transform_0, window_bounds = array<i64: 80, 120>}, {pipeline_mode = #tpu.pipeline_mode<synchronous>, transform_indices = @transform_1, window_bounds = array<i64: 5, 36, 80>}, {pipeline_mode = #tpu.pipeline_mode<synchronous>, transform_indices = @transform_2, window_bounds = array<i64: 5, 120, 288>}, {pipeline_mode = #tpu.pipeline_mode<synchronous>, transform_indices = @transform_3, window_bounds = array<i64: 1, 288>}, {pipeline_mode = #tpu.pipeline_mode<synchronous>, transform_indices = @transform_4, window_bounds = array<i64: 5, 14, 36>}, {pipeline_mode = #tpu.pipeline_mode<synchronous>, transform_indices = @transform_5, window_bounds = array<i64: 5, 288, 224>}, {pipeline_mode = #tpu.pipeline_mode<synchronous>, transform_indices = @transform_6, window_bounds = array<i64: 1, 224>}, {pipeline_mode = #tpu.pipeline_mode<synchronous>, transform_indices = @transform_7, window_bounds = array<i64: 5, 4, 14>}, {pipeline_mode = #tpu.pipeline_mode<synchronous>, transform_indices = @transform_8, window_bounds = array<i64: 5, 224, 64>}, {pipeline_mode = #tpu.pipeline_mode<synchronous>, transform_indices = @transform_9, window_bounds = array<i64: 1, 64>}, {pipeline_mode = #tpu.pipeline_mode<synchronous>, transform_indices = @transform_10, window_bounds = array<i64: 2, 2, 4>}, {pipeline_mode = #tpu.pipeline_mode<synchronous>, transform_indices = @transform_11, window_bounds = array<i64: 2, 64, 12>}, {pipeline_mode = #tpu.pipeline_mode<synchronous>, transform_indices = @transform_12, window_bounds = array<i64: 1, 12>}, {transform_indices = @transform_13, window_bounds = array<i64: 2, 12>}]} {
    %c0 = arith.constant 0 : index
    %c0_0 = arith.constant 0 : index
    %0 = vector.load %arg1[%c0, %c0_0] : memref<80x120xf32, #tpu.memory_space<vmem>>, vector<80x120xf32>
    %c0_1 = arith.constant 0 : index
    %c0_2 = arith.constant 0 : index
    %c0_3 = arith.constant 0 : index
    %1 = vector.load %arg2[%c0_1, %c0_2, %c0_3] : memref<5x36x80xf32, #tpu.memory_space<vmem>>, vector<1x36x80xf32>
    %2 = vector.shape_cast %1 : vector<1x36x80xf32> to vector<36x80xf32>
    %cst = arith.constant dense<0.000000e+00> : vector<36x120xf32>
    %3 = tpu.matmul %2, %0, %cst {dimension_numbers = #tpu.dot_dimension_numbers<[1], [0], [0], [1], [0, 0, 1, 1], [], []>} : vector<36x80xf32>, vector<80x120xf32>, vector<36x120xf32> -> vector<36x120xf32>
    %c0_4 = arith.constant 0 : index
    %c0_5 = arith.constant 0 : index
    %c0_6 = arith.constant 0 : index
    %4 = vector.load %arg3[%c0_4, %c0_5, %c0_6] : memref<5x120x288xf32, #tpu.memory_space<vmem>>, vector<1x120x288xf32>
    %5 = vector.shape_cast %4 : vector<1x120x288xf32> to vector<120x288xf32>
    %cst_7 = arith.constant dense<0.000000e+00> : vector<36x288xf32>
    %6 = tpu.matmul %3, %5, %cst_7 {dimension_numbers = #tpu.dot_dimension_numbers<[1], [0], [0], [1], [0, 0, 1, 1], [], []>} : vector<36x120xf32>, vector<120x288xf32>, vector<36x288xf32> -> vector<36x288xf32>
    %c1 = arith.constant 1 : index
    %c0_8 = arith.constant 0 : index
    %c0_9 = arith.constant 0 : index
    %7 = vector.load %arg2[%c1, %c0_8, %c0_9] : memref<5x36x80xf32, #tpu.memory_space<vmem>>, vector<1x36x80xf32>
    %8 = vector.shape_cast %7 : vector<1x36x80xf32> to vector<36x80xf32>
    %cst_10 = arith.constant dense<0.000000e+00> : vector<36x120xf32>
    %9 = tpu.matmul %8, %0, %cst_10 {dimension_numbers = #tpu.dot_dimension_numbers<[1], [0], [0], [1], [0, 0, 1, 1], [], []>} : vector<36x80xf32>, vector<80x120xf32>, vector<36x120xf32> -> vector<36x120xf32>
    %c1_11 = arith.constant 1 : index
    %c0_12 = arith.constant 0 : index
    %c0_13 = arith.constant 0 : index
    %10 = vector.load %arg3[%c1_11, %c0_12, %c0_13] : memref<5x120x288xf32, #tpu.memory_space<vmem>>, vector<1x120x288xf32>
    %11 = vector.shape_cast %10 : vector<1x120x288xf32> to vector<120x288xf32>
    %cst_14 = arith.constant dense<0.000000e+00> : vector<36x288xf32>
    %12 = tpu.matmul %9, %11, %cst_14 {dimension_numbers = #tpu.dot_dimension_numbers<[1], [0], [0], [1], [0, 0, 1, 1], [], []>} : vector<36x120xf32>, vector<120x288xf32>, vector<36x288xf32> -> vector<36x288xf32>
    %13 = arith.addf %6, %12 : vector<36x288xf32>
    %c2 = arith.constant 2 : index
    %c0_15 = arith.constant 0 : index
    %c0_16 = arith.constant 0 : index
    %14 = vector.load %arg2[%c2, %c0_15, %c0_16] : memref<5x36x80xf32, #tpu.memory_space<vmem>>, vector<1x36x80xf32>
    %15 = vector.shape_cast %14 : vector<1x36x80xf32> to vector<36x80xf32>
    %cst_17 = arith.constant dense<0.000000e+00> : vector<36x120xf32>
    %16 = tpu.matmul %15, %0, %cst_17 {dimension_numbers = #tpu.dot_dimension_numbers<[1], [0], [0], [1], [0, 0, 1, 1], [], []>} : vector<36x80xf32>, vector<80x120xf32>, vector<36x120xf32> -> vector<36x120xf32>
    %c2_18 = arith.constant 2 : index
    %c0_19 = arith.constant 0 : index
    %c0_20 = arith.constant 0 : index
    %17 = vector.load %arg3[%c2_18, %c0_19, %c0_20] : memref<5x120x288xf32, #tpu.memory_space<vmem>>, vector<1x120x288xf32>
    %18 = vector.shape_cast %17 : vector<1x120x288xf32> to vector<120x288xf32>
    %cst_21 = arith.constant dense<0.000000e+00> : vector<36x288xf32>
    %19 = tpu.matmul %16, %18, %cst_21 {dimension_numbers = #tpu.dot_dimension_numbers<[1], [0], [0], [1], [0, 0, 1, 1], [], []>} : vector<36x120xf32>, vector<120x288xf32>, vector<36x288xf32> -> vector<36x288xf32>
    %20 = arith.addf %13, %19 : vector<36x288xf32>
    %c3 = arith.constant 3 : index
    %c0_22 = arith.constant 0 : index
    %c0_23 = arith.constant 0 : index
    %21 = vector.load %arg2[%c3, %c0_22, %c0_23] : memref<5x36x80xf32, #tpu.memory_space<vmem>>, vector<1x36x80xf32>
    %22 = vector.shape_cast %21 : vector<1x36x80xf32> to vector<36x80xf32>
    %cst_24 = arith.constant dense<0.000000e+00> : vector<36x120xf32>
    %23 = tpu.matmul %22, %0, %cst_24 {dimension_numbers = #tpu.dot_dimension_numbers<[1], [0], [0], [1], [0, 0, 1, 1], [], []>} : vector<36x80xf32>, vector<80x120xf32>, vector<36x120xf32> -> vector<36x120xf32>
    %c3_25 = arith.constant 3 : index
    %c0_26 = arith.constant 0 : index
    %c0_27 = arith.constant 0 : index
    %24 = vector.load %arg3[%c3_25, %c0_26, %c0_27] : memref<5x120x288xf32, #tpu.memory_space<vmem>>, vector<1x120x288xf32>
    %25 = vector.shape_cast %24 : vector<1x120x288xf32> to vector<120x288xf32>
    %cst_28 = arith.constant dense<0.000000e+00> : vector<36x288xf32>
    %26 = tpu.matmul %23, %25, %cst_28 {dimension_numbers = #tpu.dot_dimension_numbers<[1], [0], [0], [1], [0, 0, 1, 1], [], []>} : vector<36x120xf32>, vector<120x288xf32>, vector<36x288xf32> -> vector<36x288xf32>
    %27 = arith.addf %20, %26 : vector<36x288xf32>
    %c4 = arith.constant 4 : index
    %c0_29 = arith.constant 0 : index
    %c0_30 = arith.constant 0 : index
    %28 = vector.load %arg2[%c4, %c0_29, %c0_30] : memref<5x36x80xf32, #tpu.memory_space<vmem>>, vector<1x36x80xf32>
    %29 = vector.shape_cast %28 : vector<1x36x80xf32> to vector<36x80xf32>
    %cst_31 = arith.constant dense<0.000000e+00> : vector<36x120xf32>
    %30 = tpu.matmul %29, %0, %cst_31 {dimension_numbers = #tpu.dot_dimension_numbers<[1], [0], [0], [1], [0, 0, 1, 1], [], []>} : vector<36x80xf32>, vector<80x120xf32>, vector<36x120xf32> -> vector<36x120xf32>
    %c4_32 = arith.constant 4 : index
    %c0_33 = arith.constant 0 : index
    %c0_34 = arith.constant 0 : index
    %31 = vector.load %arg3[%c4_32, %c0_33, %c0_34] : memref<5x120x288xf32, #tpu.memory_space<vmem>>, vector<1x120x288xf32>
    %32 = vector.shape_cast %31 : vector<1x120x288xf32> to vector<120x288xf32>
    %cst_35 = arith.constant dense<0.000000e+00> : vector<36x288xf32>
    %33 = tpu.matmul %30, %32, %cst_35 {dimension_numbers = #tpu.dot_dimension_numbers<[1], [0], [0], [1], [0, 0, 1, 1], [], []>} : vector<36x120xf32>, vector<120x288xf32>, vector<36x288xf32> -> vector<36x288xf32>
    %34 = arith.addf %27, %33 : vector<36x288xf32>
    %c0_36 = arith.constant 0 : index
    %c0_37 = arith.constant 0 : index
    %35 = vector.load %arg4[%c0_36, %c0_37] : memref<1x288xf32, #tpu.memory_space<vmem>>, vector<1x288xf32>
    %36 = vector.broadcast %35 : vector<1x288xf32> to vector<36x288xf32>
    %37 = arith.addf %34, %36 : vector<36x288xf32>
    %cst_38 = arith.constant 0.000000e+00 : f32
    %38 = vector.broadcast %cst_38 : f32 to vector<36x288xf32>
    %39 = arith.maximumf %37, %38 : vector<36x288xf32>
    %c0_39 = arith.constant 0 : index
    %c0_40 = arith.constant 0 : index
    %c0_41 = arith.constant 0 : index
    %40 = vector.load %arg5[%c0_39, %c0_40, %c0_41] : memref<5x14x36xf32, #tpu.memory_space<vmem>>, vector<1x14x36xf32>
    %41 = vector.shape_cast %40 : vector<1x14x36xf32> to vector<14x36xf32>
    %cst_42 = arith.constant dense<0.000000e+00> : vector<14x288xf32>
    %42 = tpu.matmul %41, %39, %cst_42 {dimension_numbers = #tpu.dot_dimension_numbers<[1], [0], [0], [1], [0, 0, 1, 1], [], []>} : vector<14x36xf32>, vector<36x288xf32>, vector<14x288xf32> -> vector<14x288xf32>
    %c0_43 = arith.constant 0 : index
    %c0_44 = arith.constant 0 : index
    %c0_45 = arith.constant 0 : index
    %43 = vector.load %arg6[%c0_43, %c0_44, %c0_45] : memref<5x288x224xf32, #tpu.memory_space<vmem>>, vector<1x288x224xf32>
    %44 = vector.shape_cast %43 : vector<1x288x224xf32> to vector<288x224xf32>
    %cst_46 = arith.constant dense<0.000000e+00> : vector<14x224xf32>
    %45 = tpu.matmul %42, %44, %cst_46 {dimension_numbers = #tpu.dot_dimension_numbers<[1], [0], [0], [1], [0, 0, 1, 1], [], []>} : vector<14x288xf32>, vector<288x224xf32>, vector<14x224xf32> -> vector<14x224xf32>
    %c1_47 = arith.constant 1 : index
    %c0_48 = arith.constant 0 : index
    %c0_49 = arith.constant 0 : index
    %46 = vector.load %arg5[%c1_47, %c0_48, %c0_49] : memref<5x14x36xf32, #tpu.memory_space<vmem>>, vector<1x14x36xf32>
    %47 = vector.shape_cast %46 : vector<1x14x36xf32> to vector<14x36xf32>
    %cst_50 = arith.constant dense<0.000000e+00> : vector<14x288xf32>
    %48 = tpu.matmul %47, %39, %cst_50 {dimension_numbers = #tpu.dot_dimension_numbers<[1], [0], [0], [1], [0, 0, 1, 1], [], []>} : vector<14x36xf32>, vector<36x288xf32>, vector<14x288xf32> -> vector<14x288xf32>
    %c1_51 = arith.constant 1 : index
    %c0_52 = arith.constant 0 : index
    %c0_53 = arith.constant 0 : index
    %49 = vector.load %arg6[%c1_51, %c0_52, %c0_53] : memref<5x288x224xf32, #tpu.memory_space<vmem>>, vector<1x288x224xf32>
    %50 = vector.shape_cast %49 : vector<1x288x224xf32> to vector<288x224xf32>
    %cst_54 = arith.constant dense<0.000000e+00> : vector<14x224xf32>
    %51 = tpu.matmul %48, %50, %cst_54 {dimension_numbers = #tpu.dot_dimension_numbers<[1], [0], [0], [1], [0, 0, 1, 1], [], []>} : vector<14x288xf32>, vector<288x224xf32>, vector<14x224xf32> -> vector<14x224xf32>
    %52 = arith.addf %45, %51 : vector<14x224xf32>
    %c2_55 = arith.constant 2 : index
    %c0_56 = arith.constant 0 : index
    %c0_57 = arith.constant 0 : index
    %53 = vector.load %arg5[%c2_55, %c0_56, %c0_57] : memref<5x14x36xf32, #tpu.memory_space<vmem>>, vector<1x14x36xf32>
    %54 = vector.shape_cast %53 : vector<1x14x36xf32> to vector<14x36xf32>
    %cst_58 = arith.constant dense<0.000000e+00> : vector<14x288xf32>
    %55 = tpu.matmul %54, %39, %cst_58 {dimension_numbers = #tpu.dot_dimension_numbers<[1], [0], [0], [1], [0, 0, 1, 1], [], []>} : vector<14x36xf32>, vector<36x288xf32>, vector<14x288xf32> -> vector<14x288xf32>
    %c2_59 = arith.constant 2 : index
    %c0_60 = arith.constant 0 : index
    %c0_61 = arith.constant 0 : index
    %56 = vector.load %arg6[%c2_59, %c0_60, %c0_61] : memref<5x288x224xf32, #tpu.memory_space<vmem>>, vector<1x288x224xf32>
    %57 = vector.shape_cast %56 : vector<1x288x224xf32> to vector<288x224xf32>
    %cst_62 = arith.constant dense<0.000000e+00> : vector<14x224xf32>
    %58 = tpu.matmul %55, %57, %cst_62 {dimension_numbers = #tpu.dot_dimension_numbers<[1], [0], [0], [1], [0, 0, 1, 1], [], []>} : vector<14x288xf32>, vector<288x224xf32>, vector<14x224xf32> -> vector<14x224xf32>
    %59 = arith.addf %52, %58 : vector<14x224xf32>
    %c3_63 = arith.constant 3 : index
    %c0_64 = arith.constant 0 : index
    %c0_65 = arith.constant 0 : index
    %60 = vector.load %arg5[%c3_63, %c0_64, %c0_65] : memref<5x14x36xf32, #tpu.memory_space<vmem>>, vector<1x14x36xf32>
    %61 = vector.shape_cast %60 : vector<1x14x36xf32> to vector<14x36xf32>
    %cst_66 = arith.constant dense<0.000000e+00> : vector<14x288xf32>
    %62 = tpu.matmul %61, %39, %cst_66 {dimension_numbers = #tpu.dot_dimension_numbers<[1], [0], [0], [1], [0, 0, 1, 1], [], []>} : vector<14x36xf32>, vector<36x288xf32>, vector<14x288xf32> -> vector<14x288xf32>
    %c3_67 = arith.constant 3 : index
    %c0_68 = arith.constant 0 : index
    %c0_69 = arith.constant 0 : index
    %63 = vector.load %arg6[%c3_67, %c0_68, %c0_69] : memref<5x288x224xf32, #tpu.memory_space<vmem>>, vector<1x288x224xf32>
    %64 = vector.shape_cast %63 : vector<1x288x224xf32> to vector<288x224xf32>
    %cst_70 = arith.constant dense<0.000000e+00> : vector<14x224xf32>
    %65 = tpu.matmul %62, %64, %cst_70 {dimension_numbers = #tpu.dot_dimension_numbers<[1], [0], [0], [1], [0, 0, 1, 1], [], []>} : vector<14x288xf32>, vector<288x224xf32>, vector<14x224xf32> -> vector<14x224xf32>
    %66 = arith.addf %59, %65 : vector<14x224xf32>
    %c4_71 = arith.constant 4 : index
    %c0_72 = arith.constant 0 : index
    %c0_73 = arith.constant 0 : index
    %67 = vector.load %arg5[%c4_71, %c0_72, %c0_73] : memref<5x14x36xf32, #tpu.memory_space<vmem>>, vector<1x14x36xf32>
    %68 = vector.shape_cast %67 : vector<1x14x36xf32> to vector<14x36xf32>
    %cst_74 = arith.constant dense<0.000000e+00> : vector<14x288xf32>
    %69 = tpu.matmul %68, %39, %cst_74 {dimension_numbers = #tpu.dot_dimension_numbers<[1], [0], [0], [1], [0, 0, 1, 1], [], []>} : vector<14x36xf32>, vector<36x288xf32>, vector<14x288xf32> -> vector<14x288xf32>
    %c4_75 = arith.constant 4 : index
    %c0_76 = arith.constant 0 : index
    %c0_77 = arith.constant 0 : index
    %70 = vector.load %arg6[%c4_75, %c0_76, %c0_77] : memref<5x288x224xf32, #tpu.memory_space<vmem>>, vector<1x288x224xf32>
    %71 = vector.shape_cast %70 : vector<1x288x224xf32> to vector<288x224xf32>
    %cst_78 = arith.constant dense<0.000000e+00> : vector<14x224xf32>
    %72 = tpu.matmul %69, %71, %cst_78 {dimension_numbers = #tpu.dot_dimension_numbers<[1], [0], [0], [1], [0, 0, 1, 1], [], []>} : vector<14x288xf32>, vector<288x224xf32>, vector<14x224xf32> -> vector<14x224xf32>
    %73 = arith.addf %66, %72 : vector<14x224xf32>
    %c0_79 = arith.constant 0 : index
    %c0_80 = arith.constant 0 : index
    %74 = vector.load %arg7[%c0_79, %c0_80] : memref<1x224xf32, #tpu.memory_space<vmem>>, vector<1x224xf32>
    %75 = vector.broadcast %74 : vector<1x224xf32> to vector<14x224xf32>
    %76 = arith.addf %73, %75 : vector<14x224xf32>
    %cst_81 = arith.constant 0.000000e+00 : f32
    %77 = vector.broadcast %cst_81 : f32 to vector<14x224xf32>
    %78 = arith.maximumf %76, %77 : vector<14x224xf32>
    %c0_82 = arith.constant 0 : index
    %c0_83 = arith.constant 0 : index
    %c0_84 = arith.constant 0 : index
    %79 = vector.load %arg8[%c0_82, %c0_83, %c0_84] : memref<5x4x14xf32, #tpu.memory_space<vmem>>, vector<1x4x14xf32>
    %80 = vector.shape_cast %79 : vector<1x4x14xf32> to vector<4x14xf32>
    %cst_85 = arith.constant dense<0.000000e+00> : vector<4x224xf32>
    %81 = tpu.matmul %80, %78, %cst_85 {dimension_numbers = #tpu.dot_dimension_numbers<[1], [0], [0], [1], [0, 0, 1, 1], [], []>} : vector<4x14xf32>, vector<14x224xf32>, vector<4x224xf32> -> vector<4x224xf32>
    %c0_86 = arith.constant 0 : index
    %c0_87 = arith.constant 0 : index
    %c0_88 = arith.constant 0 : index
    %82 = vector.load %arg9[%c0_86, %c0_87, %c0_88] : memref<5x224x64xf32, #tpu.memory_space<vmem>>, vector<1x224x64xf32>
    %83 = vector.shape_cast %82 : vector<1x224x64xf32> to vector<224x64xf32>
    %cst_89 = arith.constant dense<0.000000e+00> : vector<4x64xf32>
    %84 = tpu.matmul %81, %83, %cst_89 {dimension_numbers = #tpu.dot_dimension_numbers<[1], [0], [0], [1], [0, 0, 1, 1], [], []>} : vector<4x224xf32>, vector<224x64xf32>, vector<4x64xf32> -> vector<4x64xf32>
    %c1_90 = arith.constant 1 : index
    %c0_91 = arith.constant 0 : index
    %c0_92 = arith.constant 0 : index
    %85 = vector.load %arg8[%c1_90, %c0_91, %c0_92] : memref<5x4x14xf32, #tpu.memory_space<vmem>>, vector<1x4x14xf32>
    %86 = vector.shape_cast %85 : vector<1x4x14xf32> to vector<4x14xf32>
    %cst_93 = arith.constant dense<0.000000e+00> : vector<4x224xf32>
    %87 = tpu.matmul %86, %78, %cst_93 {dimension_numbers = #tpu.dot_dimension_numbers<[1], [0], [0], [1], [0, 0, 1, 1], [], []>} : vector<4x14xf32>, vector<14x224xf32>, vector<4x224xf32> -> vector<4x224xf32>
    %c1_94 = arith.constant 1 : index
    %c0_95 = arith.constant 0 : index
    %c0_96 = arith.constant 0 : index
    %88 = vector.load %arg9[%c1_94, %c0_95, %c0_96] : memref<5x224x64xf32, #tpu.memory_space<vmem>>, vector<1x224x64xf32>
    %89 = vector.shape_cast %88 : vector<1x224x64xf32> to vector<224x64xf32>
    %cst_97 = arith.constant dense<0.000000e+00> : vector<4x64xf32>
    %90 = tpu.matmul %87, %89, %cst_97 {dimension_numbers = #tpu.dot_dimension_numbers<[1], [0], [0], [1], [0, 0, 1, 1], [], []>} : vector<4x224xf32>, vector<224x64xf32>, vector<4x64xf32> -> vector<4x64xf32>
    %91 = arith.addf %84, %90 : vector<4x64xf32>
    %c2_98 = arith.constant 2 : index
    %c0_99 = arith.constant 0 : index
    %c0_100 = arith.constant 0 : index
    %92 = vector.load %arg8[%c2_98, %c0_99, %c0_100] : memref<5x4x14xf32, #tpu.memory_space<vmem>>, vector<1x4x14xf32>
    %93 = vector.shape_cast %92 : vector<1x4x14xf32> to vector<4x14xf32>
    %cst_101 = arith.constant dense<0.000000e+00> : vector<4x224xf32>
    %94 = tpu.matmul %93, %78, %cst_101 {dimension_numbers = #tpu.dot_dimension_numbers<[1], [0], [0], [1], [0, 0, 1, 1], [], []>} : vector<4x14xf32>, vector<14x224xf32>, vector<4x224xf32> -> vector<4x224xf32>
    %c2_102 = arith.constant 2 : index
    %c0_103 = arith.constant 0 : index
    %c0_104 = arith.constant 0 : index
    %95 = vector.load %arg9[%c2_102, %c0_103, %c0_104] : memref<5x224x64xf32, #tpu.memory_space<vmem>>, vector<1x224x64xf32>
    %96 = vector.shape_cast %95 : vector<1x224x64xf32> to vector<224x64xf32>
    %cst_105 = arith.constant dense<0.000000e+00> : vector<4x64xf32>
    %97 = tpu.matmul %94, %96, %cst_105 {dimension_numbers = #tpu.dot_dimension_numbers<[1], [0], [0], [1], [0, 0, 1, 1], [], []>} : vector<4x224xf32>, vector<224x64xf32>, vector<4x64xf32> -> vector<4x64xf32>
    %98 = arith.addf %91, %97 : vector<4x64xf32>
    %c3_106 = arith.constant 3 : index
    %c0_107 = arith.constant 0 : index
    %c0_108 = arith.constant 0 : index
    %99 = vector.load %arg8[%c3_106, %c0_107, %c0_108] : memref<5x4x14xf32, #tpu.memory_space<vmem>>, vector<1x4x14xf32>
    %100 = vector.shape_cast %99 : vector<1x4x14xf32> to vector<4x14xf32>
    %cst_109 = arith.constant dense<0.000000e+00> : vector<4x224xf32>
    %101 = tpu.matmul %100, %78, %cst_109 {dimension_numbers = #tpu.dot_dimension_numbers<[1], [0], [0], [1], [0, 0, 1, 1], [], []>} : vector<4x14xf32>, vector<14x224xf32>, vector<4x224xf32> -> vector<4x224xf32>
    %c3_110 = arith.constant 3 : index
    %c0_111 = arith.constant 0 : index
    %c0_112 = arith.constant 0 : index
    %102 = vector.load %arg9[%c3_110, %c0_111, %c0_112] : memref<5x224x64xf32, #tpu.memory_space<vmem>>, vector<1x224x64xf32>
    %103 = vector.shape_cast %102 : vector<1x224x64xf32> to vector<224x64xf32>
    %cst_113 = arith.constant dense<0.000000e+00> : vector<4x64xf32>
    %104 = tpu.matmul %101, %103, %cst_113 {dimension_numbers = #tpu.dot_dimension_numbers<[1], [0], [0], [1], [0, 0, 1, 1], [], []>} : vector<4x224xf32>, vector<224x64xf32>, vector<4x64xf32> -> vector<4x64xf32>
    %105 = arith.addf %98, %104 : vector<4x64xf32>
    %c4_114 = arith.constant 4 : index
    %c0_115 = arith.constant 0 : index
    %c0_116 = arith.constant 0 : index
    %106 = vector.load %arg8[%c4_114, %c0_115, %c0_116] : memref<5x4x14xf32, #tpu.memory_space<vmem>>, vector<1x4x14xf32>
    %107 = vector.shape_cast %106 : vector<1x4x14xf32> to vector<4x14xf32>
    %cst_117 = arith.constant dense<0.000000e+00> : vector<4x224xf32>
    %108 = tpu.matmul %107, %78, %cst_117 {dimension_numbers = #tpu.dot_dimension_numbers<[1], [0], [0], [1], [0, 0, 1, 1], [], []>} : vector<4x14xf32>, vector<14x224xf32>, vector<4x224xf32> -> vector<4x224xf32>
    %c4_118 = arith.constant 4 : index
    %c0_119 = arith.constant 0 : index
    %c0_120 = arith.constant 0 : index
    %109 = vector.load %arg9[%c4_118, %c0_119, %c0_120] : memref<5x224x64xf32, #tpu.memory_space<vmem>>, vector<1x224x64xf32>
    %110 = vector.shape_cast %109 : vector<1x224x64xf32> to vector<224x64xf32>
    %cst_121 = arith.constant dense<0.000000e+00> : vector<4x64xf32>
    %111 = tpu.matmul %108, %110, %cst_121 {dimension_numbers = #tpu.dot_dimension_numbers<[1], [0], [0], [1], [0, 0, 1, 1], [], []>} : vector<4x224xf32>, vector<224x64xf32>, vector<4x64xf32> -> vector<4x64xf32>
    %112 = arith.addf %105, %111 : vector<4x64xf32>
    %c0_122 = arith.constant 0 : index
    %c0_123 = arith.constant 0 : index
    %113 = vector.load %arg10[%c0_122, %c0_123] : memref<1x64xf32, #tpu.memory_space<vmem>>, vector<1x64xf32>
    %114 = vector.broadcast %113 : vector<1x64xf32> to vector<4x64xf32>
    %115 = arith.addf %112, %114 : vector<4x64xf32>
    %cst_124 = arith.constant 0.000000e+00 : f32
    %116 = vector.broadcast %cst_124 : f32 to vector<4x64xf32>
    %117 = arith.maximumf %115, %116 : vector<4x64xf32>
    %c0_125 = arith.constant 0 : index
    %c0_126 = arith.constant 0 : index
    %c0_127 = arith.constant 0 : index
    %118 = vector.load %arg11[%c0_125, %c0_126, %c0_127] : memref<2x2x4xf32, #tpu.memory_space<vmem>>, vector<1x2x4xf32>
    %119 = vector.shape_cast %118 : vector<1x2x4xf32> to vector<2x4xf32>
    %cst_128 = arith.constant dense<0.000000e+00> : vector<2x64xf32>
    %120 = tpu.matmul %119, %117, %cst_128 {dimension_numbers = #tpu.dot_dimension_numbers<[1], [0], [0], [1], [0, 0, 1, 1], [], []>} : vector<2x4xf32>, vector<4x64xf32>, vector<2x64xf32> -> vector<2x64xf32>
    %c0_129 = arith.constant 0 : index
    %c0_130 = arith.constant 0 : index
    %c0_131 = arith.constant 0 : index
    %121 = vector.load %arg12[%c0_129, %c0_130, %c0_131] : memref<2x64x12xf32, #tpu.memory_space<vmem>>, vector<1x64x12xf32>
    %122 = vector.shape_cast %121 : vector<1x64x12xf32> to vector<64x12xf32>
    %cst_132 = arith.constant dense<0.000000e+00> : vector<2x12xf32>
    %123 = tpu.matmul %120, %122, %cst_132 {dimension_numbers = #tpu.dot_dimension_numbers<[1], [0], [0], [1], [0, 0, 1, 1], [], []>} : vector<2x64xf32>, vector<64x12xf32>, vector<2x12xf32> -> vector<2x12xf32>
    %c1_133 = arith.constant 1 : index
    %c0_134 = arith.constant 0 : index
    %c0_135 = arith.constant 0 : index
    %124 = vector.load %arg11[%c1_133, %c0_134, %c0_135] : memref<2x2x4xf32, #tpu.memory_space<vmem>>, vector<1x2x4xf32>
    %125 = vector.shape_cast %124 : vector<1x2x4xf32> to vector<2x4xf32>
    %cst_136 = arith.constant dense<0.000000e+00> : vector<2x64xf32>
    %126 = tpu.matmul %125, %117, %cst_136 {dimension_numbers = #tpu.dot_dimension_numbers<[1], [0], [0], [1], [0, 0, 1, 1], [], []>} : vector<2x4xf32>, vector<4x64xf32>, vector<2x64xf32> -> vector<2x64xf32>
    %c1_137 = arith.constant 1 : index
    %c0_138 = arith.constant 0 : index
    %c0_139 = arith.constant 0 : index
    %127 = vector.load %arg12[%c1_137, %c0_138, %c0_139] : memref<2x64x12xf32, #tpu.memory_space<vmem>>, vector<1x64x12xf32>
    %128 = vector.shape_cast %127 : vector<1x64x12xf32> to vector<64x12xf32>
    %cst_140 = arith.constant dense<0.000000e+00> : vector<2x12xf32>
    %129 = tpu.matmul %126, %128, %cst_140 {dimension_numbers = #tpu.dot_dimension_numbers<[1], [0], [0], [1], [0, 0, 1, 1], [], []>} : vector<2x64xf32>, vector<64x12xf32>, vector<2x12xf32> -> vector<2x12xf32>
    %130 = arith.addf %123, %129 : vector<2x12xf32>
    %c0_141 = arith.constant 0 : index
    %c0_142 = arith.constant 0 : index
    %131 = vector.load %arg13[%c0_141, %c0_142] : memref<1x12xf32, #tpu.memory_space<vmem>>, vector<1x12xf32>
    %132 = vector.broadcast %131 : vector<1x12xf32> to vector<2x12xf32>
    %133 = arith.addf %130, %132 : vector<2x12xf32>
    %c0_143 = arith.constant 0 : index
    %c0_144 = arith.constant 0 : index
    %134 = vector.load %arg14[%c0_143, %c0_144] : memref<2x12xf32, #tpu.memory_space<vmem>>, vector<2x12xf32>
    tpu.vector_store %arg14[%c0_143, %c0_144], %133 {strides = array<i32>} : memref<2x12xf32, #tpu.memory_space<vmem>>, vector<2x12xf32>,
    return
  }
  func.func @transform_0(%arg0: i32) -> (i32, i32) {
    %c0_i32 = arith.constant 0 : i32
    %c0_i32_0 = arith.constant 0 : i32
    return %arg0, %c0_i32 : i32, i32
  }
  func.func @transform_1(%arg0: i32) -> (i32, i32, i32) {
    %c0_i32 = arith.constant 0 : i32
    %c0_i32_0 = arith.constant 0 : i32
    %c0_i32_1 = arith.constant 0 : i32
    %c0_i32_2 = arith.constant 0 : i32
    return %c0_i32, %c0_i32_0, %c0_i32_1 : i32, i32, i32
  }
  func.func @transform_2(%arg0: i32) -> (i32, i32, i32) {
    %c0_i32 = arith.constant 0 : i32
    %c0_i32_0 = arith.constant 0 : i32
    %c0_i32_1 = arith.constant 0 : i32
    %c0_i32_2 = arith.constant 0 : i32
    return %c0_i32, %c0_i32_0, %c0_i32_1 : i32, i32, i32
  }
  func.func @transform_3(%arg0: i32) -> (i32, i32) {
    %c0_i32 = arith.constant 0 : i32
    %c0_i32_0 = arith.constant 0 : i32
    %c0_i32_1 = arith.constant 0 : i32
    return %c0_i32, %c0_i32_0 : i32, i32
  }
  func.func @transform_4(%arg0: i32) -> (i32, i32, i32) {
    %c0_i32 = arith.constant 0 : i32
    %c0_i32_0 = arith.constant 0 : i32
    %c0_i32_1 = arith.constant 0 : i32
    %c0_i32_2 = arith.constant 0 : i32
    return %c0_i32, %c0_i32_0, %c0_i32_1 : i32, i32, i32
  }
  func.func @transform_5(%arg0: i32) -> (i32, i32, i32) {
    %c0_i32 = arith.constant 0 : i32
    %c0_i32_0 = arith.constant 0 : i32
    %c0_i32_1 = arith.constant 0 : i32
    %c0_i32_2 = arith.constant 0 : i32
    return %c0_i32, %c0_i32_0, %c0_i32_1 : i32, i32, i32
  }
  func.func @transform_6(%arg0: i32) -> (i32, i32) {
    %c0_i32 = arith.constant 0 : i32
    %c0_i32_0 = arith.constant 0 : i32
    %c0_i32_1 = arith.constant 0 : i32
    return %c0_i32, %c0_i32_0 : i32, i32
  }
  func.func @transform_7(%arg0: i32) -> (i32, i32, i32) {
    %c0_i32 = arith.constant 0 : i32
    %c0_i32_0 = arith.constant 0 : i32
    %c0_i32_1 = arith.constant 0 : i32
    %c0_i32_2 = arith.constant 0 : i32
    return %c0_i32, %c0_i32_0, %c0_i32_1 : i32, i32, i32
  }
  func.func @transform_8(%arg0: i32) -> (i32, i32, i32) {
    %c0_i32 = arith.constant 0 : i32
    %c0_i32_0 = arith.constant 0 : i32
    %c0_i32_1 = arith.constant 0 : i32
    %c0_i32_2 = arith.constant 0 : i32
    return %c0_i32, %c0_i32_0, %c0_i32_1 : i32, i32, i32
  }
  func.func @transform_9(%arg0: i32) -> (i32, i32) {
    %c0_i32 = arith.constant 0 : i32
    %c0_i32_0 = arith.constant 0 : i32
    %c0_i32_1 = arith.constant 0 : i32
    return %c0_i32, %c0_i32_0 : i32, i32
  }
  func.func @transform_10(%arg0: i32) -> (i32, i32, i32) {
    %c0_i32 = arith.constant 0 : i32
    %c0_i32_0 = arith.constant 0 : i32
    %c0_i32_1 = arith.constant 0 : i32
    %c0_i32_2 = arith.constant 0 : i32
    return %c0_i32, %c0_i32_0, %c0_i32_1 : i32, i32, i32
  }
  func.func @transform_11(%arg0: i32) -> (i32, i32, i32) {
    %c0_i32 = arith.constant 0 : i32
    %c0_i32_0 = arith.constant 0 : i32
    %c0_i32_1 = arith.constant 0 : i32
    %c0_i32_2 = arith.constant 0 : i32
    return %c0_i32, %c0_i32_0, %c0_i32_1 : i32, i32, i32
  }
  func.func @transform_12(%arg0: i32) -> (i32, i32) {
    %c0_i32 = arith.constant 0 : i32
    %c0_i32_0 = arith.constant 0 : i32
    %c0_i32_1 = arith.constant 0 : i32
    return %c0_i32, %c0_i32_0 : i32, i32
  }
  func.func @transform_13(%arg0: i32) -> (i32, i32) {
    %c0_i32 = arith.constant 0 : i32
    %c0_i32_0 = arith.constant 0 : i32
    return %arg0, %c0_i32 : i32, i32
  }
}

</mosaic_0001>

<llo_original>
// kernel: tpu_custom_call.1
$region0: #{tpu_custom_call.1}
  #allocation0 [shape = 'u32[]', space=smem, size = 0x4, offset = 0x4, fixed_abs, tag = 'smem constant byte address 0x4 - core index']
  #allocation1 [shape = 'u32[144,128]{1,0:T(1,128)}', space=vmem, size = 0x12000, scoped, tag = 'internal scratch']
  %s0 = inlined_call_operand.vmem [shape: f32[80,120], index: 0, kind: input, shape index: {}]
  %s1 = inlined_call_operand.vmem [shape: f32[5,36,80], index: 1, kind: input, shape index: {}]
  %s2 = inlined_call_operand.vmem [shape: f32[5,120,288], index: 2, kind: input, shape index: {}]
  %s3 = inlined_call_operand.vmem [shape: f32[1,288], index: 3, kind: input, shape index: {}]
  %s4 = inlined_call_operand.vmem [shape: f32[5,14,36], index: 4, kind: input, shape index: {}]
  %s5 = inlined_call_operand.vmem [shape: f32[5,288,224], index: 5, kind: input, shape index: {}]
  %s6 = inlined_call_operand.vmem [shape: f32[1,224], index: 6, kind: input, shape index: {}]
  %s7 = inlined_call_operand.vmem [shape: f32[5,4,14], index: 7, kind: input, shape index: {}]
  %s8 = inlined_call_operand.vmem [shape: f32[5,224,64], index: 8, kind: input, shape index: {}]
  %s9 = inlined_call_operand.vmem [shape: f32[1,64], index: 9, kind: input, shape index: {}]
  %s10 = inlined_call_operand.vmem [shape: f32[2,2,4], index: 10, kind: input, shape index: {}]
  %s11 = inlined_call_operand.vmem [shape: f32[2,64,12], index: 11, kind: input, shape index: {}]
  %s12 = inlined_call_operand.vmem [shape: f32[1,12], index: 12, kind: input, shape index: {}]
  %s13 = inlined_call_operand.hbm [shape: f32[2,12], index: 13, kind: output, shape index: {}]
  %s14 = sld [smem:[#allocation0]]
  $region62: #{tpu_custom_call.1} parent=0
    _
  %s16 = ssub.s32 1, %s14
  %s17 = scalar_select 0, %s16, %s14
  $region1: #{tpu_custom_call.1} parent=0
    #allocation2 [shape = 'u8[1024]{0}', space=vmem, size = 0x400, scoped, tag = 'output window, operand 0, single buffered']
    #allocation3 [shape = 's32[1]{0}', space=sflag, size = 0x4, scoped, tag = 'scoped memory for tpu_custom_call.1']
    %18 = vsyncpa [#allocation3], 0
    // Predicated region
    $region2: #{tpu_custom_call.1} parent=1 // pred_check
      _
    $region3: #{tpu_custom_call.1} parent=1 // pred_check_branch
      %20 = sbr.rel (0) target = $region5
    $region4: #{tpu_custom_call.1} parent=1 // pred_region
      _
    $region5: #{tpu_custom_call.1} parent=1 // pred_fallthru
      _
    // Predicated region
    $region6: #{tpu_custom_call.1} parent=1 // pred_check
      _
    $region7: #{tpu_custom_call.1} parent=1 // pred_check_branch
      %22 = sbr.rel (0) target = $region9
    $region8: #{tpu_custom_call.1} parent=1 // pred_region
      _
    $region9: #{tpu_custom_call.1} parent=1 // pred_fallthru
      _
    // Predicated region
    $region10: #{tpu_custom_call.1} parent=1 // pred_check
      _
    $region11: #{tpu_custom_call.1} parent=1 // pred_check_branch
      %24 = sbr.rel (0) target = $region13
    $region12: #{tpu_custom_call.1} parent=1 // pred_region
      _
    $region13: #{tpu_custom_call.1} parent=1 // pred_fallthru
      _
    // Predicated region
    $region14: #{tpu_custom_call.1} parent=1 // pred_check
      _
    $region15: #{tpu_custom_call.1} parent=1 // pred_check_branch
      %26 = sbr.rel (0) target = $region17
    $region16: #{tpu_custom_call.1} parent=1 // pred_region
      _
    $region17: #{tpu_custom_call.1} parent=1 // pred_fallthru
      _
    // Predicated region
    $region18: #{tpu_custom_call.1} parent=1 // pred_check
      _
    $region19: #{tpu_custom_call.1} parent=1 // pred_check_branch
      %28 = sbr.rel (0) target = $region21
    $region20: #{tpu_custom_call.1} parent=1 // pred_region
      _
    $region21: #{tpu_custom_call.1} parent=1 // pred_fallthru
      _
    // Predicated region
    $region22: #{tpu_custom_call.1} parent=1 // pred_check
      _
    $region23: #{tpu_custom_call.1} parent=1 // pred_check_branch
      %30 = sbr.rel (0) target = $region25
    $region24: #{tpu_custom_call.1} parent=1 // pred_region
      _
    $region25: #{tpu_custom_call.1} parent=1 // pred_fallthru
      _
    // Predicated region
    $region26: #{tpu_custom_call.1} parent=1 // pred_check
      _
    $region27: #{tpu_custom_call.1} parent=1 // pred_check_branch
      %32 = sbr.rel (0) target = $region29
    $region28: #{tpu_custom_call.1} parent=1 // pred_region
      _
    $region29: #{tpu_custom_call.1} parent=1 // pred_fallthru
      _
    // Predicated region
    $region30: #{tpu_custom_call.1} parent=1 // pred_check
      _
    $region31: #{tpu_custom_call.1} parent=1 // pred_check_branch
      %34 = sbr.rel (0) target = $region33
    $region32: #{tpu_custom_call.1} parent=1 // pred_region
      _
    $region33: #{tpu_custom_call.1} parent=1 // pred_fallthru
      _
    // Predicated region
    $region34: #{tpu_custom_call.1} parent=1 // pred_check
      _
    $region35: #{tpu_custom_call.1} parent=1 // pred_check_branch
      %36 = sbr.rel (0) target = $region37
    $region36: #{tpu_custom_call.1} parent=1 // pred_region
      _
    $region37: #{tpu_custom_call.1} parent=1 // pred_fallthru
      _
    // Predicated region
    $region38: #{tpu_custom_call.1} parent=1 // pred_check
      _
    $region39: #{tpu_custom_call.1} parent=1 // pred_check_branch
      %38 = sbr.rel (0) target = $region41
    $region40: #{tpu_custom_call.1} parent=1 // pred_region
      _
    $region41: #{tpu_custom_call.1} parent=1 // pred_fallthru
      _
    // Predicated region
    $region42: #{tpu_custom_call.1} parent=1 // pred_check
      _
    $region43: #{tpu_custom_call.1} parent=1 // pred_check_branch
      %40 = sbr.rel (0) target = $region45
    $region44: #{tpu_custom_call.1} parent=1 // pred_region
      _
    $region45: #{tpu_custom_call.1} parent=1 // pred_fallthru
      _
    // Predicated region
    $region46: #{tpu_custom_call.1} parent=1 // pred_check
      _
    $region47: #{tpu_custom_call.1} parent=1 // pred_check_branch
      %42 = sbr.rel (0) target = $region49
    $region48: #{tpu_custom_call.1} parent=1 // pred_region
      _
    $region49: #{tpu_custom_call.1} parent=1 // pred_fallthru
      _
    // Predicated region
    $region50: #{tpu_custom_call.1} parent=1 // pred_check
      _
    $region51: #{tpu_custom_call.1} parent=1 // pred_check_branch
      %44 = sbr.rel (0) target = $region53
    $region52: #{tpu_custom_call.1} parent=1 // pred_region
      _
    $region53: #{tpu_custom_call.1} parent=1 // pred_fallthru
      _
    %v45 = vld [vmem:[%s0] sm:$0xff]
    %v46 = vld [vmem:[%s0 + $0x8] sm:$0xff]
    %v47 = vld [vmem:[%s0 + $0x10] sm:$0xff]
    %v48 = vld [vmem:[%s0 + $0x18] sm:$0xff]
    %v49 = vld [vmem:[%s0 + $0x20] sm:$0xff]
    %v50 = vld [vmem:[%s0 + $0x28] sm:$0xff]
    %v51 = vld [vmem:[%s0 + $0x30] sm:$0xff]
    %v52 = vld [vmem:[%s0 + $0x38] sm:$0xff]
    %v53 = vld [vmem:[%s0 + $0x40] sm:$0xff]
    %v54 = vld [vmem:[%s0 + $0x48] sm:$0xff]
    %v55 = vld [vmem:[%s1] sm:$0xff]
    %v56 = vld [vmem:[%s1 + $0x8] sm:$0xff]
    %v57 = vld [vmem:[%s1 + $0x10] sm:$0xff]
    %v58 = vld [vmem:[%s1 + $0x18] sm:$0xff]
    %v59 = vld [vmem:[%s1 + $0x20] sm:$0xf]
    %vm60 = vcmask 654336
    %v62 = vsel %vm60, %v55, 0
    %v65 = vsel %vm60, %v56, 0
    %v68 = vsel %vm60, %v57, 0
    %v71 = vsel %vm60, %v58, 0
    %v74 = vsel %vm60, %v59, 0
    %76 = vmatprep.subr.mxu0 0.0
    %77 = vmatpush1.msra.mxu0 %v45
    %78 = vmatprep.subr.mxu0 0.0
    %79 = vmatpush1.msra.mxu0 %v46
    %80 = vmatprep.subr.mxu0 0.0
    %81 = vmatpush1.msra.mxu0 %v47
    %82 = vmatprep.subr.mxu0 0.0
    %83 = vmatpush1.msra.mxu0 %v48
    %84 = vmatprep.subr.mxu0 0.0
    %85 = vmatpush1.msra.mxu0 %v49
    %86 = vmatprep.subr.mxu0 0.0
    %87 = vmatpush1.msra.mxu0 %v50
    %88 = vmatprep.subr.mxu0 0.0
    %89 = vmatpush1.msra.mxu0 %v51
    %90 = vmatprep.subr.mxu0 0.0
    %91 = vmatpush1.msra.mxu0 %v52
    %92 = vmatprep.subr.mxu0 0.0
    %93 = vmatpush1.msra.mxu0 %v53
    %94 = vmatprep.subr.mxu0 0.0
    %95 = vmatpush1.msra.mxu0 %v54
    %96 = vmatprep.subr.mxu0 0.0
    %97 = vmatpush1.msra.mxu0 0.0
    %98 = vmatprep.subr.mxu0 0.0
    %99 = vmatpush1.msra.mxu0 0.0
    %100 = vmatprep.subr.mxu0 0.0
    %101 = vmatpush1.msra.mxu0 0.0
    %102 = vmatprep.subr.mxu0 0.0
    %103 = vmatpush1.msra.mxu0 0.0
    %104 = vmatprep.subr.mxu0 0.0
    %105 = vmatpush1.msra.mxu0 0.0
    %106 = vmatprep.subr.mxu0 0.0
    %107 = vmatpush1.msra.mxu0 0.0
    %108 = vmatprep.subr.mxu0 0.0
    %109 = vmatpush1.msra.mxu0 0.0
    %110 = vmatprep.subr.mxu0 0.0
    %111 = vmatpush1.msra.mxu0 0.0
    %112 = vmatprep.subr.mxu0 0.0
    %113 = vmatpush1.msra.mxu0 0.0
    %114 = vmatprep.subr.mxu0 0.0
    %115 = vmatpush1.msra.mxu0 0.0
    %116 = vmatprep.subr.mxu0 0.0
    %117 = vmatpush1.msra.mxu0 0.0
    %118 = vmatprep.subr.mxu0 0.0
    %119 = vmatpush1.msra.mxu0 0.0
    %120 = vmatprep.subr.mxu0 0.0
    %121 = vmatpush1.msra.mxu0 0.0
    %122 = vmatprep.subr.mxu0 0.0
    %123 = vmatpush1.msra.mxu0 0.0
    %124 = vmatprep.subr.mxu0 0.0
    %125 = vmatpush1.msra.mxu0 0.0
    %126 = vmatprep.subr.mxu0 0.0
    %127 = vmatpush1.msra.mxu0 0.0
    %128 = vmatprep.subr.mxu0 0.0
    %129 = vmatpush1.msra.mxu0 0.0
    %130 = vmatprep.subr.mxu0 0.0
    %131 = vmatpush1.msra.mxu0 0.0
    %132 = vmatprep.subr.mxu0 0.0
    %133 = vmatpush1.msra.mxu0 0.0
    %134 = vmatprep.subr.mxu0 0.0
    %135 = vmatpush1.msra.mxu0 0.0
    %136 = vmatprep.subr.mxu0 0.0
    %137 = vmatpush1.msra.mxu0 0.0
    %138 = vmatprep.subr.mxu0 0.0
    %139 = vmatpush1.msra.mxu0 0.0
    %140 = vmatprep.mubr.f32.mxu0 0.0
    %141 = vmatmul.mubr.f32.gmra.mrb[0].mxu0 %v62
    %v142 = vpop.f32.mrb[0].mxu0
    %v143 = vadd.f32 0.0, %v142
    %v144 = vpop.f32.mrb[0].mxu0
    %145 = vmatprep.mubr.f32.mxu0 0.0
    %146 = vmatmul.mubr.f32.gmra.mrb[0].mxu0 %v65
    %v147 = vpop.f32.mrb[0].mxu0
    %v148 = vadd.f32 0.0, %v147
    %v149 = vpop.f32.mrb[0].mxu0
    %150 = vmatprep.mubr.f32.mxu0 0.0
    %151 = vmatmul.mubr.f32.gmra.mrb[0].mxu0 %v68
    %v152 = vpop.f32.mrb[0].mxu0
    %v153 = vadd.f32 0.0, %v152
    %v154 = vpop.f32.mrb[0].mxu0
    %155 = vmatprep.mubr.f32.mxu0 0.0
    %156 = vmatmul.mubr.f32.gmra.mrb[0].mxu0 %v71
    %v157 = vpop.f32.mrb[0].mxu0
    %v158 = vadd.f32 0.0, %v157
    %v159 = vpop.f32.mrb[0].mxu0
    %160 = vmatprep.mubr.f32.mxu0 0.0
    %161 = vmatmul.mubr.f32.gmra.mrb[0].mxu0 %v74
    %v162 = vpop.f32.mrb[0].mxu0
    %v163 = vadd.f32 0.0, %v162
    %v164 = vpop.f32.mrb[0].mxu0
    %165 = vdwg.mxu0
    %v166 = vld [vmem:[%s2] sm:$0xff]
    %v167 = vld [vmem:[%s2 + $0x8] sm:$0xff]
    %v168 = vld [vmem:[%s2 + $0x10] sm:$0xff]
    %v169 = vld [vmem:[%s2 + $0x18] sm:$0xff]
    %v170 = vld [vmem:[%s2 + $0x20] sm:$0xff]
    %v171 = vld [vmem:[%s2 + $0x28] sm:$0xff]
    %v172 = vld [vmem:[%s2 + $0x30] sm:$0xff]
    %v173 = vld [vmem:[%s2 + $0x38] sm:$0xff]
    %v174 = vld [vmem:[%s2 + $0x40] sm:$0xff]
    %v175 = vld [vmem:[%s2 + $0x48] sm:$0xff]
    %v176 = vld [vmem:[%s2 + $0x50] sm:$0xff]
    %v177 = vld [vmem:[%s2 + $0x58] sm:$0xff]
    %v178 = vld [vmem:[%s2 + $0x60] sm:$0xff]
    %v179 = vld [vmem:[%s2 + $0x68] sm:$0xff]
    %v180 = vld [vmem:[%s2 + $0x70] sm:$0xff]
    %v181 = vld [vmem:[%s2 + $0x78] sm:$0xff]
    %v182 = vld [vmem:[%s2 + $0x80] sm:$0xff]
    %v183 = vld [vmem:[%s2 + $0x88] sm:$0xff]
    %v184 = vld [vmem:[%s2 + $0x90] sm:$0xff]
    %v185 = vld [vmem:[%s2 + $0x98] sm:$0xff]
    %v186 = vld [vmem:[%s2 + $0xa0] sm:$0xff]
    %v187 = vld [vmem:[%s2 + $0xa8] sm:$0xff]
    %v188 = vld [vmem:[%s2 + $0xb0] sm:$0xff]
    %v189 = vld [vmem:[%s2 + $0xb8] sm:$0xff]
    %v190 = vld [vmem:[%s2 + $0xc0] sm:$0xff]
    %v191 = vld [vmem:[%s2 + $0xc8] sm:$0xff]
    %v192 = vld [vmem:[%s2 + $0xd0] sm:$0xff]
    %v193 = vld [vmem:[%s2 + $0xd8] sm:$0xff]
    %v194 = vld [vmem:[%s2 + $0xe0] sm:$0xff]
    %v195 = vld [vmem:[%s2 + $0xe8] sm:$0xff]
    %v196 = vld [vmem:[%s2 + $0xf0] sm:$0xff]
    %v197 = vld [vmem:[%s2 + $0xf8] sm:$0xff]
    %v198 = vld [vmem:[%s2 + $0x100] sm:$0xff]
    %v199 = vld [vmem:[%s2 + $0x108] sm:$0xff]
    %v200 = vld [vmem:[%s2 + $0x110] sm:$0xff]
    %v201 = vld [vmem:[%s2 + $0x118] sm:$0xff]
    %v202 = vld [vmem:[%s2 + $0x120] sm:$0xff]
    %v203 = vld [vmem:[%s2 + $0x128] sm:$0xff]
    %v204 = vld [vmem:[%s2 + $0x130] sm:$0xff]
    %v205 = vld [vmem:[%s2 + $0x138] sm:$0xff]
    %v206 = vld [vmem:[%s2 + $0x140] sm:$0xff]
    %v207 = vld [vmem:[%s2 + $0x148] sm:$0xff]
    %v208 = vld [vmem:[%s2 + $0x150] sm:$0xff]
    %v209 = vld [vmem:[%s2 + $0x158] sm:$0xff]
    %v210 = vld [vmem:[%s2 + $0x160] sm:$0xff]
    %s211 = scalar_lea.vmem %s1, 40
    %v212 = vld [vmem:[%s211] sm:$0xff]
    %v213 = vld [vmem:[%s211 + $0x8] sm:$0xff]
    %v214 = vld [vmem:[%s211 + $0x10] sm:$0xff]
    %v215 = vld [vmem:[%s211 + $0x18] sm:$0xff]
    %v216 = vld [vmem:[%s211 + $0x20] sm:$0xf]
    %v218 = vsel %vm60, %v212, 0
    %v221 = vsel %vm60, %v213, 0
    %v224 = vsel %vm60, %v214, 0
    %v227 = vsel %vm60, %v215, 0
    %v230 = vsel %vm60, %v216, 0
    %232 = vmatprep.subr.mxu0 0.0
    %233 = vmatpush1.msra.mxu0 %v45
    %234 = vmatprep.subr.mxu0 0.0
    %235 = vmatpush1.msra.mxu0 %v46
    %236 = vmatprep.subr.mxu0 0.0
    %237 = vmatpush1.msra.mxu0 %v47
    %238 = vmatprep.subr.mxu0 0.0
    %239 = vmatpush1.msra.mxu0 %v48
    %240 = vmatprep.subr.mxu0 0.0
    %241 = vmatpush1.msra.mxu0 %v49
    %242 = vmatprep.subr.mxu0 0.0
    %243 = vmatpush1.msra.mxu0 %v50
    %244 = vmatprep.subr.mxu0 0.0
    %245 = vmatpush1.msra.mxu0 %v51
    %246 = vmatprep.subr.mxu0 0.0
    %247 = vmatpush1.msra.mxu0 %v52
    %248 = vmatprep.subr.mxu0 0.0
    %249 = vmatpush1.msra.mxu0 %v53
    %250 = vmatprep.subr.mxu0 0.0
    %251 = vmatpush1.msra.mxu0 %v54
    %252 = vmatprep.subr.mxu0 0.0
    %253 = vmatpush1.msra.mxu0 0.0
    %254 = vmatprep.subr.mxu0 0.0
    %255 = vmatpush1.msra.mxu0 0.0
    %256 = vmatprep.subr.mxu0 0.0
    %257 = vmatpush1.msra.mxu0 0.0
    %258 = vmatprep.subr.mxu0 0.0
    %259 = vmatpush1.msra.mxu0 0.0
    %260 = vmatprep.subr.mxu0 0.0
    %261 = vmatpush1.msra.mxu0 0.0
    %262 = vmatprep.subr.mxu0 0.0
    %263 = vmatpush1.msra.mxu0 0.0
    %264 = vmatprep.subr.mxu0 0.0
    %265 = vmatpush1.msra.mxu0 0.0
    %266 = vmatprep.subr.mxu0 0.0
    %267 = vmatpush1.msra.mxu0 0.0
    %268 = vmatprep.subr.mxu0 0.0
    %269 = vmatpush1.msra.mxu0 0.0
    %270 = vmatprep.subr.mxu0 0.0
    %271 = vmatpush1.msra.mxu0 0.0
    %272 = vmatprep.subr.mxu0 0.0
    %273 = vmatpush1.msra.mxu0 0.0
    %274 = vmatprep.subr.mxu0 0.0
    %275 = vmatpush1.msra.mxu0 0.0
    %276 = vmatprep.subr.mxu0 0.0
    %277 = vmatpush1.msra.mxu0 0.0
    %278 = vmatprep.subr.mxu0 0.0
    %279 = vmatpush1.msra.mxu0 0.0
    %280 = vmatprep.subr.mxu0 0.0
    %281 = vmatpush1.msra.mxu0 0.0
    %282 = vmatprep.subr.mxu0 0.0
    %283 = vmatpush1.msra.mxu0 0.0
    %284 = vmatprep.subr.mxu0 0.0
    %285 = vmatpush1.msra.mxu0 0.0
    %286 = vmatprep.subr.mxu0 0.0
    %287 = vmatpush1.msra.mxu0 0.0
    %288 = vmatprep.subr.mxu0 0.0
    %289 = vmatpush1.msra.mxu0 0.0
    %290 = vmatprep.subr.mxu0 0.0
    %291 = vmatpush1.msra.mxu0 0.0
    %292 = vmatprep.subr.mxu0 0.0
    %293 = vmatpush1.msra.mxu0 0.0
    %294 = vmatprep.subr.mxu0 0.0
    %295 = vmatpush1.msra.mxu0 0.0
    %296 = vmatprep.mubr.f32.mxu0 0.0
    %297 = vmatmul.mubr.f32.gmra.mrb[0].mxu0 %v218
    %v298 = vpop.f32.mrb[0].mxu0
    %v299 = vadd.f32 0.0, %v298
    %v300 = vpop.f32.mrb[0].mxu0
    %301 = vmatprep.mubr.f32.mxu0 0.0
    %302 = vmatmul.mubr.f32.gmra.mrb[0].mxu0 %v221
    %v303 = vpop.f32.mrb[0].mxu0
    %v304 = vadd.f32 0.0, %v303
    %v305 = vpop.f32.mrb[0].mxu0
    %306 = vmatprep.mubr.f32.mxu0 0.0
    %307 = vmatmul.mubr.f32.gmra.mrb[0].mxu0 %v224
    %v308 = vpop.f32.mrb[0].mxu0
    %v309 = vadd.f32 0.0, %v308
    %v310 = vpop.f32.mrb[0].mxu0
    %311 = vmatprep.mubr.f32.mxu0 0.0
    %312 = vmatmul.mubr.f32.gmra.mrb[0].mxu0 %v227
    %v313 = vpop.f32.mrb[0].mxu0
    %v314 = vadd.f32 0.0, %v313
    %v315 = vpop.f32.mrb[0].mxu0
    %316 = vmatprep.mubr.f32.mxu0 0.0
    %317 = vmatmul.mubr.f32.gmra.mrb[0].mxu0 %v230
    %v318 = vpop.f32.mrb[0].mxu0
    %v319 = vadd.f32 0.0, %v318
    %v320 = vpop.f32.mrb[0].mxu0
    %321 = vdwg.mxu0
    %s322 = scalar_lea.vmem %s2, 360
    %v323 = vld [vmem:[%s322] sm:$0xff]
    %v324 = vld [vmem:[%s322 + $0x8] sm:$0xff]
    %v325 = vld [vmem:[%s322 + $0x10] sm:$0xff]
    %v326 = vld [vmem:[%s322 + $0x18] sm:$0xff]
    %v327 = vld [vmem:[%s322 + $0x20] sm:$0xff]
    %v328 = vld [vmem:[%s322 + $0x28] sm:$0xff]
    %v329 = vld [vmem:[%s322 + $0x30] sm:$0xff]
    %v330 = vld [vmem:[%s322 + $0x38] sm:$0xff]
    %v331 = vld [vmem:[%s322 + $0x40] sm:$0xff]
    %v332 = vld [vmem:[%s322 + $0x48] sm:$0xff]
    %v333 = vld [vmem:[%s322 + $0x50] sm:$0xff]
    %v334 = vld [vmem:[%s322 + $0x58] sm:$0xff]
    %v335 = vld [vmem:[%s322 + $0x60] sm:$0xff]
    %v336 = vld [vmem:[%s322 + $0x68] sm:$0xff]
    %v337 = vld [vmem:[%s322 + $0x70] sm:$0xff]
    %v338 = vld [vmem:[%s322 + $0x78] sm:$0xff]
    %v339 = vld [vmem:[%s322 + $0x80] sm:$0xff]
    %v340 = vld [vmem:[%s322 + $0x88] sm:$0xff]
    %v341 = vld [vmem:[%s322 + $0x90] sm:$0xff]
    %v342 = vld [vmem:[%s322 + $0x98] sm:$0xff]
    %v343 = vld [vmem:[%s322 + $0xa0] sm:$0xff]
    %v344 = vld [vmem:[%s322 + $0xa8] sm:$0xff]
    %v345 = vld [vmem:[%s322 + $0xb0] sm:$0xff]
    %v346 = vld [vmem:[%s322 + $0xb8] sm:$0xff]
    %v347 = vld [vmem:[%s322 + $0xc0] sm:$0xff]
    %v348 = vld [vmem:[%s322 + $0xc8] sm:$0xff]
    %v349 = vld [vmem:[%s322 + $0xd0] sm:$0xff]
    %v350 = vld [vmem:[%s322 + $0xd8] sm:$0xff]
    %v351 = vld [vmem:[%s322 + $0xe0] sm:$0xff]
    %v352 = vld [vmem:[%s322 + $0xe8] sm:$0xff]
    %v353 = vld [vmem:[%s322 + $0xf0] sm:$0xff]
    %v354 = vld [vmem:[%s322 + $0xf8] sm:$0xff]
    %v355 = vld [vmem:[%s322 + $0x100] sm:$0xff]
    %v356 = vld [vmem:[%s322 + $0x108] sm:$0xff]
    %v357 = vld [vmem:[%s322 + $0x110] sm:$0xff]
    %v358 = vld [vmem:[%s322 + $0x118] sm:$0xff]
    %v359 = vld [vmem:[%s322 + $0x120] sm:$0xff]
    %v360 = vld [vmem:[%s322 + $0x128] sm:$0xff]
    %v361 = vld [vmem:[%s322 + $0x130] sm:$0xff]
    %v362 = vld [vmem:[%s322 + $0x138] sm:$0xff]
    %v363 = vld [vmem:[%s322 + $0x140] sm:$0xff]
    %v364 = vld [vmem:[%s322 + $0x148] sm:$0xff]
    %v365 = vld [vmem:[%s322 + $0x150] sm:$0xff]
    %v366 = vld [vmem:[%s322 + $0x158] sm:$0xff]
    %v367 = vld [vmem:[%s322 + $0x160] sm:$0xff]
    %vm368 = vcmask 982016
    %v370 = vsel %vm368, %v299, 0
    %v373 = vsel %vm368, %v304, 0
    %v376 = vsel %vm368, %v309, 0
    %v379 = vsel %vm368, %v314, 0
    %v382 = vsel %vm368, %v319, 0
    %384 = vmatprep.subr.mxu0 %v324
    %385 = vmatpush1.msra.mxu0 %v323
    %386 = vmatprep.subr.mxu0 %v327
    %387 = vmatpush1.msra.mxu0 %v326
    %388 = vmatprep.subr.mxu0 %v330
    %389 = vmatpush1.msra.mxu0 %v329
    %390 = vmatprep.subr.mxu0 %v333
    %391 = vmatpush1.msra.mxu0 %v332
    %392 = vmatprep.subr.mxu0 %v336
    %393 = vmatpush1.msra.mxu0 %v335
    %394 = vmatprep.subr.mxu0 %v339
    %395 = vmatpush1.msra.mxu0 %v338
    %396 = vmatprep.subr.mxu0 %v342
    %397 = vmatpush1.msra.mxu0 %v341
    %398 = vmatprep.subr.mxu0 %v345
    %399 = vmatpush1.msra.mxu0 %v344
    %400 = vmatprep.subr.mxu0 %v348
    %401 = vmatpush1.msra.mxu0 %v347
    %402 = vmatprep.subr.mxu0 %v351
    %403 = vmatpush1.msra.mxu0 %v350
    %404 = vmatprep.subr.mxu0 %v354
    %405 = vmatpush1.msra.mxu0 %v353
    %406 = vmatprep.subr.mxu0 %v357
    %407 = vmatpush1.msra.mxu0 %v356
    %408 = vmatprep.subr.mxu0 %v360
    %409 = vmatpush1.msra.mxu0 %v359
    %410 = vmatprep.subr.mxu0 %v363
    %411 = vmatpush1.msra.mxu0 %v362
    %412 = vmatprep.subr.mxu0 %v366
    %413 = vmatpush1.msra.mxu0 %v365
    %414 = vmatprep.subr.mxu0 0.0
    %415 = vmatpush1.msra.mxu0 0.0
    %416 = vmatprep.subr.mxu0 0.0
    %417 = vmatpush1.msra.mxu0 0.0
    %418 = vmatprep.subr.mxu0 0.0
    %419 = vmatpush1.msra.mxu0 0.0
    %420 = vmatprep.subr.mxu0 0.0
    %421 = vmatpush1.msra.mxu0 0.0
    %422 = vmatprep.subr.mxu0 0.0
    %423 = vmatpush1.msra.mxu0 0.0
    %424 = vmatprep.subr.mxu0 0.0
    %425 = vmatpush1.msra.mxu0 0.0
    %426 = vmatprep.subr.mxu0 0.0
    %427 = vmatpush1.msra.mxu0 0.0
    %428 = vmatprep.subr.mxu0 0.0
    %429 = vmatpush1.msra.mxu0 0.0
    %430 = vmatprep.subr.mxu0 0.0
    %431 = vmatpush1.msra.mxu0 0.0
    %432 = vmatprep.subr.mxu0 0.0
    %433 = vmatpush1.msra.mxu0 0.0
    %434 = vmatprep.subr.mxu0 0.0
    %435 = vmatpush1.msra.mxu0 0.0
    %436 = vmatprep.subr.mxu0 0.0
    %437 = vmatpush1.msra.mxu0 0.0
    %438 = vmatprep.subr.mxu0 0.0
    %439 = vmatpush1.msra.mxu0 0.0
    %440 = vmatprep.subr.mxu0 0.0
    %441 = vmatpush1.msra.mxu0 0.0
    %442 = vmatprep.subr.mxu0 0.0
    %443 = vmatpush1.msra.mxu0 0.0
    %444 = vmatprep.subr.mxu0 0.0
    %445 = vmatpush1.msra.mxu0 0.0
    %446 = vmatprep.subr.mxu0 0.0
    %447 = vmatpush1.msra.mxu0 0.0
    %448 = vmatprep.mubr.f32.mxu0 0.0
    %449 = vmatmul.mubr.f32.gmra.mrb[0].mxu0 %v370
    %v450 = vpop.f32.mrb[0].mxu0
    %v451 = vadd.f32 0.0, %v450
    %v452 = vpop.f32.mrb[0].mxu0
    %v453 = vadd.f32 0.0, %v452
    %454 = vmatprep.mubr.f32.mxu0 0.0
    %455 = vmatmul.mubr.f32.gmra.mrb[0].mxu0 %v373
    %v456 = vpop.f32.mrb[0].mxu0
    %v457 = vadd.f32 0.0, %v456
    %v458 = vpop.f32.mrb[0].mxu0
    %v459 = vadd.f32 0.0, %v458
    %460 = vmatprep.mubr.f32.mxu0 0.0
    %461 = vmatmul.mubr.f32.gmra.mrb[0].mxu0 %v376
    %v462 = vpop.f32.mrb[0].mxu0
    %v463 = vadd.f32 0.0, %v462
    %v464 = vpop.f32.mrb[0].mxu0
    %v465 = vadd.f32 0.0, %v464
    %466 = vmatprep.mubr.f32.mxu0 0.0
    %467 = vmatmul.mubr.f32.gmra.mrb[0].mxu0 %v379
    %v468 = vpop.f32.mrb[0].mxu0
    %v469 = vadd.f32 0.0, %v468
    %v470 = vpop.f32.mrb[0].mxu0
    %v471 = vadd.f32 0.0, %v470
    %472 = vmatprep.mubr.f32.mxu0 0.0
    %473 = vmatmul.mubr.f32.gmra.mrb[0].mxu0 %v382
    %v474 = vpop.f32.mrb[0].mxu0
    %v475 = vadd.f32 0.0, %v474
    %v476 = vpop.f32.mrb[0].mxu0
    %v477 = vadd.f32 0.0, %v476
    %478 = vdwg.mxu0
    %479 = vmatprep.subr.mxu0 0.0
    %480 = vmatpush1.msra.mxu0 %v325
    %481 = vmatprep.subr.mxu0 0.0
    %482 = vmatpush1.msra.mxu0 %v328
    %483 = vmatprep.subr.mxu0 0.0
    %484 = vmatpush1.msra.mxu0 %v331
    %485 = vmatprep.subr.mxu0 0.0
    %486 = vmatpush1.msra.mxu0 %v334
    %487 = vmatprep.subr.mxu0 0.0
    %488 = vmatpush1.msra.mxu0 %v337
    %489 = vmatprep.subr.mxu0 0.0
    %490 = vmatpush1.msra.mxu0 %v340
    %491 = vmatprep.subr.mxu0 0.0
    %492 = vmatpush1.msra.mxu0 %v343
    %493 = vmatprep.subr.mxu0 0.0
    %494 = vmatpush1.msra.mxu0 %v346
    %495 = vmatprep.subr.mxu0 0.0
    %496 = vmatpush1.msra.mxu0 %v349
    %497 = vmatprep.subr.mxu0 0.0
    %498 = vmatpush1.msra.mxu0 %v352
    %499 = vmatprep.subr.mxu0 0.0
    %500 = vmatpush1.msra.mxu0 %v355
    %501 = vmatprep.subr.mxu0 0.0
    %502 = vmatpush1.msra.mxu0 %v358
    %503 = vmatprep.subr.mxu0 0.0
    %504 = vmatpush1.msra.mxu0 %v361
    %505 = vmatprep.subr.mxu0 0.0
    %506 = vmatpush1.msra.mxu0 %v364
    %507 = vmatprep.subr.mxu0 0.0
    %508 = vmatpush1.msra.mxu0 %v367
    %509 = vmatprep.subr.mxu0 0.0
    %510 = vmatpush1.msra.mxu0 0.0
    %511 = vmatprep.subr.mxu0 0.0
    %512 = vmatpush1.msra.mxu0 0.0
    %513 = vmatprep.subr.mxu0 0.0
    %514 = vmatpush1.msra.mxu0 0.0
    %515 = vmatprep.subr.mxu0 0.0
    %516 = vmatpush1.msra.mxu0 0.0
    %517 = vmatprep.subr.mxu0 0.0
    %518 = vmatpush1.msra.mxu0 0.0
    %519 = vmatprep.subr.mxu0 0.0
    %520 = vmatpush1.msra.mxu0 0.0
    %521 = vmatprep.subr.mxu0 0.0
    %522 = vmatpush1.msra.mxu0 0.0
    %523 = vmatprep.subr.mxu0 0.0
    %524 = vmatpush1.msra.mxu0 0.0
    %525 = vmatprep.subr.mxu0 0.0
    %526 = vmatpush1.msra.mxu0 0.0
    %527 = vmatprep.subr.mxu0 0.0
    %528 = vmatpush1.msra.mxu0 0.0
    %529 = vmatprep.subr.mxu0 0.0
    %530 = vmatpush1.msra.mxu0 0.0
    %531 = vmatprep.subr.mxu0 0.0
    %532 = vmatpush1.msra.mxu0 0.0
    %533 = vmatprep.subr.mxu0 0.0
    %534 = vmatpush1.msra.mxu0 0.0
    %535 = vmatprep.subr.mxu0 0.0
    %536 = vmatpush1.msra.mxu0 0.0
    %537 = vmatprep.subr.mxu0 0.0
    %538 = vmatpush1.msra.mxu0 0.0
    %539 = vmatprep.subr.mxu0 0.0
    %540 = vmatpush1.msra.mxu0 0.0
    %541 = vmatprep.subr.mxu0 0.0
    %542 = vmatpush1.msra.mxu0 0.0
    %543 = vmatprep.mubr.f32.mxu0 0.0
    %544 = vmatmul.mubr.f32.gmra.mrb[0].mxu0 %v370
    %v545 = vpop.f32.mrb[0].mxu0
    %v546 = vadd.f32 0.0, %v545
    %v547 = vpop.f32.mrb[0].mxu0
    %548 = vmatprep.mubr.f32.mxu0 0.0
    %549 = vmatmul.mubr.f32.gmra.mrb[0].mxu0 %v373
    %v550 = vpop.f32.mrb[0].mxu0
    %v551 = vadd.f32 0.0, %v550
    %v552 = vpop.f32.mrb[0].mxu0
    %553 = vmatprep.mubr.f32.mxu0 0.0
    %554 = vmatmul.mubr.f32.gmra.mrb[0].mxu0 %v376
    %v555 = vpop.f32.mrb[0].mxu0
    %v556 = vadd.f32 0.0, %v555
    %v557 = vpop.f32.mrb[0].mxu0
    %558 = vmatprep.mubr.f32.mxu0 0.0
    %559 = vmatmul.mubr.f32.gmra.mrb[0].mxu0 %v379
    %v560 = vpop.f32.mrb[0].mxu0
    %v561 = vadd.f32 0.0, %v560
    %v562 = vpop.f32.mrb[0].mxu0
    %563 = vmatprep.mubr.f32.mxu0 0.0
    %564 = vmatmul.mubr.f32.gmra.mrb[0].mxu0 %v382
    %v565 = vpop.f32.mrb[0].mxu0
    %v566 = vadd.f32 0.0, %v565
    %v567 = vpop.f32.mrb[0].mxu0
    %568 = vdwg.mxu0
    %v570 = vsel %vm368, %v143, 0
    %v573 = vsel %vm368, %v148, 0
    %v576 = vsel %vm368, %v153, 0
    %v579 = vsel %vm368, %v158, 0
    %v582 = vsel %vm368, %v163, 0
    %584 = vmatprep.subr.mxu0 %v167
    %585 = vmatpush1.msra.mxu0 %v166
    %586 = vmatprep.subr.mxu0 %v170
    %587 = vmatpush1.msra.mxu0 %v169
    %588 = vmatprep.subr.mxu0 %v173
    %589 = vmatpush1.msra.mxu0 %v172
    %590 = vmatprep.subr.mxu0 %v176
    %591 = vmatpush1.msra.mxu0 %v175
    %592 = vmatprep.subr.mxu0 %v179
    %593 = vmatpush1.msra.mxu0 %v178
    %594 = vmatprep.subr.mxu0 %v182
    %595 = vmatpush1.msra.mxu0 %v181
    %596 = vmatprep.subr.mxu0 %v185
    %597 = vmatpush1.msra.mxu0 %v184
    %598 = vmatprep.subr.mxu0 %v188
    %599 = vmatpush1.msra.mxu0 %v187
    %600 = vmatprep.subr.mxu0 %v191
    %601 = vmatpush1.msra.mxu0 %v190
    %602 = vmatprep.subr.mxu0 %v194
    %603 = vmatpush1.msra.mxu0 %v193
    %604 = vmatprep.subr.mxu0 %v197
    %605 = vmatpush1.msra.mxu0 %v196
    %606 = vmatprep.subr.mxu0 %v200
    %607 = vmatpush1.msra.mxu0 %v199
    %608 = vmatprep.subr.mxu0 %v203
    %609 = vmatpush1.msra.mxu0 %v202
    %610 = vmatprep.subr.mxu0 %v206
    %611 = vmatpush1.msra.mxu0 %v205
    %612 = vmatprep.subr.mxu0 %v209
    %613 = vmatpush1.msra.mxu0 %v208
    %614 = vmatprep.subr.mxu0 0.0
    %615 = vmatpush1.msra.mxu0 0.0
    %616 = vmatprep.subr.mxu0 0.0
    %617 = vmatpush1.msra.mxu0 0.0
    %618 = vmatprep.subr.mxu0 0.0
    %619 = vmatpush1.msra.mxu0 0.0
    %620 = vmatprep.subr.mxu0 0.0
    %621 = vmatpush1.msra.mxu0 0.0
    %622 = vmatprep.subr.mxu0 0.0
    %623 = vmatpush1.msra.mxu0 0.0
    %624 = vmatprep.subr.mxu0 0.0
    %625 = vmatpush1.msra.mxu0 0.0
    %626 = vmatprep.subr.mxu0 0.0
    %627 = vmatpush1.msra.mxu0 0.0
    %628 = vmatprep.subr.mxu0 0.0
    %629 = vmatpush1.msra.mxu0 0.0
    %630 = vmatprep.subr.mxu0 0.0
    %631 = vmatpush1.msra.mxu0 0.0
    %632 = vmatprep.subr.mxu0 0.0
    %633 = vmatpush1.msra.mxu0 0.0
    %634 = vmatprep.subr.mxu0 0.0
    %635 = vmatpush1.msra.mxu0 0.0
    %636 = vmatprep.subr.mxu0 0.0
    %637 = vmatpush1.msra.mxu0 0.0
    %638 = vmatprep.subr.mxu0 0.0
    %639 = vmatpush1.msra.mxu0 0.0
    %640 = vmatprep.subr.mxu0 0.0
    %641 = vmatpush1.msra.mxu0 0.0
    %642 = vmatprep.subr.mxu0 0.0
    %643 = vmatpush1.msra.mxu0 0.0
    %644 = vmatprep.subr.mxu0 0.0
    %645 = vmatpush1.msra.mxu0 0.0
    %646 = vmatprep.subr.mxu0 0.0
    %647 = vmatpush1.msra.mxu0 0.0
    %648 = vmatprep.mubr.f32.mxu0 0.0
    %649 = vmatmul.mubr.f32.gmra.mrb[0].mxu0 %v570
    %v650 = vpop.f32.mrb[0].mxu0
    %v651 = vadd.f32 %v451, %v650
    %v652 = vpop.f32.mrb[0].mxu0
    %v653 = vadd.f32 %v453, %v652
    %654 = vmatprep.mubr.f32.mxu0 0.0
    %655 = vmatmul.mubr.f32.gmra.mrb[0].mxu0 %v573
    %v656 = vpop.f32.mrb[0].mxu0
    %v657 = vadd.f32 %v457, %v656
    %v658 = vpop.f32.mrb[0].mxu0
    %v659 = vadd.f32 %v459, %v658
    %660 = vmatprep.mubr.f32.mxu0 0.0
    %661 = vmatmul.mubr.f32.gmra.mrb[0].mxu0 %v576
    %v662 = vpop.f32.mrb[0].mxu0
    %v663 = vadd.f32 %v463, %v662
    %v664 = vpop.f32.mrb[0].mxu0
    %v665 = vadd.f32 %v465, %v664
    %666 = vmatprep.mubr.f32.mxu0 0.0
    %667 = vmatmul.mubr.f32.gmra.mrb[0].mxu0 %v579
    %v668 = vpop.f32.mrb[0].mxu0
    %v669 = vadd.f32 %v469, %v668
    %v670 = vpop.f32.mrb[0].mxu0
    %v671 = vadd.f32 %v471, %v670
    %672 = vmatprep.mubr.f32.mxu0 0.0
    %673 = vmatmul.mubr.f32.gmra.mrb[0].mxu0 %v582
    %v674 = vpop.f32.mrb[0].mxu0
    %v675 = vadd.f32 %v475, %v674
    %v676 = vpop.f32.mrb[0].mxu0
    %v677 = vadd.f32 %v477, %v676
    %678 = vdwg.mxu0
    %679 = vmatprep.subr.mxu0 0.0
    %680 = vmatpush1.msra.mxu0 %v168
    %681 = vmatprep.subr.mxu0 0.0
    %682 = vmatpush1.msra.mxu0 %v171
    %683 = vmatprep.subr.mxu0 0.0
    %684 = vmatpush1.msra.mxu0 %v174
    %685 = vmatprep.subr.mxu0 0.0
    %686 = vmatpush1.msra.mxu0 %v177
    %687 = vmatprep.subr.mxu0 0.0
    %688 = vmatpush1.msra.mxu0 %v180
    %689 = vmatprep.subr.mxu0 0.0
    %690 = vmatpush1.msra.mxu0 %v183
    %691 = vmatprep.subr.mxu0 0.0
    %692 = vmatpush1.msra.mxu0 %v186
    %693 = vmatprep.subr.mxu0 0.0
    %694 = vmatpush1.msra.mxu0 %v189
    %695 = vmatprep.subr.mxu0 0.0
    %696 = vmatpush1.msra.mxu0 %v192
    %697 = vmatprep.subr.mxu0 0.0
    %698 = vmatpush1.msra.mxu0 %v195
    %699 = vmatprep.subr.mxu0 0.0
    %700 = vmatpush1.msra.mxu0 %v198
    %701 = vmatprep.subr.mxu0 0.0
    %702 = vmatpush1.msra.mxu0 %v201
    %703 = vmatprep.subr.mxu0 0.0
    %704 = vmatpush1.msra.mxu0 %v204
    %705 = vmatprep.subr.mxu0 0.0
    %706 = vmatpush1.msra.mxu0 %v207
    %707 = vmatprep.subr.mxu0 0.0
    %708 = vmatpush1.msra.mxu0 %v210
    %709 = vmatprep.subr.mxu0 0.0
    %710 = vmatpush1.msra.mxu0 0.0
    %711 = vmatprep.subr.mxu0 0.0
    %712 = vmatpush1.msra.mxu0 0.0
    %713 = vmatprep.subr.mxu0 0.0
    %714 = vmatpush1.msra.mxu0 0.0
    %715 = vmatprep.subr.mxu0 0.0
    %716 = vmatpush1.msra.mxu0 0.0
    %717 = vmatprep.subr.mxu0 0.0
    %718 = vmatpush1.msra.mxu0 0.0
    %719 = vmatprep.subr.mxu0 0.0
    %720 = vmatpush1.msra.mxu0 0.0
    %721 = vmatprep.subr.mxu0 0.0
    %722 = vmatpush1.msra.mxu0 0.0
    %723 = vmatprep.subr.mxu0 0.0
    %724 = vmatpush1.msra.mxu0 0.0
    %725 = vmatprep.subr.mxu0 0.0
    %726 = vmatpush1.msra.mxu0 0.0
    %727 = vmatprep.subr.mxu0 0.0
    %728 = vmatpush1.msra.mxu0 0.0
    %729 = vmatprep.subr.mxu0 0.0
    %730 = vmatpush1.msra.mxu0 0.0
    %731 = vmatprep.subr.mxu0 0.0
    %732 = vmatpush1.msra.mxu0 0.0
    %733 = vmatprep.subr.mxu0 0.0
    %734 = vmatpush1.msra.mxu0 0.0
    %735 = vmatprep.subr.mxu0 0.0
    %736 = vmatpush1.msra.mxu0 0.0
    %737 = vmatprep.subr.mxu0 0.0
    %738 = vmatpush1.msra.mxu0 0.0
    %739 = vmatprep.subr.mxu0 0.0
    %740 = vmatpush1.msra.mxu0 0.0
    %741 = vmatprep.subr.mxu0 0.0
    %742 = vmatpush1.msra.mxu0 0.0
    %743 = vmatprep.mubr.f32.mxu0 0.0
    %744 = vmatmul.mubr.f32.gmra.mrb[0].mxu0 %v570
    %v745 = vpop.f32.mrb[0].mxu0
    %v746 = vadd.f32 %v546, %v745
    %v747 = vpop.f32.mrb[0].mxu0
    %748 = vmatprep.mubr.f32.mxu0 0.0
    %749 = vmatmul.mubr.f32.gmra.mrb[0].mxu0 %v573
    %v750 = vpop.f32.mrb[0].mxu0
    %v751 = vadd.f32 %v551, %v750
    %v752 = vpop.f32.mrb[0].mxu0
    %753 = vmatprep.mubr.f32.mxu0 0.0
    %754 = vmatmul.mubr.f32.gmra.mrb[0].mxu0 %v576
    %v755 = vpop.f32.mrb[0].mxu0
    %v756 = vadd.f32 %v556, %v755
    %v757 = vpop.f32.mrb[0].mxu0
    %758 = vmatprep.mubr.f32.mxu0 0.0
    %759 = vmatmul.mubr.f32.gmra.mrb[0].mxu0 %v579
    %v760 = vpop.f32.mrb[0].mxu0
    %v761 = vadd.f32 %v561, %v760
    %v762 = vpop.f32.mrb[0].mxu0
    %763 = vmatprep.mubr.f32.mxu0 0.0
    %764 = vmatmul.mubr.f32.gmra.mrb[0].mxu0 %v582
    %v765 = vpop.f32.mrb[0].mxu0
    %v766 = vadd.f32 %v566, %v765
    %v767 = vpop.f32.mrb[0].mxu0
    %768 = vdwg.mxu0
    %s769 = scalar_lea.vmem %s1, 80
    %v770 = vld [vmem:[%s769] sm:$0xff]
    %v771 = vld [vmem:[%s769 + $0x8] sm:$0xff]
    %v772 = vld [vmem:[%s769 + $0x10] sm:$0xff]
    %v773 = vld [vmem:[%s769 + $0x18] sm:$0xff]
    %v774 = vld [vmem:[%s769 + $0x20] sm:$0xf]
    %v776 = vsel %vm60, %v770, 0
    %v779 = vsel %vm60, %v771, 0
    %v782 = vsel %vm60, %v772, 0
    %v785 = vsel %vm60, %v773, 0
    %v788 = vsel %vm60, %v774, 0
    %790 = vmatprep.subr.mxu0 0.0
    %791 = vmatpush1.msra.mxu0 %v45
    %792 = vmatprep.subr.mxu0 0.0
    %793 = vmatpush1.msra.mxu0 %v46
    %794 = vmatprep.subr.mxu0 0.0
    %795 = vmatpush1.msra.mxu0 %v47
    %796 = vmatprep.subr.mxu0 0.0
    %797 = vmatpush1.msra.mxu0 %v48
    %798 = vmatprep.subr.mxu0 0.0
    %799 = vmatpush1.msra.mxu0 %v49
    %800 = vmatprep.subr.mxu0 0.0
    %801 = vmatpush1.msra.mxu0 %v50
    %802 = vmatprep.subr.mxu0 0.0
    %803 = vmatpush1.msra.mxu0 %v51
    %804 = vmatprep.subr.mxu0 0.0
    %805 = vmatpush1.msra.mxu0 %v52
    %806 = vmatprep.subr.mxu0 0.0
    %807 = vmatpush1.msra.mxu0 %v53
    %808 = vmatprep.subr.mxu0 0.0
    %809 = vmatpush1.msra.mxu0 %v54
    %810 = vmatprep.subr.mxu0 0.0
    %811 = vmatpush1.msra.mxu0 0.0
    %812 = vmatprep.subr.mxu0 0.0
    %813 = vmatpush1.msra.mxu0 0.0
    %814 = vmatprep.subr.mxu0 0.0
    %815 = vmatpush1.msra.mxu0 0.0
    %816 = vmatprep.subr.mxu0 0.0
    %817 = vmatpush1.msra.mxu0 0.0
    %818 = vmatprep.subr.mxu0 0.0
    %819 = vmatpush1.msra.mxu0 0.0
    %820 = vmatprep.subr.mxu0 0.0
    %821 = vmatpush1.msra.mxu0 0.0
    %822 = vmatprep.subr.mxu0 0.0
    %823 = vmatpush1.msra.mxu0 0.0
    %824 = vmatprep.subr.mxu0 0.0
    %825 = vmatpush1.msra.mxu0 0.0
    %826 = vmatprep.subr.mxu0 0.0
    %827 = vmatpush1.msra.mxu0 0.0
    %828 = vmatprep.subr.mxu0 0.0
    %829 = vmatpush1.msra.mxu0 0.0
    %830 = vmatprep.subr.mxu0 0.0
    %831 = vmatpush1.msra.mxu0 0.0
    %832 = vmatprep.subr.mxu0 0.0
    %833 = vmatpush1.msra.mxu0 0.0
    %834 = vmatprep.subr.mxu0 0.0
    %835 = vmatpush1.msra.mxu0 0.0
    %836 = vmatprep.subr.mxu0 0.0
    %837 = vmatpush1.msra.mxu0 0.0
    %838 = vmatprep.subr.mxu0 0.0
    %839 = vmatpush1.msra.mxu0 0.0
    %840 = vmatprep.subr.mxu0 0.0
    %841 = vmatpush1.msra.mxu0 0.0
    %842 = vmatprep.subr.mxu0 0.0
    %843 = vmatpush1.msra.mxu0 0.0
    %844 = vmatprep.subr.mxu0 0.0
    %845 = vmatpush1.msra.mxu0 0.0
    %846 = vmatprep.subr.mxu0 0.0
    %847 = vmatpush1.msra.mxu0 0.0
    %848 = vmatprep.subr.mxu0 0.0
    %849 = vmatpush1.msra.mxu0 0.0
    %850 = vmatprep.subr.mxu0 0.0
    %851 = vmatpush1.msra.mxu0 0.0
    %852 = vmatprep.subr.mxu0 0.0
    %853 = vmatpush1.msra.mxu0 0.0
    %854 = vmatprep.mubr.f32.mxu0 0.0
    %855 = vmatmul.mubr.f32.gmra.mrb[0].mxu0 %v776
    %v856 = vpop.f32.mrb[0].mxu0
    %v857 = vadd.f32 0.0, %v856
    %v858 = vpop.f32.mrb[0].mxu0
    %859 = vmatprep.mubr.f32.mxu0 0.0
    %860 = vmatmul.mubr.f32.gmra.mrb[0].mxu0 %v779
    %v861 = vpop.f32.mrb[0].mxu0
    %v862 = vadd.f32 0.0, %v861
    %v863 = vpop.f32.mrb[0].mxu0
    %864 = vmatprep.mubr.f32.mxu0 0.0
    %865 = vmatmul.mubr.f32.gmra.mrb[0].mxu0 %v782
    %v866 = vpop.f32.mrb[0].mxu0
    %v867 = vadd.f32 0.0, %v866
    %v868 = vpop.f32.mrb[0].mxu0
    %869 = vmatprep.mubr.f32.mxu0 0.0
    %870 = vmatmul.mubr.f32.gmra.mrb[0].mxu0 %v785
    %v871 = vpop.f32.mrb[0].mxu0
    %v872 = vadd.f32 0.0, %v871
    %v873 = vpop.f32.mrb[0].mxu0
    %874 = vmatprep.mubr.f32.mxu0 0.0
    %875 = vmatmul.mubr.f32.gmra.mrb[0].mxu0 %v788
    %v876 = vpop.f32.mrb[0].mxu0
    %v877 = vadd.f32 0.0, %v876
    %v878 = vpop.f32.mrb[0].mxu0
    %879 = vdwg.mxu0
    %s880 = scalar_lea.vmem %s2, 720
    %v881 = vld [vmem:[%s880] sm:$0xff]
    %v882 = vld [vmem:[%s880 + $0x8] sm:$0xff]
    %v883 = vld [vmem:[%s880 + $0x10] sm:$0xff]
    %v884 = vld [vmem:[%s880 + $0x18] sm:$0xff]
    %v885 = vld [vmem:[%s880 + $0x20] sm:$0xff]
    %v886 = vld [vmem:[%s880 + $0x28] sm:$0xff]
    %v887 = vld [vmem:[%s880 + $0x30] sm:$0xff]
    %v888 = vld [vmem:[%s880 + $0x38] sm:$0xff]
    %v889 = vld [vmem:[%s880 + $0x40] sm:$0xff]
    %v890 = vld [vmem:[%s880 + $0x48] sm:$0xff]
    %v891 = vld [vmem:[%s880 + $0x50] sm:$0xff]
    %v892 = vld [vmem:[%s880 + $0x58] sm:$0xff]
    %v893 = vld [vmem:[%s880 + $0x60] sm:$0xff]
    %v894 = vld [vmem:[%s880 + $0x68] sm:$0xff]
    %v895 = vld [vmem:[%s880 + $0x70] sm:$0xff]
    %v896 = vld [vmem:[%s880 + $0x78] sm:$0xff]
    %v897 = vld [vmem:[%s880 + $0x80] sm:$0xff]
    %v898 = vld [vmem:[%s880 + $0x88] sm:$0xff]
    %v899 = vld [vmem:[%s880 + $0x90] sm:$0xff]
    %v900 = vld [vmem:[%s880 + $0x98] sm:$0xff]
    %v901 = vld [vmem:[%s880 + $0xa0] sm:$0xff]
    %v902 = vld [vmem:[%s880 + $0xa8] sm:$0xff]
    %v903 = vld [vmem:[%s880 + $0xb0] sm:$0xff]
    %v904 = vld [vmem:[%s880 + $0xb8] sm:$0xff]
    %v905 = vld [vmem:[%s880 + $0xc0] sm:$0xff]
    %v906 = vld [vmem:[%s880 + $0xc8] sm:$0xff]
    %v907 = vld [vmem:[%s880 + $0xd0] sm:$0xff]
    %v908 = vld [vmem:[%s880 + $0xd8] sm:$0xff]
    %v909 = vld [vmem:[%s880 + $0xe0] sm:$0xff]
    %v910 = vld [vmem:[%s880 + $0xe8] sm:$0xff]
    %v911 = vld [vmem:[%s880 + $0xf0] sm:$0xff]
    %v912 = vld [vmem:[%s880 + $0xf8] sm:$0xff]
    %v913 = vld [vmem:[%s880 + $0x100] sm:$0xff]
    %v914 = vld [vmem:[%s880 + $0x108] sm:$0xff]
    %v915 = vld [vmem:[%s880 + $0x110] sm:$0xff]
    %v916 = vld [vmem:[%s880 + $0x118] sm:$0xff]
    %v917 = vld [vmem:[%s880 + $0x120] sm:$0xff]
    %v918 = vld [vmem:[%s880 + $0x128] sm:$0xff]
    %v919 = vld [vmem:[%s880 + $0x130] sm:$0xff]
    %v920 = vld [vmem:[%s880 + $0x138] sm:$0xff]
    %v921 = vld [vmem:[%s880 + $0x140] sm:$0xff]
    %v922 = vld [vmem:[%s880 + $0x148] sm:$0xff]
    %v923 = vld [vmem:[%s880 + $0x150] sm:$0xff]
    %v924 = vld [vmem:[%s880 + $0x158] sm:$0xff]
    %v925 = vld [vmem:[%s880 + $0x160] sm:$0xff]
    %v927 = vsel %vm368, %v857, 0
    %v930 = vsel %vm368, %v862, 0
    %v933 = vsel %vm368, %v867, 0
    %v936 = vsel %vm368, %v872, 0
    %v939 = vsel %vm368, %v877, 0
    %941 = vmatprep.subr.mxu0 %v882
    %942 = vmatpush1.msra.mxu0 %v881
    %943 = vmatprep.subr.mxu0 %v885
    %944 = vmatpush1.msra.mxu0 %v884
    %945 = vmatprep.subr.mxu0 %v888
    %946 = vmatpush1.msra.mxu0 %v887
    %947 = vmatprep.subr.mxu0 %v891
    %948 = vmatpush1.msra.mxu0 %v890
    %949 = vmatprep.subr.mxu0 %v894
    %950 = vmatpush1.msra.mxu0 %v893
    %951 = vmatprep.subr.mxu0 %v897
    %952 = vmatpush1.msra.mxu0 %v896
    %953 = vmatprep.subr.mxu0 %v900
    %954 = vmatpush1.msra.mxu0 %v899
    %955 = vmatprep.subr.mxu0 %v903
    %956 = vmatpush1.msra.mxu0 %v902
    %957 = vmatprep.subr.mxu0 %v906
    %958 = vmatpush1.msra.mxu0 %v905
    %959 = vmatprep.subr.mxu0 %v909
    %960 = vmatpush1.msra.mxu0 %v908
    %961 = vmatprep.subr.mxu0 %v912
    %962 = vmatpush1.msra.mxu0 %v911
    %963 = vmatprep.subr.mxu0 %v915
    %964 = vmatpush1.msra.mxu0 %v914
    %965 = vmatprep.subr.mxu0 %v918
    %966 = vmatpush1.msra.mxu0 %v917
    %967 = vmatprep.subr.mxu0 %v921
    %968 = vmatpush1.msra.mxu0 %v920
    %969 = vmatprep.subr.mxu0 %v924
    %970 = vmatpush1.msra.mxu0 %v923
    %971 = vmatprep.subr.mxu0 0.0
    %972 = vmatpush1.msra.mxu0 0.0
    %973 = vmatprep.subr.mxu0 0.0
    %974 = vmatpush1.msra.mxu0 0.0
    %975 = vmatprep.subr.mxu0 0.0
    %976 = vmatpush1.msra.mxu0 0.0
    %977 = vmatprep.subr.mxu0 0.0
    %978 = vmatpush1.msra.mxu0 0.0
    %979 = vmatprep.subr.mxu0 0.0
    %980 = vmatpush1.msra.mxu0 0.0
    %981 = vmatprep.subr.mxu0 0.0
    %982 = vmatpush1.msra.mxu0 0.0
    %983 = vmatprep.subr.mxu0 0.0
    %984 = vmatpush1.msra.mxu0 0.0
    %985 = vmatprep.subr.mxu0 0.0
    %986 = vmatpush1.msra.mxu0 0.0
    %987 = vmatprep.subr.mxu0 0.0
    %988 = vmatpush1.msra.mxu0 0.0
    %989 = vmatprep.subr.mxu0 0.0
    %990 = vmatpush1.msra.mxu0 0.0
    %991 = vmatprep.subr.mxu0 0.0
    %992 = vmatpush1.msra.mxu0 0.0
    %993 = vmatprep.subr.mxu0 0.0
    %994 = vmatpush1.msra.mxu0 0.0
    %995 = vmatprep.subr.mxu0 0.0
    %996 = vmatpush1.msra.mxu0 0.0
    %997 = vmatprep.subr.mxu0 0.0
    %998 = vmatpush1.msra.mxu0 0.0
    %999 = vmatprep.subr.mxu0 0.0
    %1000 = vmatpush1.msra.mxu0 0.0
    %1001 = vmatprep.subr.mxu0 0.0
    %1002 = vmatpush1.msra.mxu0 0.0
    %1003 = vmatprep.subr.mxu0 0.0
    %1004 = vmatpush1.msra.mxu0 0.0
    %1005 = vmatprep.mubr.f32.mxu0 0.0
    %1006 = vmatmul.mubr.f32.gmra.mrb[0].mxu0 %v927
    %v1007 = vpop.f32.mrb[0].mxu0
    %v1008 = vadd.f32 0.0, %v1007
    %v1009 = vpop.f32.mrb[0].mxu0
    %v1010 = vadd.f32 0.0, %v1009
    %1011 = vmatprep.mubr.f32.mxu0 0.0
    %1012 = vmatmul.mubr.f32.gmra.mrb[0].mxu0 %v930
    %v1013 = vpop.f32.mrb[0].mxu0
    %v1014 = vadd.f32 0.0, %v1013
    %v1015 = vpop.f32.mrb[0].mxu0
    %v1016 = vadd.f32 0.0, %v1015
    %1017 = vmatprep.mubr.f32.mxu0 0.0
    %1018 = vmatmul.mubr.f32.gmra.mrb[0].mxu0 %v933
    %v1019 = vpop.f32.mrb[0].mxu0
    %v1020 = vadd.f32 0.0, %v1019
    %v1021 = vpop.f32.mrb[0].mxu0
    %v1022 = vadd.f32 0.0, %v1021
    %1023 = vmatprep.mubr.f32.mxu0 0.0
    %1024 = vmatmul.mubr.f32.gmra.mrb[0].mxu0 %v936
    %v1025 = vpop.f32.mrb[0].mxu0
    %v1026 = vadd.f32 0.0, %v1025
    %v1027 = vpop.f32.mrb[0].mxu0
    %v1028 = vadd.f32 0.0, %v1027
    %1029 = vmatprep.mubr.f32.mxu0 0.0
    %1030 = vmatmul.mubr.f32.gmra.mrb[0].mxu0 %v939
    %v1031 = vpop.f32.mrb[0].mxu0
    %v1032 = vadd.f32 0.0, %v1031
    %v1033 = vpop.f32.mrb[0].mxu0
    %v1034 = vadd.f32 0.0, %v1033
    %1035 = vdwg.mxu0
    %1036 = vmatprep.subr.mxu0 0.0
    %1037 = vmatpush1.msra.mxu0 %v883
    %1038 = vmatprep.subr.mxu0 0.0
    %1039 = vmatpush1.msra.mxu0 %v886
    %1040 = vmatprep.subr.mxu0 0.0
    %1041 = vmatpush1.msra.mxu0 %v889
    %1042 = vmatprep.subr.mxu0 0.0
    %1043 = vmatpush1.msra.mxu0 %v892
    %1044 = vmatprep.subr.mxu0 0.0
    %1045 = vmatpush1.msra.mxu0 %v895
    %1046 = vmatprep.subr.mxu0 0.0
    %1047 = vmatpush1.msra.mxu0 %v898
    %1048 = vmatprep.subr.mxu0 0.0
    %1049 = vmatpush1.msra.mxu0 %v901
    %1050 = vmatprep.subr.mxu0 0.0
    %1051 = vmatpush1.msra.mxu0 %v904
    %1052 = vmatprep.subr.mxu0 0.0
    %1053 = vmatpush1.msra.mxu0 %v907
    %1054 = vmatprep.subr.mxu0 0.0
    %1055 = vmatpush1.msra.mxu0 %v910
    %1056 = vmatprep.subr.mxu0 0.0
    %1057 = vmatpush1.msra.mxu0 %v913
    %1058 = vmatprep.subr.mxu0 0.0
    %1059 = vmatpush1.msra.mxu0 %v916
    %1060 = vmatprep.subr.mxu0 0.0
    %1061 = vmatpush1.msra.mxu0 %v919
    %1062 = vmatprep.subr.mxu0 0.0
    %1063 = vmatpush1.msra.mxu0 %v922
    %1064 = vmatprep.subr.mxu0 0.0
    %1065 = vmatpush1.msra.mxu0 %v925
    %1066 = vmatprep.subr.mxu0 0.0
    %1067 = vmatpush1.msra.mxu0 0.0
    %1068 = vmatprep.subr.mxu0 0.0
    %1069 = vmatpush1.msra.mxu0 0.0
    %1070 = vmatprep.subr.mxu0 0.0
    %1071 = vmatpush1.msra.mxu0 0.0
    %1072 = vmatprep.subr.mxu0 0.0
    %1073 = vmatpush1.msra.mxu0 0.0
    %1074 = vmatprep.subr.mxu0 0.0
    %1075 = vmatpush1.msra.mxu0 0.0
    %1076 = vmatprep.subr.mxu0 0.0
    %1077 = vmatpush1.msra.mxu0 0.0
    %1078 = vmatprep.subr.mxu0 0.0
    %1079 = vmatpush1.msra.mxu0 0.0
    %1080 = vmatprep.subr.mxu0 0.0
    %1081 = vmatpush1.msra.mxu0 0.0
    %1082 = vmatprep.subr.mxu0 0.0
    %1083 = vmatpush1.msra.mxu0 0.0
    %1084 = vmatprep.subr.mxu0 0.0
    %1085 = vmatpush1.msra.mxu0 0.0
    %1086 = vmatprep.subr.mxu0 0.0
    %1087 = vmatpush1.msra.mxu0 0.0
    %1088 = vmatprep.subr.mxu0 0.0
    %1089 = vmatpush1.msra.mxu0 0.0
    %1090 = vmatprep.subr.mxu0 0.0
    %1091 = vmatpush1.msra.mxu0 0.0
    %1092 = vmatprep.subr.mxu0 0.0
    %1093 = vmatpush1.msra.mxu0 0.0
    %1094 = vmatprep.subr.mxu0 0.0
    %1095 = vmatpush1.msra.mxu0 0.0
    %1096 = vmatprep.subr.mxu0 0.0
    %1097 = vmatpush1.msra.mxu0 0.0
    %1098 = vmatprep.subr.mxu0 0.0
    %1099 = vmatpush1.msra.mxu0 0.0
    %1100 = vmatprep.mubr.f32.mxu0 0.0
    %1101 = vmatmul.mubr.f32.gmra.mrb[0].mxu0 %v927
    %v1102 = vpop.f32.mrb[0].mxu0
    %v1103 = vadd.f32 0.0, %v1102
    %v1104 = vpop.f32.mrb[0].mxu0
    %1105 = vmatprep.mubr.f32.mxu0 0.0
    %1106 = vmatmul.mubr.f32.gmra.mrb[0].mxu0 %v930
    %v1107 = vpop.f32.mrb[0].mxu0
    %v1108 = vadd.f32 0.0, %v1107
    %v1109 = vpop.f32.mrb[0].mxu0
    %1110 = vmatprep.mubr.f32.mxu0 0.0
    %1111 = vmatmul.mubr.f32.gmra.mrb[0].mxu0 %v933
    %v1112 = vpop.f32.mrb[0].mxu0
    %v1113 = vadd.f32 0.0, %v1112
    %v1114 = vpop.f32.mrb[0].mxu0
    %1115 = vmatprep.mubr.f32.mxu0 0.0
    %1116 = vmatmul.mubr.f32.gmra.mrb[0].mxu0 %v936
    %v1117 = vpop.f32.mrb[0].mxu0
    %v1118 = vadd.f32 0.0, %v1117
    %v1119 = vpop.f32.mrb[0].mxu0
    %1120 = vmatprep.mubr.f32.mxu0 0.0
    %1121 = vmatmul.mubr.f32.gmra.mrb[0].mxu0 %v939
    %v1122 = vpop.f32.mrb[0].mxu0
    %v1123 = vadd.f32 0.0, %v1122
    %v1124 = vpop.f32.mrb[0].mxu0
    %1125 = vdwg.mxu0
    %v1126 = vadd.f32 %v651, %v1008
    %v1127 = vadd.f32 %v653, %v1010
    %v1128 = vadd.f32 %v746, %v1103
    %v1129 = vadd.f32 %v657, %v1014
    %v1130 = vadd.f32 %v659, %v1016
    %v1131 = vadd.f32 %v751, %v1108
    %v1132 = vadd.f32 %v663, %v1020
    %v1133 = vadd.f32 %v665, %v1022
    %v1134 = vadd.f32 %v756, %v1113
    %v1135 = vadd.f32 %v669, %v1026
    %v1136 = vadd.f32 %v671, %v1028
    %v1137 = vadd.f32 %v761, %v1118
    %v1138 = vadd.f32 %v675, %v1032
    %v1139 = vadd.f32 %v677, %v1034
    %v1140 = vadd.f32 %v766, %v1123
    %s1141 = scalar_lea.vmem %s1, 120
    %v1142 = vld [vmem:[%s1141] sm:$0xff]
    %v1143 = vld [vmem:[%s1141 + $0x8] sm:$0xff]
    %v1144 = vld [vmem:[%s1141 + $0x10] sm:$0xff]
    %v1145 = vld [vmem:[%s1141 + $0x18] sm:$0xff]
    %v1146 = vld [vmem:[%s1141 + $0x20] sm:$0xf]
    %v1148 = vsel %vm60, %v1142, 0
    %v1151 = vsel %vm60, %v1143, 0
    %v1154 = vsel %vm60, %v1144, 0
    %v1157 = vsel %vm60, %v1145, 0
    %v1160 = vsel %vm60, %v1146, 0
    %1162 = vmatprep.subr.mxu0 0.0
    %1163 = vmatpush1.msra.mxu0 %v45
    %1164 = vmatprep.subr.mxu0 0.0
    %1165 = vmatpush1.msra.mxu0 %v46
    %1166 = vmatprep.subr.mxu0 0.0
    %1167 = vmatpush1.msra.mxu0 %v47
    %1168 = vmatprep.subr.mxu0 0.0
    %1169 = vmatpush1.msra.mxu0 %v48
    %1170 = vmatprep.subr.mxu0 0.0
    %1171 = vmatpush1.msra.mxu0 %v49
    %1172 = vmatprep.subr.mxu0 0.0
    %1173 = vmatpush1.msra.mxu0 %v50
    %1174 = vmatprep.subr.mxu0 0.0
    %1175 = vmatpush1.msra.mxu0 %v51
    %1176 = vmatprep.subr.mxu0 0.0
    %1177 = vmatpush1.msra.mxu0 %v52
    %1178 = vmatprep.subr.mxu0 0.0
    %1179 = vmatpush1.msra.mxu0 %v53
    %1180 = vmatprep.subr.mxu0 0.0
    %1181 = vmatpush1.msra.mxu0 %v54
    %1182 = vmatprep.subr.mxu0 0.0
    %1183 = vmatpush1.msra.mxu0 0.0
    %1184 = vmatprep.subr.mxu0 0.0
    %1185 = vmatpush1.msra.mxu0 0.0
    %1186 = vmatprep.subr.mxu0 0.0
    %1187 = vmatpush1.msra.mxu0 0.0
    %1188 = vmatprep.subr.mxu0 0.0
    %1189 = vmatpush1.msra.mxu0 0.0
    %1190 = vmatprep.subr.mxu0 0.0
    %1191 = vmatpush1.msra.mxu0 0.0
    %1192 = vmatprep.subr.mxu0 0.0
    %1193 = vmatpush1.msra.mxu0 0.0
    %1194 = vmatprep.subr.mxu0 0.0
    %1195 = vmatpush1.msra.mxu0 0.0
    %1196 = vmatprep.subr.mxu0 0.0
    %1197 = vmatpush1.msra.mxu0 0.0
    %1198 = vmatprep.subr.mxu0 0.0
    %1199 = vmatpush1.msra.mxu0 0.0
    %1200 = vmatprep.subr.mxu0 0.0
    %1201 = vmatpush1.msra.mxu0 0.0
    %1202 = vmatprep.subr.mxu0 0.0
    %1203 = vmatpush1.msra.mxu0 0.0
    %1204 = vmatprep.subr.mxu0 0.0
    %1205 = vmatpush1.msra.mxu0 0.0
    %1206 = vmatprep.subr.mxu0 0.0
    %1207 = vmatpush1.msra.mxu0 0.0
    %1208 = vmatprep.subr.mxu0 0.0
    %1209 = vmatpush1.msra.mxu0 0.0
    %1210 = vmatprep.subr.mxu0 0.0
    %1211 = vmatpush1.msra.mxu0 0.0
    %1212 = vmatprep.subr.mxu0 0.0
    %1213 = vmatpush1.msra.mxu0 0.0
    %1214 = vmatprep.subr.mxu0 0.0
    %1215 = vmatpush1.msra.mxu0 0.0
    %1216 = vmatprep.subr.mxu0 0.0
    %1217 = vmatpush1.msra.mxu0 0.0
    %1218 = vmatprep.subr.mxu0 0.0
    %1219 = vmatpush1.msra.mxu0 0.0
    %1220 = vmatprep.subr.mxu0 0.0
    %1221 = vmatpush1.msra.mxu0 0.0
    %1222 = vmatprep.subr.mxu0 0.0
    %1223 = vmatpush1.msra.mxu0 0.0
    %1224 = vmatprep.subr.mxu0 0.0
    %1225 = vmatpush1.msra.mxu0 0.0
    %1226 = vmatprep.mubr.f32.mxu0 0.0
    %1227 = vmatmul.mubr.f32.gmra.mrb[0].mxu0 %v1148
    %v1228 = vpop.f32.mrb[0].mxu0
    %v1229 = vadd.f32 0.0, %v1228
    %v1230 = vpop.f32.mrb[0].mxu0
    %1231 = vmatprep.mubr.f32.mxu0 0.0
    %1232 = vmatmul.mubr.f32.gmra.mrb[0].mxu0 %v1151
    %v1233 = vpop.f32.mrb[0].mxu0
    %v1234 = vadd.f32 0.0, %v1233
    %v1235 = vpop.f32.mrb[0].mxu0
    %1236 = vmatprep.mubr.f32.mxu0 0.0
    %1237 = vmatmul.mubr.f32.gmra.mrb[0].mxu0 %v1154
    %v1238 = vpop.f32.mrb[0].mxu0
    %v1239 = vadd.f32 0.0, %v1238
    %v1240 = vpop.f32.mrb[0].mxu0
    %1241 = vmatprep.mubr.f32.mxu0 0.0
    %1242 = vmatmul.mubr.f32.gmra.mrb[0].mxu0 %v1157
    %v1243 = vpop.f32.mrb[0].mxu0
    %v1244 = vadd.f32 0.0, %v1243
    %v1245 = vpop.f32.mrb[0].mxu0
    %1246 = vmatprep.mubr.f32.mxu0 0.0
    %1247 = vmatmul.mubr.f32.gmra.mrb[0].mxu0 %v1160
    %v1248 = vpop.f32.mrb[0].mxu0
    %v1249 = vadd.f32 0.0, %v1248
    %v1250 = vpop.f32.mrb[0].mxu0
    %1251 = vdwg.mxu0
    %s1252 = scalar_lea.vmem %s2, 1080
    %v1253 = vld [vmem:[%s1252] sm:$0xff]
    %v1254 = vld [vmem:[%s1252 + $0x8] sm:$0xff]
    %v1255 = vld [vmem:[%s1252 + $0x10] sm:$0xff]
    %v1256 = vld [vmem:[%s1252 + $0x18] sm:$0xff]
    %v1257 = vld [vmem:[%s1252 + $0x20] sm:$0xff]
    %v1258 = vld [vmem:[%s1252 + $0x28] sm:$0xff]
    %v1259 = vld [vmem:[%s1252 + $0x30] sm:$0xff]
    %v1260 = vld [vmem:[%s1252 + $0x38] sm:$0xff]
    %v1261 = vld [vmem:[%s1252 + $0x40] sm:$0xff]
    %v1262 = vld [vmem:[%s1252 + $0x48] sm:$0xff]
    %v1263 = vld [vmem:[%s1252 + $0x50] sm:$0xff]
    %v1264 = vld [vmem:[%s1252 + $0x58] sm:$0xff]
    %v1265 = vld [vmem:[%s1252 + $0x60] sm:$0xff]
    %v1266 = vld [vmem:[%s1252 + $0x68] sm:$0xff]
    %v1267 = vld [vmem:[%s1252 + $0x70] sm:$0xff]
    %v1268 = vld [vmem:[%s1252 + $0x78] sm:$0xff]
    %v1269 = vld [vmem:[%s1252 + $0x80] sm:$0xff]
    %v1270 = vld [vmem:[%s1252 + $0x88] sm:$0xff]
    %v1271 = vld [vmem:[%s1252 + $0x90] sm:$0xff]
    %v1272 = vld [vmem:[%s1252 + $0x98] sm:$0xff]
    %v1273 = vld [vmem:[%s1252 + $0xa0] sm:$0xff]
    %v1274 = vld [vmem:[%s1252 + $0xa8] sm:$0xff]
    %v1275 = vld [vmem:[%s1252 + $0xb0] sm:$0xff]
    %v1276 = vld [vmem:[%s1252 + $0xb8] sm:$0xff]
    %v1277 = vld [vmem:[%s1252 + $0xc0] sm:$0xff]
    %v1278 = vld [vmem:[%s1252 + $0xc8] sm:$0xff]
    %v1279 = vld [vmem:[%s1252 + $0xd0] sm:$0xff]
    %v1280 = vld [vmem:[%s1252 + $0xd8] sm:$0xff]
    %v1281 = vld [vmem:[%s1252 + $0xe0] sm:$0xff]
    %v1282 = vld [vmem:[%s1252 + $0xe8] sm:$0xff]
    %v1283 = vld [vmem:[%s1252 + $0xf0] sm:$0xff]
    %v1284 = vld [vmem:[%s1252 + $0xf8] sm:$0xff]
    %v1285 = vld [vmem:[%s1252 + $0x100] sm:$0xff]
    %v1286 = vld [vmem:[%s1252 + $0x108] sm:$0xff]
    %v1287 = vld [vmem:[%s1252 + $0x110] sm:$0xff]
    %v1288 = vld [vmem:[%s1252 + $0x118] sm:$0xff]
    %v1289 = vld [vmem:[%s1252 + $0x120] sm:$0xff]
    %v1290 = vld [vmem:[%s1252 + $0x128] sm:$0xff]
    %v1291 = vld [vmem:[%s1252 + $0x130] sm:$0xff]
    %v1292 = vld [vmem:[%s1252 + $0x138] sm:$0xff]
    %v1293 = vld [vmem:[%s1252 + $0x140] sm:$0xff]
    %v1294 = vld [vmem:[%s1252 + $0x148] sm:$0xff]
    %v1295 = vld [vmem:[%s1252 + $0x150] sm:$0xff]
    %v1296 = vld [vmem:[%s1252 + $0x158] sm:$0xff]
    %v1297 = vld [vmem:[%s1252 + $0x160] sm:$0xff]
    %v1299 = vsel %vm368, %v1229, 0
    %v1302 = vsel %vm368, %v1234, 0
    %v1305 = vsel %vm368, %v1239, 0
    %v1308 = vsel %vm368, %v1244, 0
    %v1311 = vsel %vm368, %v1249, 0
    %1313 = vmatprep.subr.mxu0 %v1254
    %1314 = vmatpush1.msra.mxu0 %v1253
    %1315 = vmatprep.subr.mxu0 %v1257
    %1316 = vmatpush1.msra.mxu0 %v1256
    %1317 = vmatprep.subr.mxu0 %v1260
    %1318 = vmatpush1.msra.mxu0 %v1259
    %1319 = vmatprep.subr.mxu0 %v1263
    %1320 = vmatpush1.msra.mxu0 %v1262
    %1321 = vmatprep.subr.mxu0 %v1266
    %1322 = vmatpush1.msra.mxu0 %v1265
    %1323 = vmatprep.subr.mxu0 %v1269
    %1324 = vmatpush1.msra.mxu0 %v1268
    %1325 = vmatprep.subr.mxu0 %v1272
    %1326 = vmatpush1.msra.mxu0 %v1271
    %1327 = vmatprep.subr.mxu0 %v1275
    %1328 = vmatpush1.msra.mxu0 %v1274
    %1329 = vmatprep.subr.mxu0 %v1278
    %1330 = vmatpush1.msra.mxu0 %v1277
    %1331 = vmatprep.subr.mxu0 %v1281
    %1332 = vmatpush1.msra.mxu0 %v1280
    %1333 = vmatprep.subr.mxu0 %v1284
    %1334 = vmatpush1.msra.mxu0 %v1283
    %1335 = vmatprep.subr.mxu0 %v1287
    %1336 = vmatpush1.msra.mxu0 %v1286
    %1337 = vmatprep.subr.mxu0 %v1290
    %1338 = vmatpush1.msra.mxu0 %v1289
    %1339 = vmatprep.subr.mxu0 %v1293
    %1340 = vmatpush1.msra.mxu0 %v1292
    %1341 = vmatprep.subr.mxu0 %v1296
    %1342 = vmatpush1.msra.mxu0 %v1295
    %1343 = vmatprep.subr.mxu0 0.0
    %1344 = vmatpush1.msra.mxu0 0.0
    %1345 = vmatprep.subr.mxu0 0.0
    %1346 = vmatpush1.msra.mxu0 0.0
    %1347 = vmatprep.subr.mxu0 0.0
    %1348 = vmatpush1.msra.mxu0 0.0
    %1349 = vmatprep.subr.mxu0 0.0
    %1350 = vmatpush1.msra.mxu0 0.0
    %1351 = vmatprep.subr.mxu0 0.0
    %1352 = vmatpush1.msra.mxu0 0.0
    %1353 = vmatprep.subr.mxu0 0.0
    %1354 = vmatpush1.msra.mxu0 0.0
    %1355 = vmatprep.subr.mxu0 0.0
    %1356 = vmatpush1.msra.mxu0 0.0
    %1357 = vmatprep.subr.mxu0 0.0
    %1358 = vmatpush1.msra.mxu0 0.0
    %1359 = vmatprep.subr.mxu0 0.0
    %1360 = vmatpush1.msra.mxu0 0.0
    %1361 = vmatprep.subr.mxu0 0.0
    %1362 = vmatpush1.msra.mxu0 0.0
    %1363 = vmatprep.subr.mxu0 0.0
    %1364 = vmatpush1.msra.mxu0 0.0
    %1365 = vmatprep.subr.mxu0 0.0
    %1366 = vmatpush1.msra.mxu0 0.0
    %1367 = vmatprep.subr.mxu0 0.0
    %1368 = vmatpush1.msra.mxu0 0.0
    %1369 = vmatprep.subr.mxu0 0.0
    %1370 = vmatpush1.msra.mxu0 0.0
    %1371 = vmatprep.subr.mxu0 0.0
    %1372 = vmatpush1.msra.mxu0 0.0
    %1373 = vmatprep.subr.mxu0 0.0
    %1374 = vmatpush1.msra.mxu0 0.0
    %1375 = vmatprep.subr.mxu0 0.0
    %1376 = vmatpush1.msra.mxu0 0.0
    %1377 = vmatprep.mubr.f32.mxu0 0.0
    %1378 = vmatmul.mubr.f32.gmra.mrb[0].mxu0 %v1299
    %v1379 = vpop.f32.mrb[0].mxu0
    %v1380 = vadd.f32 0.0, %v1379
    %v1381 = vpop.f32.mrb[0].mxu0
    %v1382 = vadd.f32 0.0, %v1381
    %1383 = vmatprep.mubr.f32.mxu0 0.0
    %1384 = vmatmul.mubr.f32.gmra.mrb[0].mxu0 %v1302
    %v1385 = vpop.f32.mrb[0].mxu0
    %v1386 = vadd.f32 0.0, %v1385
    %v1387 = vpop.f32.mrb[0].mxu0
    %v1388 = vadd.f32 0.0, %v1387
    %1389 = vmatprep.mubr.f32.mxu0 0.0
    %1390 = vmatmul.mubr.f32.gmra.mrb[0].mxu0 %v1305
    %v1391 = vpop.f32.mrb[0].mxu0
    %v1392 = vadd.f32 0.0, %v1391
    %v1393 = vpop.f32.mrb[0].mxu0
    %v1394 = vadd.f32 0.0, %v1393
    %1395 = vmatprep.mubr.f32.mxu0 0.0
    %1396 = vmatmul.mubr.f32.gmra.mrb[0].mxu0 %v1308
    %v1397 = vpop.f32.mrb[0].mxu0
    %v1398 = vadd.f32 0.0, %v1397
    %v1399 = vpop.f32.mrb[0].mxu0
    %v1400 = vadd.f32 0.0, %v1399
    %1401 = vmatprep.mubr.f32.mxu0 0.0
    %1402 = vmatmul.mubr.f32.gmra.mrb[0].mxu0 %v1311
    %v1403 = vpop.f32.mrb[0].mxu0
    %v1404 = vadd.f32 0.0, %v1403
    %v1405 = vpop.f32.mrb[0].mxu0
    %v1406 = vadd.f32 0.0, %v1405
    %1407 = vdwg.mxu0
    %1408 = vmatprep.subr.mxu0 0.0
    %1409 = vmatpush1.msra.mxu0 %v1255
    %1410 = vmatprep.subr.mxu0 0.0
    %1411 = vmatpush1.msra.mxu0 %v1258
    %1412 = vmatprep.subr.mxu0 0.0
    %1413 = vmatpush1.msra.mxu0 %v1261
    %1414 = vmatprep.subr.mxu0 0.0
    %1415 = vmatpush1.msra.mxu0 %v1264
    %1416 = vmatprep.subr.mxu0 0.0
    %1417 = vmatpush1.msra.mxu0 %v1267
    %1418 = vmatprep.subr.mxu0 0.0
    %1419 = vmatpush1.msra.mxu0 %v1270
    %1420 = vmatprep.subr.mxu0 0.0
    %1421 = vmatpush1.msra.mxu0 %v1273
    %1422 = vmatprep.subr.mxu0 0.0
    %1423 = vmatpush1.msra.mxu0 %v1276
    %1424 = vmatprep.subr.mxu0 0.0
    %1425 = vmatpush1.msra.mxu0 %v1279
    %1426 = vmatprep.subr.mxu0 0.0
    %1427 = vmatpush1.msra.mxu0 %v1282
    %1428 = vmatprep.subr.mxu0 0.0
    %1429 = vmatpush1.msra.mxu0 %v1285
    %1430 = vmatprep.subr.mxu0 0.0
    %1431 = vmatpush1.msra.mxu0 %v1288
    %1432 = vmatprep.subr.mxu0 0.0
    %1433 = vmatpush1.msra.mxu0 %v1291
    %1434 = vmatprep.subr.mxu0 0.0
    %1435 = vmatpush1.msra.mxu0 %v1294
    %1436 = vmatprep.subr.mxu0 0.0
    %1437 = vmatpush1.msra.mxu0 %v1297
    %1438 = vmatprep.subr.mxu0 0.0
    %1439 = vmatpush1.msra.mxu0 0.0
    %1440 = vmatprep.subr.mxu0 0.0
    %1441 = vmatpush1.msra.mxu0 0.0
    %1442 = vmatprep.subr.mxu0 0.0
    %1443 = vmatpush1.msra.mxu0 0.0
    %1444 = vmatprep.subr.mxu0 0.0
    %1445 = vmatpush1.msra.mxu0 0.0
    %1446 = vmatprep.subr.mxu0 0.0
    %1447 = vmatpush1.msra.mxu0 0.0
    %1448 = vmatprep.subr.mxu0 0.0
    %1449 = vmatpush1.msra.mxu0 0.0
    %1450 = vmatprep.subr.mxu0 0.0
    %1451 = vmatpush1.msra.mxu0 0.0
    %1452 = vmatprep.subr.mxu0 0.0
    %1453 = vmatpush1.msra.mxu0 0.0
    %1454 = vmatprep.subr.mxu0 0.0
    %1455 = vmatpush1.msra.mxu0 0.0
    %1456 = vmatprep.subr.mxu0 0.0
    %1457 = vmatpush1.msra.mxu0 0.0
    %1458 = vmatprep.subr.mxu0 0.0
    %1459 = vmatpush1.msra.mxu0 0.0
    %1460 = vmatprep.subr.mxu0 0.0
    %1461 = vmatpush1.msra.mxu0 0.0
    %1462 = vmatprep.subr.mxu0 0.0
    %1463 = vmatpush1.msra.mxu0 0.0
    %1464 = vmatprep.subr.mxu0 0.0
    %1465 = vmatpush1.msra.mxu0 0.0
    %1466 = vmatprep.subr.mxu0 0.0
    %1467 = vmatpush1.msra.mxu0 0.0
    %1468 = vmatprep.subr.mxu0 0.0
    %1469 = vmatpush1.msra.mxu0 0.0
    %1470 = vmatprep.subr.mxu0 0.0
    %1471 = vmatpush1.msra.mxu0 0.0
    %1472 = vmatprep.mubr.f32.mxu0 0.0
    %1473 = vmatmul.mubr.f32.gmra.mrb[0].mxu0 %v1299
    %v1474 = vpop.f32.mrb[0].mxu0
    %v1475 = vadd.f32 0.0, %v1474
    %v1476 = vpop.f32.mrb[0].mxu0
    %1477 = vmatprep.mubr.f32.mxu0 0.0
    %1478 = vmatmul.mubr.f32.gmra.mrb[0].mxu0 %v1302
    %v1479 = vpop.f32.mrb[0].mxu0
    %v1480 = vadd.f32 0.0, %v1479
    %v1481 = vpop.f32.mrb[0].mxu0
    %1482 = vmatprep.mubr.f32.mxu0 0.0
    %1483 = vmatmul.mubr.f32.gmra.mrb[0].mxu0 %v1305
    %v1484 = vpop.f32.mrb[0].mxu0
    %v1485 = vadd.f32 0.0, %v1484
    %v1486 = vpop.f32.mrb[0].mxu0
    %1487 = vmatprep.mubr.f32.mxu0 0.0
    %1488 = vmatmul.mubr.f32.gmra.mrb[0].mxu0 %v1308
    %v1489 = vpop.f32.mrb[0].mxu0
    %v1490 = vadd.f32 0.0, %v1489
    %v1491 = vpop.f32.mrb[0].mxu0
    %1492 = vmatprep.mubr.f32.mxu0 0.0
    %1493 = vmatmul.mubr.f32.gmra.mrb[0].mxu0 %v1311
    %v1494 = vpop.f32.mrb[0].mxu0
    %v1495 = vadd.f32 0.0, %v1494
    %v1496 = vpop.f32.mrb[0].mxu0
    %1497 = vdwg.mxu0
    %v1498 = vadd.f32 %v1126, %v1380
    %v1499 = vadd.f32 %v1127, %v1382
    %v1500 = vadd.f32 %v1128, %v1475
    %v1501 = vadd.f32 %v1129, %v1386
    %v1502 = vadd.f32 %v1130, %v1388
    %v1503 = vadd.f32 %v1131, %v1480
    %v1504 = vadd.f32 %v1132, %v1392
    %v1505 = vadd.f32 %v1133, %v1394
    %v1506 = vadd.f32 %v1134, %v1485
    %v1507 = vadd.f32 %v1135, %v1398
    %v1508 = vadd.f32 %v1136, %v1400
    %v1509 = vadd.f32 %v1137, %v1490
    %v1510 = vadd.f32 %v1138, %v1404
    %v1511 = vadd.f32 %v1139, %v1406
    %v1512 = vadd.f32 %v1140, %v1495
    %s1513 = scalar_lea.vmem %s1, 160
    %v1514 = vld [vmem:[%s1513] sm:$0xff]
    %v1515 = vld [vmem:[%s1513 + $0x8] sm:$0xff]
    %v1516 = vld [vmem:[%s1513 + $0x10] sm:$0xff]
    %v1517 = vld [vmem:[%s1513 + $0x18] sm:$0xff]
    %v1518 = vld [vmem:[%s1513 + $0x20] sm:$0xf]
    %v1520 = vsel %vm60, %v1514, 0
    %v1523 = vsel %vm60, %v1515, 0
    %v1526 = vsel %vm60, %v1516, 0
    %v1529 = vsel %vm60, %v1517, 0
    %v1532 = vsel %vm60, %v1518, 0
    %1534 = vmatprep.subr.mxu0 0.0
    %1535 = vmatpush1.msra.mxu0 %v45
    %1536 = vmatprep.subr.mxu0 0.0
    %1537 = vmatpush1.msra.mxu0 %v46
    %1538 = vmatprep.subr.mxu0 0.0
    %1539 = vmatpush1.msra.mxu0 %v47
    %1540 = vmatprep.subr.mxu0 0.0
    %1541 = vmatpush1.msra.mxu0 %v48
    %1542 = vmatprep.subr.mxu0 0.0
    %1543 = vmatpush1.msra.mxu0 %v49
    %1544 = vmatprep.subr.mxu0 0.0
    %1545 = vmatpush1.msra.mxu0 %v50
    %1546 = vmatprep.subr.mxu0 0.0
    %1547 = vmatpush1.msra.mxu0 %v51
    %1548 = vmatprep.subr.mxu0 0.0
    %1549 = vmatpush1.msra.mxu0 %v52
    %1550 = vmatprep.subr.mxu0 0.0
    %1551 = vmatpush1.msra.mxu0 %v53
    %1552 = vmatprep.subr.mxu0 0.0
    %1553 = vmatpush1.msra.mxu0 %v54
    %1554 = vmatprep.subr.mxu0 0.0
    %1555 = vmatpush1.msra.mxu0 0.0
    %1556 = vmatprep.subr.mxu0 0.0
    %1557 = vmatpush1.msra.mxu0 0.0
    %1558 = vmatprep.subr.mxu0 0.0
    %1559 = vmatpush1.msra.mxu0 0.0
    %1560 = vmatprep.subr.mxu0 0.0
    %1561 = vmatpush1.msra.mxu0 0.0
    %1562 = vmatprep.subr.mxu0 0.0
    %1563 = vmatpush1.msra.mxu0 0.0
    %1564 = vmatprep.subr.mxu0 0.0
    %1565 = vmatpush1.msra.mxu0 0.0
    %1566 = vmatprep.subr.mxu0 0.0
    %1567 = vmatpush1.msra.mxu0 0.0
    %1568 = vmatprep.subr.mxu0 0.0
    %1569 = vmatpush1.msra.mxu0 0.0
    %1570 = vmatprep.subr.mxu0 0.0
    %1571 = vmatpush1.msra.mxu0 0.0
    %1572 = vmatprep.subr.mxu0 0.0
    %1573 = vmatpush1.msra.mxu0 0.0
    %1574 = vmatprep.subr.mxu0 0.0
    %1575 = vmatpush1.msra.mxu0 0.0
    %1576 = vmatprep.subr.mxu0 0.0
    %1577 = vmatpush1.msra.mxu0 0.0
    %1578 = vmatprep.subr.mxu0 0.0
    %1579 = vmatpush1.msra.mxu0 0.0
    %1580 = vmatprep.subr.mxu0 0.0
    %1581 = vmatpush1.msra.mxu0 0.0
    %1582 = vmatprep.subr.mxu0 0.0
    %1583 = vmatpush1.msra.mxu0 0.0
    %1584 = vmatprep.subr.mxu0 0.0
    %1585 = vmatpush1.msra.mxu0 0.0
    %1586 = vmatprep.subr.mxu0 0.0
    %1587 = vmatpush1.msra.mxu0 0.0
    %1588 = vmatprep.subr.mxu0 0.0
    %1589 = vmatpush1.msra.mxu0 0.0
    %1590 = vmatprep.subr.mxu0 0.0
    %1591 = vmatpush1.msra.mxu0 0.0
    %1592 = vmatprep.subr.mxu0 0.0
    %1593 = vmatpush1.msra.mxu0 0.0
    %1594 = vmatprep.subr.mxu0 0.0
    %1595 = vmatpush1.msra.mxu0 0.0
    %1596 = vmatprep.subr.mxu0 0.0
    %1597 = vmatpush1.msra.mxu0 0.0
    %1598 = vmatprep.mubr.f32.mxu0 0.0
    %1599 = vmatmul.mubr.f32.gmra.mrb[0].mxu0 %v1520
    %v1600 = vpop.f32.mrb[0].mxu0
    %v1601 = vadd.f32 0.0, %v1600
    %v1602 = vpop.f32.mrb[0].mxu0
    %1603 = vmatprep.mubr.f32.mxu0 0.0
    %1604 = vmatmul.mubr.f32.gmra.mrb[0].mxu0 %v1523
    %v1605 = vpop.f32.mrb[0].mxu0
    %v1606 = vadd.f32 0.0, %v1605
    %v1607 = vpop.f32.mrb[0].mxu0
    %1608 = vmatprep.mubr.f32.mxu0 0.0
    %1609 = vmatmul.mubr.f32.gmra.mrb[0].mxu0 %v1526
    %v1610 = vpop.f32.mrb[0].mxu0
    %v1611 = vadd.f32 0.0, %v1610
    %v1612 = vpop.f32.mrb[0].mxu0
    %1613 = vmatprep.mubr.f32.mxu0 0.0
    %1614 = vmatmul.mubr.f32.gmra.mrb[0].mxu0 %v1529
    %v1615 = vpop.f32.mrb[0].mxu0
    %v1616 = vadd.f32 0.0, %v1615
    %v1617 = vpop.f32.mrb[0].mxu0
    %1618 = vmatprep.mubr.f32.mxu0 0.0
    %1619 = vmatmul.mubr.f32.gmra.mrb[0].mxu0 %v1532
    %v1620 = vpop.f32.mrb[0].mxu0
    %v1621 = vadd.f32 0.0, %v1620
    %v1622 = vpop.f32.mrb[0].mxu0
    %1623 = vdwg.mxu0
    %s1624 = scalar_lea.vmem %s2, 1440
    %v1625 = vld [vmem:[%s1624] sm:$0xff]
    %v1626 = vld [vmem:[%s1624 + $0x8] sm:$0xff]
    %v1627 = vld [vmem:[%s1624 + $0x10] sm:$0xff]
    %v1628 = vld [vmem:[%s1624 + $0x18] sm:$0xff]
    %v1629 = vld [vmem:[%s1624 + $0x20] sm:$0xff]
    %v1630 = vld [vmem:[%s1624 + $0x28] sm:$0xff]
    %v1631 = vld [vmem:[%s1624 + $0x30] sm:$0xff]
    %v1632 = vld [vmem:[%s1624 + $0x38] sm:$0xff]
    %v1633 = vld [vmem:[%s1624 + $0x40] sm:$0xff]
    %v1634 = vld [vmem:[%s1624 + $0x48] sm:$0xff]
    %v1635 = vld [vmem:[%s1624 + $0x50] sm:$0xff]
    %v1636 = vld [vmem:[%s1624 + $0x58] sm:$0xff]
    %v1637 = vld [vmem:[%s1624 + $0x60] sm:$0xff]
    %v1638 = vld [vmem:[%s1624 + $0x68] sm:$0xff]
    %v1639 = vld [vmem:[%s1624 + $0x70] sm:$0xff]
    %v1640 = vld [vmem:[%s1624 + $0x78] sm:$0xff]
    %v1641 = vld [vmem:[%s1624 + $0x80] sm:$0xff]
    %v1642 = vld [vmem:[%s1624 + $0x88] sm:$0xff]
    %v1643 = vld [vmem:[%s1624 + $0x90] sm:$0xff]
    %v1644 = vld [vmem:[%s1624 + $0x98] sm:$0xff]
    %v1645 = vld [vmem:[%s1624 + $0xa0] sm:$0xff]
    %v1646 = vld [vmem:[%s1624 + $0xa8] sm:$0xff]
    %v1647 = vld [vmem:[%s1624 + $0xb0] sm:$0xff]
    %v1648 = vld [vmem:[%s1624 + $0xb8] sm:$0xff]
    %v1649 = vld [vmem:[%s1624 + $0xc0] sm:$0xff]
    %v1650 = vld [vmem:[%s1624 + $0xc8] sm:$0xff]
    %v1651 = vld [vmem:[%s1624 + $0xd0] sm:$0xff]
    %v1652 = vld [vmem:[%s1624 + $0xd8] sm:$0xff]
    %v1653 = vld [vmem:[%s1624 + $0xe0] sm:$0xff]
    %v1654 = vld [vmem:[%s1624 + $0xe8] sm:$0xff]
    %v1655 = vld [vmem:[%s1624 + $0xf0] sm:$0xff]
    %v1656 = vld [vmem:[%s1624 + $0xf8] sm:$0xff]
    %v1657 = vld [vmem:[%s1624 + $0x100] sm:$0xff]
    %v1658 = vld [vmem:[%s1624 + $0x108] sm:$0xff]
    %v1659 = vld [vmem:[%s1624 + $0x110] sm:$0xff]
    %v1660 = vld [vmem:[%s1624 + $0x118] sm:$0xff]
    %v1661 = vld [vmem:[%s1624 + $0x120] sm:$0xff]
    %v1662 = vld [vmem:[%s1624 + $0x128] sm:$0xff]
    %v1663 = vld [vmem:[%s1624 + $0x130] sm:$0xff]
    %v1664 = vld [vmem:[%s1624 + $0x138] sm:$0xff]
    %v1665 = vld [vmem:[%s1624 + $0x140] sm:$0xff]
    %v1666 = vld [vmem:[%s1624 + $0x148] sm:$0xff]
    %v1667 = vld [vmem:[%s1624 + $0x150] sm:$0xff]
    %v1668 = vld [vmem:[%s1624 + $0x158] sm:$0xff]
    %v1669 = vld [vmem:[%s1624 + $0x160] sm:$0xff]
    %v1671 = vsel %vm368, %v1601, 0
    %v1674 = vsel %vm368, %v1606, 0
    %v1677 = vsel %vm368, %v1611, 0
    %v1680 = vsel %vm368, %v1616, 0
    %v1683 = vsel %vm368, %v1621, 0
    %1685 = vmatprep.subr.mxu0 %v1626
    %1686 = vmatpush1.msra.mxu0 %v1625
    %1687 = vmatprep.subr.mxu0 %v1629
    %1688 = vmatpush1.msra.mxu0 %v1628
    %1689 = vmatprep.subr.mxu0 %v1632
    %1690 = vmatpush1.msra.mxu0 %v1631
    %1691 = vmatprep.subr.mxu0 %v1635
    %1692 = vmatpush1.msra.mxu0 %v1634
    %1693 = vmatprep.subr.mxu0 %v1638
    %1694 = vmatpush1.msra.mxu0 %v1637
    %1695 = vmatprep.subr.mxu0 %v1641
    %1696 = vmatpush1.msra.mxu0 %v1640
    %1697 = vmatprep.subr.mxu0 %v1644
    %1698 = vmatpush1.msra.mxu0 %v1643
    %1699 = vmatprep.subr.mxu0 %v1647
    %1700 = vmatpush1.msra.mxu0 %v1646
    %1701 = vmatprep.subr.mxu0 %v1650
    %1702 = vmatpush1.msra.mxu0 %v1649
    %1703 = vmatprep.subr.mxu0 %v1653
    %1704 = vmatpush1.msra.mxu0 %v1652
    %1705 = vmatprep.subr.mxu0 %v1656
    %1706 = vmatpush1.msra.mxu0 %v1655
    %1707 = vmatprep.subr.mxu0 %v1659
    %1708 = vmatpush1.msra.mxu0 %v1658
    %1709 = vmatprep.subr.mxu0 %v1662
    %1710 = vmatpush1.msra.mxu0 %v1661
    %1711 = vmatprep.subr.mxu0 %v1665
    %1712 = vmatpush1.msra.mxu0 %v1664
    %1713 = vmatprep.subr.mxu0 %v1668
    %1714 = vmatpush1.msra.mxu0 %v1667
    %1715 = vmatprep.subr.mxu0 0.0
    %1716 = vmatpush1.msra.mxu0 0.0
    %1717 = vmatprep.subr.mxu0 0.0
    %1718 = vmatpush1.msra.mxu0 0.0
    %1719 = vmatprep.subr.mxu0 0.0
    %1720 = vmatpush1.msra.mxu0 0.0
    %1721 = vmatprep.subr.mxu0 0.0
    %1722 = vmatpush1.msra.mxu0 0.0
    %1723 = vmatprep.subr.mxu0 0.0
    %1724 = vmatpush1.msra.mxu0 0.0
    %1725 = vmatprep.subr.mxu0 0.0
    %1726 = vmatpush1.msra.mxu0 0.0
    %1727 = vmatprep.subr.mxu0 0.0
    %1728 = vmatpush1.msra.mxu0 0.0
    %1729 = vmatprep.subr.mxu0 0.0
    %1730 = vmatpush1.msra.mxu0 0.0
    %1731 = vmatprep.subr.mxu0 0.0
    %1732 = vmatpush1.msra.mxu0 0.0
    %1733 = vmatprep.subr.mxu0 0.0
    %1734 = vmatpush1.msra.mxu0 0.0
    %1735 = vmatprep.subr.mxu0 0.0
    %1736 = vmatpush1.msra.mxu0 0.0
    %1737 = vmatprep.subr.mxu0 0.0
    %1738 = vmatpush1.msra.mxu0 0.0
    %1739 = vmatprep.subr.mxu0 0.0
    %1740 = vmatpush1.msra.mxu0 0.0
    %1741 = vmatprep.subr.mxu0 0.0
    %1742 = vmatpush1.msra.mxu0 0.0
    %1743 = vmatprep.subr.mxu0 0.0
    %1744 = vmatpush1.msra.mxu0 0.0
    %1745 = vmatprep.subr.mxu0 0.0
    %1746 = vmatpush1.msra.mxu0 0.0
    %1747 = vmatprep.subr.mxu0 0.0
    %1748 = vmatpush1.msra.mxu0 0.0
    %1749 = vmatprep.mubr.f32.mxu0 0.0
    %1750 = vmatmul.mubr.f32.gmra.mrb[0].mxu0 %v1671
    %v1751 = vpop.f32.mrb[0].mxu0
    %v1752 = vadd.f32 0.0, %v1751
    %v1753 = vpop.f32.mrb[0].mxu0
    %v1754 = vadd.f32 0.0, %v1753
    %1755 = vmatprep.mubr.f32.mxu0 0.0
    %1756 = vmatmul.mubr.f32.gmra.mrb[0].mxu0 %v1674
    %v1757 = vpop.f32.mrb[0].mxu0
    %v1758 = vadd.f32 0.0, %v1757
    %v1759 = vpop.f32.mrb[0].mxu0
    %v1760 = vadd.f32 0.0, %v1759
    %1761 = vmatprep.mubr.f32.mxu0 0.0
    %1762 = vmatmul.mubr.f32.gmra.mrb[0].mxu0 %v1677
    %v1763 = vpop.f32.mrb[0].mxu0
    %v1764 = vadd.f32 0.0, %v1763
    %v1765 = vpop.f32.mrb[0].mxu0
    %v1766 = vadd.f32 0.0, %v1765
    %1767 = vmatprep.mubr.f32.mxu0 0.0
    %1768 = vmatmul.mubr.f32.gmra.mrb[0].mxu0 %v1680
    %v1769 = vpop.f32.mrb[0].mxu0
    %v1770 = vadd.f32 0.0, %v1769
    %v1771 = vpop.f32.mrb[0].mxu0
    %v1772 = vadd.f32 0.0, %v1771
    %1773 = vmatprep.mubr.f32.mxu0 0.0
    %1774 = vmatmul.mubr.f32.gmra.mrb[0].mxu0 %v1683
    %v1775 = vpop.f32.mrb[0].mxu0
    %v1776 = vadd.f32 0.0, %v1775
    %v1777 = vpop.f32.mrb[0].mxu0
    %v1778 = vadd.f32 0.0, %v1777
    %1779 = vdwg.mxu0
    %1780 = vmatprep.subr.mxu0 0.0
    %1781 = vmatpush1.msra.mxu0 %v1627
    %1782 = vmatprep.subr.mxu0 0.0
    %1783 = vmatpush1.msra.mxu0 %v1630
    %1784 = vmatprep.subr.mxu0 0.0
    %1785 = vmatpush1.msra.mxu0 %v1633
    %1786 = vmatprep.subr.mxu0 0.0
    %1787 = vmatpush1.msra.mxu0 %v1636
    %1788 = vmatprep.subr.mxu0 0.0
    %1789 = vmatpush1.msra.mxu0 %v1639
    %1790 = vmatprep.subr.mxu0 0.0
    %1791 = vmatpush1.msra.mxu0 %v1642
    %1792 = vmatprep.subr.mxu0 0.0
    %1793 = vmatpush1.msra.mxu0 %v1645
    %1794 = vmatprep.subr.mxu0 0.0
    %1795 = vmatpush1.msra.mxu0 %v1648
    %1796 = vmatprep.subr.mxu0 0.0
    %1797 = vmatpush1.msra.mxu0 %v1651
    %1798 = vmatprep.subr.mxu0 0.0
    %1799 = vmatpush1.msra.mxu0 %v1654
    %1800 = vmatprep.subr.mxu0 0.0
    %1801 = vmatpush1.msra.mxu0 %v1657
    %1802 = vmatprep.subr.mxu0 0.0
    %1803 = vmatpush1.msra.mxu0 %v1660
    %1804 = vmatprep.subr.mxu0 0.0
    %1805 = vmatpush1.msra.mxu0 %v1663
    %1806 = vmatprep.subr.mxu0 0.0
    %1807 = vmatpush1.msra.mxu0 %v1666
    %1808 = vmatprep.subr.mxu0 0.0
    %1809 = vmatpush1.msra.mxu0 %v1669
    %1810 = vmatprep.subr.mxu0 0.0
    %1811 = vmatpush1.msra.mxu0 0.0
    %1812 = vmatprep.subr.mxu0 0.0
    %1813 = vmatpush1.msra.mxu0 0.0
    %1814 = vmatprep.subr.mxu0 0.0
    %1815 = vmatpush1.msra.mxu0 0.0
    %1816 = vmatprep.subr.mxu0 0.0
    %1817 = vmatpush1.msra.mxu0 0.0
    %1818 = vmatprep.subr.mxu0 0.0
    %1819 = vmatpush1.msra.mxu0 0.0
    %1820 = vmatprep.subr.mxu0 0.0
    %1821 = vmatpush1.msra.mxu0 0.0
    %1822 = vmatprep.subr.mxu0 0.0
    %1823 = vmatpush1.msra.mxu0 0.0
    %1824 = vmatprep.subr.mxu0 0.0
    %1825 = vmatpush1.msra.mxu0 0.0
    %1826 = vmatprep.subr.mxu0 0.0
    %1827 = vmatpush1.msra.mxu0 0.0
    %1828 = vmatprep.subr.mxu0 0.0
    %1829 = vmatpush1.msra.mxu0 0.0
    %1830 = vmatprep.subr.mxu0 0.0
    %1831 = vmatpush1.msra.mxu0 0.0
    %1832 = vmatprep.subr.mxu0 0.0
    %1833 = vmatpush1.msra.mxu0 0.0
    %1834 = vmatprep.subr.mxu0 0.0
    %1835 = vmatpush1.msra.mxu0 0.0
    %1836 = vmatprep.subr.mxu0 0.0
    %1837 = vmatpush1.msra.mxu0 0.0
    %1838 = vmatprep.subr.mxu0 0.0
    %1839 = vmatpush1.msra.mxu0 0.0
    %1840 = vmatprep.subr.mxu0 0.0
    %1841 = vmatpush1.msra.mxu0 0.0
    %1842 = vmatprep.subr.mxu0 0.0
    %1843 = vmatpush1.msra.mxu0 0.0
    %1844 = vmatprep.mubr.f32.mxu0 0.0
    %1845 = vmatmul.mubr.f32.gmra.mrb[0].mxu0 %v1671
    %v1846 = vpop.f32.mrb[0].mxu0
    %v1847 = vadd.f32 0.0, %v1846
    %v1848 = vpop.f32.mrb[0].mxu0
    %1849 = vmatprep.mubr.f32.mxu0 0.0
    %1850 = vmatmul.mubr.f32.gmra.mrb[0].mxu0 %v1674
    %v1851 = vpop.f32.mrb[0].mxu0
    %v1852 = vadd.f32 0.0, %v1851
    %v1853 = vpop.f32.mrb[0].mxu0
    %1854 = vmatprep.mubr.f32.mxu0 0.0
    %1855 = vmatmul.mubr.f32.gmra.mrb[0].mxu0 %v1677
    %v1856 = vpop.f32.mrb[0].mxu0
    %v1857 = vadd.f32 0.0, %v1856
    %v1858 = vpop.f32.mrb[0].mxu0
    %1859 = vmatprep.mubr.f32.mxu0 0.0
    %1860 = vmatmul.mubr.f32.gmra.mrb[0].mxu0 %v1680
    %v1861 = vpop.f32.mrb[0].mxu0
    %v1862 = vadd.f32 0.0, %v1861
    %v1863 = vpop.f32.mrb[0].mxu0
    %1864 = vmatprep.mubr.f32.mxu0 0.0
    %1865 = vmatmul.mubr.f32.gmra.mrb[0].mxu0 %v1683
    %v1866 = vpop.f32.mrb[0].mxu0
    %v1867 = vadd.f32 0.0, %v1866
    %v1868 = vpop.f32.mrb[0].mxu0
    %1869 = vdwg.mxu0
    %v1870 = vadd.f32 %v1498, %v1752
    %v1871 = vadd.f32 %v1499, %v1754
    %v1872 = vadd.f32 %v1500, %v1847
    %v1873 = vadd.f32 %v1501, %v1758
    %v1874 = vadd.f32 %v1502, %v1760
    %v1875 = vadd.f32 %v1503, %v1852
    %v1876 = vadd.f32 %v1504, %v1764
    %v1877 = vadd.f32 %v1505, %v1766
    %v1878 = vadd.f32 %v1506, %v1857
    %v1879 = vadd.f32 %v1507, %v1770
    %v1880 = vadd.f32 %v1508, %v1772
    %v1881 = vadd.f32 %v1509, %v1862
    %v1882 = vadd.f32 %v1510, %v1776
    %v1883 = vadd.f32 %v1511, %v1778
    %v1884 = vadd.f32 %v1512, %v1867
    %v1885 = vld [vmem:[%s3] sm:$0x7]
    %v1887 = vlaneseq
    %v1888 = vshrl.u32 %v1887, 7
    %v1889 = vsub.s32 0, %v1888
    %v1890 = vrot.slane %v1885, %v1889
    %v1891 = vlaneseq
    %v1892 = vshrl.u32 %v1891, 7
    %v1893 = vsub.s32 1, %v1892
    %v1894 = vrot.slane %v1885, %v1893
    %v1895 = vlaneseq
    %v1896 = vshrl.u32 %v1895, 7
    %v1897 = vsub.s32 2, %v1896
    %v1898 = vrot.slane %v1885, %v1897
    %v1902 = vadd.f32 %v1870, %v1890
    %v1903 = vadd.f32 %v1871, %v1894
    %v1904 = vadd.f32 %v1872, %v1898
    %v1905 = vadd.f32 %v1873, %v1890
    %v1906 = vadd.f32 %v1874, %v1894
    %v1907 = vadd.f32 %v1875, %v1898
    %v1908 = vadd.f32 %v1876, %v1890
    %v1909 = vadd.f32 %v1877, %v1894
    %v1910 = vadd.f32 %v1878, %v1898
    %v1911 = vadd.f32 %v1879, %v1890
    %v1912 = vadd.f32 %v1880, %v1894
    %v1913 = vadd.f32 %v1881, %v1898
    %v1914 = vadd.f32 %v1882, %v1890
    %v1915 = vadd.f32 %v1883, %v1894
    %v1916 = vadd.f32 %v1884, %v1898
    %v1917 = vmax.f32 %v1902, 0.0
    %v1918 = vmax.f32 %v1903, 0.0
    %v1919 = vmax.f32 %v1904, 0.0
    %v1920 = vmax.f32 %v1905, 0.0
    %v1921 = vmax.f32 %v1906, 0.0
    %v1922 = vmax.f32 %v1907, 0.0
    %v1923 = vmax.f32 %v1908, 0.0
    %v1924 = vmax.f32 %v1909, 0.0
    %v1925 = vmax.f32 %v1910, 0.0
    %v1926 = vmax.f32 %v1911, 0.0
    %v1927 = vmax.f32 %v1912, 0.0
    %v1928 = vmax.f32 %v1913, 0.0
    %v1929 = vmax.f32 %v1914, 0.0
    %v1930 = vmax.f32 %v1915, 0.0
    %v1931 = vmax.f32 %v1916, 0.0
    %v1932 = vld [vmem:[%s4] sm:$0xff]
    %v1933 = vld [vmem:[%s4 + $0x8] sm:$0x3f]
    %vm1934 = vcmask 293888
    %v1936 = vsel %vm1934, %v1932, 0
    %v1939 = vsel %vm1934, %v1933, 0
    %vm1941 = vcmask 1043456
    %v1943 = vsel %vm1941, %v1929, 0
    %v1946 = vsel %vm1941, %v1930, 0
    %v1949 = vsel %vm1941, %v1931, 0
    %1951 = vmatprep.subr.mxu0 %v1918
    %1952 = vmatpush1.msra.mxu0 %v1917
    %1953 = vmatprep.subr.mxu0 %v1921
    %1954 = vmatpush1.msra.mxu0 %v1920
    %1955 = vmatprep.subr.mxu0 %v1924
    %1956 = vmatpush1.msra.mxu0 %v1923
    %1957 = vmatprep.subr.mxu0 %v1927
    %1958 = vmatpush1.msra.mxu0 %v1926
    %1959 = vmatprep.subr.mxu0 %v1946
    %1960 = vmatpush1.msra.mxu0 %v1943
    %1961 = vmatprep.subr.mxu0 0.0
    %1962 = vmatpush1.msra.mxu0 0.0
    %1963 = vmatprep.subr.mxu0 0.0
    %1964 = vmatpush1.msra.mxu0 0.0
    %1965 = vmatprep.subr.mxu0 0.0
    %1966 = vmatpush1.msra.mxu0 0.0
    %1967 = vmatprep.subr.mxu0 0.0
    %1968 = vmatpush1.msra.mxu0 0.0
    %1969 = vmatprep.subr.mxu0 0.0
    %1970 = vmatpush1.msra.mxu0 0.0
    %1971 = vmatprep.subr.mxu0 0.0
    %1972 = vmatpush1.msra.mxu0 0.0
    %1973 = vmatprep.subr.mxu0 0.0
    %1974 = vmatpush1.msra.mxu0 0.0
    %1975 = vmatprep.subr.mxu0 0.0
    %1976 = vmatpush1.msra.mxu0 0.0
    %1977 = vmatprep.subr.mxu0 0.0
    %1978 = vmatpush1.msra.mxu0 0.0
    %1979 = vmatprep.subr.mxu0 0.0
    %1980 = vmatpush1.msra.mxu0 0.0
    %1981 = vmatprep.subr.mxu0 0.0
    %1982 = vmatpush1.msra.mxu0 0.0
    %1983 = vmatprep.subr.mxu0 0.0
    %1984 = vmatpush1.msra.mxu0 0.0
    %1985 = vmatprep.subr.mxu0 0.0
    %1986 = vmatpush1.msra.mxu0 0.0
    %1987 = vmatprep.subr.mxu0 0.0
    %1988 = vmatpush1.msra.mxu0 0.0
    %1989 = vmatprep.subr.mxu0 0.0
    %1990 = vmatpush1.msra.mxu0 0.0
    %1991 = vmatprep.subr.mxu0 0.0
    %1992 = vmatpush1.msra.mxu0 0.0
    %1993 = vmatprep.subr.mxu0 0.0
    %1994 = vmatpush1.msra.mxu0 0.0
    %1995 = vmatprep.subr.mxu0 0.0
    %1996 = vmatpush1.msra.mxu0 0.0
    %1997 = vmatprep.subr.mxu0 0.0
    %1998 = vmatpush1.msra.mxu0 0.0
    %1999 = vmatprep.subr.mxu0 0.0
    %2000 = vmatpush1.msra.mxu0 0.0
    %2001 = vmatprep.subr.mxu0 0.0
    %2002 = vmatpush1.msra.mxu0 0.0
    %2003 = vmatprep.subr.mxu0 0.0
    %2004 = vmatpush1.msra.mxu0 0.0
    %2005 = vmatprep.subr.mxu0 0.0
    %2006 = vmatpush1.msra.mxu0 0.0
    %2007 = vmatprep.subr.mxu0 0.0
    %2008 = vmatpush1.msra.mxu0 0.0
    %2009 = vmatprep.subr.mxu0 0.0
    %2010 = vmatpush1.msra.mxu0 0.0
    %2011 = vmatprep.subr.mxu0 0.0
    %2012 = vmatpush1.msra.mxu0 0.0
    %2013 = vmatprep.subr.mxu0 0.0
    %2014 = vmatpush1.msra.mxu0 0.0
    %2015 = vmatprep.mubr.f32.mxu0 0.0
    %2016 = vmatmul.mubr.f32.gmra.mrb[0].mxu0 %v1936
    %v2017 = vpop.f32.mrb[0].mxu0
    %v2018 = vadd.f32 0.0, %v2017
    %v2019 = vpop.f32.mrb[0].mxu0
    %v2020 = vadd.f32 0.0, %v2019
    %2021 = vmatprep.mubr.f32.mxu0 0.0
    %2022 = vmatmul.mubr.f32.gmra.mrb[0].mxu0 %v1939
    %v2023 = vpop.f32.mrb[0].mxu0
    %v2024 = vadd.f32 0.0, %v2023
    %v2025 = vpop.f32.mrb[0].mxu0
    %v2026 = vadd.f32 0.0, %v2025
    %2027 = vdwg.mxu0
    %2028 = vmatprep.subr.mxu0 0.0
    %2029 = vmatpush1.msra.mxu0 %v1919
    %2030 = vmatprep.subr.mxu0 0.0
    %2031 = vmatpush1.msra.mxu0 %v1922
    %2032 = vmatprep.subr.mxu0 0.0
    %2033 = vmatpush1.msra.mxu0 %v1925
    %2034 = vmatprep.subr.mxu0 0.0
    %2035 = vmatpush1.msra.mxu0 %v1928
    %2036 = vmatprep.subr.mxu0 0.0
    %2037 = vmatpush1.msra.mxu0 %v1949
    %2038 = vmatprep.subr.mxu0 0.0
    %2039 = vmatpush1.msra.mxu0 0.0
    %2040 = vmatprep.subr.mxu0 0.0
    %2041 = vmatpush1.msra.mxu0 0.0
    %2042 = vmatprep.subr.mxu0 0.0
    %2043 = vmatpush1.msra.mxu0 0.0
    %2044 = vmatprep.subr.mxu0 0.0
    %2045 = vmatpush1.msra.mxu0 0.0
    %2046 = vmatprep.subr.mxu0 0.0
    %2047 = vmatpush1.msra.mxu0 0.0
    %2048 = vmatprep.subr.mxu0 0.0
    %2049 = vmatpush1.msra.mxu0 0.0
    %2050 = vmatprep.subr.mxu0 0.0
    %2051 = vmatpush1.msra.mxu0 0.0
    %2052 = vmatprep.subr.mxu0 0.0
    %2053 = vmatpush1.msra.mxu0 0.0
    %2054 = vmatprep.subr.mxu0 0.0
    %2055 = vmatpush1.msra.mxu0 0.0
    %2056 = vmatprep.subr.mxu0 0.0
    %2057 = vmatpush1.msra.mxu0 0.0
    %2058 = vmatprep.subr.mxu0 0.0
    %2059 = vmatpush1.msra.mxu0 0.0
    %2060 = vmatprep.subr.mxu0 0.0
    %2061 = vmatpush1.msra.mxu0 0.0
    %2062 = vmatprep.subr.mxu0 0.0
    %2063 = vmatpush1.msra.mxu0 0.0
    %2064 = vmatprep.subr.mxu0 0.0
    %2065 = vmatpush1.msra.mxu0 0.0
    %2066 = vmatprep.subr.mxu0 0.0
    %2067 = vmatpush1.msra.mxu0 0.0
    %2068 = vmatprep.subr.mxu0 0.0
    %2069 = vmatpush1.msra.mxu0 0.0
    %2070 = vmatprep.subr.mxu0 0.0
    %2071 = vmatpush1.msra.mxu0 0.0
    %2072 = vmatprep.subr.mxu0 0.0
    %2073 = vmatpush1.msra.mxu0 0.0
    %2074 = vmatprep.subr.mxu0 0.0
    %2075 = vmatpush1.msra.mxu0 0.0
    %2076 = vmatprep.subr.mxu0 0.0
    %2077 = vmatpush1.msra.mxu0 0.0
    %2078 = vmatprep.subr.mxu0 0.0
    %2079 = vmatpush1.msra.mxu0 0.0
    %2080 = vmatprep.subr.mxu0 0.0
    %2081 = vmatpush1.msra.mxu0 0.0
    %2082 = vmatprep.subr.mxu0 0.0
    %2083 = vmatpush1.msra.mxu0 0.0
    %2084 = vmatprep.subr.mxu0 0.0
    %2085 = vmatpush1.msra.mxu0 0.0
    %2086 = vmatprep.subr.mxu0 0.0
    %2087 = vmatpush1.msra.mxu0 0.0
    %2088 = vmatprep.subr.mxu0 0.0
    %2089 = vmatpush1.msra.mxu0 0.0
    %2090 = vmatprep.subr.mxu0 0.0
    %2091 = vmatpush1.msra.mxu0 0.0
    %2092 = vmatprep.mubr.f32.mxu0 0.0
    %2093 = vmatmul.mubr.f32.gmra.mrb[0].mxu0 %v1936
    %v2094 = vpop.f32.mrb[0].mxu0
    %v2095 = vadd.f32 0.0, %v2094
    %v2096 = vpop.f32.mrb[0].mxu0
    %2097 = vmatprep.mubr.f32.mxu0 0.0
    %2098 = vmatmul.mubr.f32.gmra.mrb[0].mxu0 %v1939
    %v2099 = vpop.f32.mrb[0].mxu0
    %v2100 = vadd.f32 0.0, %v2099
    %v2101 = vpop.f32.mrb[0].mxu0
    %2102 = vdwg.mxu0
    %v2103 = vld [vmem:[%s5] sm:$0xff]
    %v2104 = vld [vmem:[%s5 + $0x8] sm:$0xff]
    %v2105 = vld [vmem:[%s5 + $0x10] sm:$0xff]
    %v2106 = vld [vmem:[%s5 + $0x18] sm:$0xff]
    %v2107 = vld [vmem:[%s5 + $0x20] sm:$0xff]
    %v2108 = vld [vmem:[%s5 + $0x28] sm:$0xff]
    %v2109 = vld [vmem:[%s5 + $0x30] sm:$0xff]
    %v2110 = vld [vmem:[%s5 + $0x38] sm:$0xff]
    %v2111 = vld [vmem:[%s5 + $0x40] sm:$0xff]
    %v2112 = vld [vmem:[%s5 + $0x48] sm:$0xff]
    %v2113 = vld [vmem:[%s5 + $0x50] sm:$0xff]
    %v2114 = vld [vmem:[%s5 + $0x58] sm:$0xff]
    %v2115 = vld [vmem:[%s5 + $0x60] sm:$0xff]
    %v2116 = vld [vmem:[%s5 + $0x68] sm:$0xff]
    %v2117 = vld [vmem:[%s5 + $0x70] sm:$0xff]
    %v2118 = vld [vmem:[%s5 + $0x78] sm:$0xff]
    %v2119 = vld [vmem:[%s5 + $0x80] sm:$0xff]
    %v2120 = vld [vmem:[%s5 + $0x88] sm:$0xff]
    %v2121 = vld [vmem:[%s5 + $0x90] sm:$0xff]
    %v2122 = vld [vmem:[%s5 + $0x98] sm:$0xff]
    %v2123 = vld [vmem:[%s5 + $0xa0] sm:$0xff]
    %v2124 = vld [vmem:[%s5 + $0xa8] sm:$0xff]
    %v2125 = vld [vmem:[%s5 + $0xb0] sm:$0xff]
    %v2126 = vld [vmem:[%s5 + $0xb8] sm:$0xff]
    %v2127 = vld [vmem:[%s5 + $0xc0] sm:$0xff]
    %v2128 = vld [vmem:[%s5 + $0xc8] sm:$0xff]
    %v2129 = vld [vmem:[%s5 + $0xd0] sm:$0xff]
    %v2130 = vld [vmem:[%s5 + $0xd8] sm:$0xff]
    %v2131 = vld [vmem:[%s5 + $0xe0] sm:$0xff]
    %v2132 = vld [vmem:[%s5 + $0xe8] sm:$0xff]
    %v2133 = vld [vmem:[%s5 + $0xf0] sm:$0xff]
    %v2134 = vld [vmem:[%s5 + $0xf8] sm:$0xff]
    %v2135 = vld [vmem:[%s5 + $0x100] sm:$0xff]
    %v2136 = vld [vmem:[%s5 + $0x108] sm:$0xff]
    %v2137 = vld [vmem:[%s5 + $0x110] sm:$0xff]
    %v2138 = vld [vmem:[%s5 + $0x118] sm:$0xff]
    %v2139 = vld [vmem:[%s5 + $0x120] sm:$0xff]
    %v2140 = vld [vmem:[%s5 + $0x128] sm:$0xff]
    %v2141 = vld [vmem:[%s5 + $0x130] sm:$0xff]
    %v2142 = vld [vmem:[%s5 + $0x138] sm:$0xff]
    %v2143 = vld [vmem:[%s5 + $0x140] sm:$0xff]
    %v2144 = vld [vmem:[%s5 + $0x148] sm:$0xff]
    %v2145 = vld [vmem:[%s5 + $0x150] sm:$0xff]
    %v2146 = vld [vmem:[%s5 + $0x158] sm:$0xff]
    %v2147 = vld [vmem:[%s5 + $0x160] sm:$0xff]
    %v2148 = vld [vmem:[%s5 + $0x168] sm:$0xff]
    %v2149 = vld [vmem:[%s5 + $0x170] sm:$0xff]
    %v2150 = vld [vmem:[%s5 + $0x178] sm:$0xff]
    %v2151 = vld [vmem:[%s5 + $0x180] sm:$0xff]
    %v2152 = vld [vmem:[%s5 + $0x188] sm:$0xff]
    %v2153 = vld [vmem:[%s5 + $0x190] sm:$0xff]
    %v2154 = vld [vmem:[%s5 + $0x198] sm:$0xff]
    %v2155 = vld [vmem:[%s5 + $0x1a0] sm:$0xff]
    %v2156 = vld [vmem:[%s5 + $0x1a8] sm:$0xff]
    %v2157 = vld [vmem:[%s5 + $0x1b0] sm:$0xff]
    %v2158 = vld [vmem:[%s5 + $0x1b8] sm:$0xff]
    %v2159 = vld [vmem:[%s5 + $0x1c0] sm:$0xff]
    %v2160 = vld [vmem:[%s5 + $0x1c8] sm:$0xff]
    %v2161 = vld [vmem:[%s5 + $0x1d0] sm:$0xff]
    %v2162 = vld [vmem:[%s5 + $0x1d8] sm:$0xff]
    %v2163 = vld [vmem:[%s5 + $0x1e0] sm:$0xff]
    %v2164 = vld [vmem:[%s5 + $0x1e8] sm:$0xff]
    %v2165 = vld [vmem:[%s5 + $0x1f0] sm:$0xff]
    %v2166 = vld [vmem:[%s5 + $0x1f8] sm:$0xff]
    %v2167 = vld [vmem:[%s5 + $0x200] sm:$0xff]
    %v2168 = vld [vmem:[%s5 + $0x208] sm:$0xff]
    %v2169 = vld [vmem:[%s5 + $0x210] sm:$0xff]
    %v2170 = vld [vmem:[%s5 + $0x218] sm:$0xff]
    %v2171 = vld [vmem:[%s5 + $0x220] sm:$0xff]
    %v2172 = vld [vmem:[%s5 + $0x228] sm:$0xff]
    %v2173 = vld [vmem:[%s5 + $0x230] sm:$0xff]
    %v2174 = vld [vmem:[%s5 + $0x238] sm:$0xff]
    %s2175 = scalar_lea.vmem %s4, 16
    %v2176 = vld [vmem:[%s2175] sm:$0xff]
    %v2177 = vld [vmem:[%s2175 + $0x8] sm:$0x3f]
    %v2179 = vsel %vm1934, %v2176, 0
    %v2182 = vsel %vm1934, %v2177, 0
    %2184 = vmatprep.subr.mxu0 %v1918
    %2185 = vmatpush1.msra.mxu0 %v1917
    %2186 = vmatprep.subr.mxu0 %v1921
    %2187 = vmatpush1.msra.mxu0 %v1920
    %2188 = vmatprep.subr.mxu0 %v1924
    %2189 = vmatpush1.msra.mxu0 %v1923
    %2190 = vmatprep.subr.mxu0 %v1927
    %2191 = vmatpush1.msra.mxu0 %v1926
    %2192 = vmatprep.subr.mxu0 %v1946
    %2193 = vmatpush1.msra.mxu0 %v1943
    %2194 = vmatprep.subr.mxu0 0.0
    %2195 = vmatpush1.msra.mxu0 0.0
    %2196 = vmatprep.subr.mxu0 0.0
    %2197 = vmatpush1.msra.mxu0 0.0
    %2198 = vmatprep.subr.mxu0 0.0
    %2199 = vmatpush1.msra.mxu0 0.0
    %2200 = vmatprep.subr.mxu0 0.0
    %2201 = vmatpush1.msra.mxu0 0.0
    %2202 = vmatprep.subr.mxu0 0.0
    %2203 = vmatpush1.msra.mxu0 0.0
    %2204 = vmatprep.subr.mxu0 0.0
    %2205 = vmatpush1.msra.mxu0 0.0
    %2206 = vmatprep.subr.mxu0 0.0
    %2207 = vmatpush1.msra.mxu0 0.0
    %2208 = vmatprep.subr.mxu0 0.0
    %2209 = vmatpush1.msra.mxu0 0.0
    %2210 = vmatprep.subr.mxu0 0.0
    %2211 = vmatpush1.msra.mxu0 0.0
    %2212 = vmatprep.subr.mxu0 0.0
    %2213 = vmatpush1.msra.mxu0 0.0
    %2214 = vmatprep.subr.mxu0 0.0
    %2215 = vmatpush1.msra.mxu0 0.0
    %2216 = vmatprep.subr.mxu0 0.0
    %2217 = vmatpush1.msra.mxu0 0.0
    %2218 = vmatprep.subr.mxu0 0.0
    %2219 = vmatpush1.msra.mxu0 0.0
    %2220 = vmatprep.subr.mxu0 0.0
    %2221 = vmatpush1.msra.mxu0 0.0
    %2222 = vmatprep.subr.mxu0 0.0
    %2223 = vmatpush1.msra.mxu0 0.0
    %2224 = vmatprep.subr.mxu0 0.0
    %2225 = vmatpush1.msra.mxu0 0.0
    %2226 = vmatprep.subr.mxu0 0.0
    %2227 = vmatpush1.msra.mxu0 0.0
    %2228 = vmatprep.subr.mxu0 0.0
    %2229 = vmatpush1.msra.mxu0 0.0
    %2230 = vmatprep.subr.mxu0 0.0
    %2231 = vmatpush1.msra.mxu0 0.0
    %2232 = vmatprep.subr.mxu0 0.0
    %2233 = vmatpush1.msra.mxu0 0.0
    %2234 = vmatprep.subr.mxu0 0.0
    %2235 = vmatpush1.msra.mxu0 0.0
    %2236 = vmatprep.subr.mxu0 0.0
    %2237 = vmatpush1.msra.mxu0 0.0
    %2238 = vmatprep.subr.mxu0 0.0
    %2239 = vmatpush1.msra.mxu0 0.0
    %2240 = vmatprep.subr.mxu0 0.0
    %2241 = vmatpush1.msra.mxu0 0.0
    %2242 = vmatprep.subr.mxu0 0.0
    %2243 = vmatpush1.msra.mxu0 0.0
    %2244 = vmatprep.subr.mxu0 0.0
    %2245 = vmatpush1.msra.mxu0 0.0
    %2246 = vmatprep.subr.mxu0 0.0
    %2247 = vmatpush1.msra.mxu0 0.0
    %2248 = vmatprep.mubr.f32.mxu0 0.0
    %2249 = vmatmul.mubr.f32.gmra.mrb[0].mxu0 %v2179
    %v2250 = vpop.f32.mrb[0].mxu0
    %v2251 = vadd.f32 0.0, %v2250
    %v2252 = vpop.f32.mrb[0].mxu0
    %v2253 = vadd.f32 0.0, %v2252
    %2254 = vmatprep.mubr.f32.mxu0 0.0
    %2255 = vmatmul.mubr.f32.gmra.mrb[0].mxu0 %v2182
    %v2256 = vpop.f32.mrb[0].mxu0
    %v2257 = vadd.f32 0.0, %v2256
    %v2258 = vpop.f32.mrb[0].mxu0
    %v2259 = vadd.f32 0.0, %v2258
    %2260 = vdwg.mxu0
    %2261 = vmatprep.subr.mxu0 0.0
    %2262 = vmatpush1.msra.mxu0 %v1919
    %2263 = vmatprep.subr.mxu0 0.0
    %2264 = vmatpush1.msra.mxu0 %v1922
    %2265 = vmatprep.subr.mxu0 0.0
    %2266 = vmatpush1.msra.mxu0 %v1925
    %2267 = vmatprep.subr.mxu0 0.0
    %2268 = vmatpush1.msra.mxu0 %v1928
    %2269 = vmatprep.subr.mxu0 0.0
    %2270 = vmatpush1.msra.mxu0 %v1949
    %2271 = vmatprep.subr.mxu0 0.0
    %2272 = vmatpush1.msra.mxu0 0.0
    %2273 = vmatprep.subr.mxu0 0.0
    %2274 = vmatpush1.msra.mxu0 0.0
    %2275 = vmatprep.subr.mxu0 0.0
    %2276 = vmatpush1.msra.mxu0 0.0
    %2277 = vmatprep.subr.mxu0 0.0
    %2278 = vmatpush1.msra.mxu0 0.0
    %2279 = vmatprep.subr.mxu0 0.0
    %2280 = vmatpush1.msra.mxu0 0.0
    %2281 = vmatprep.subr.mxu0 0.0
    %2282 = vmatpush1.msra.mxu0 0.0
    %2283 = vmatprep.subr.mxu0 0.0
    %2284 = vmatpush1.msra.mxu0 0.0
    %2285 = vmatprep.subr.mxu0 0.0
    %2286 = vmatpush1.msra.mxu0 0.0
    %2287 = vmatprep.subr.mxu0 0.0
    %2288 = vmatpush1.msra.mxu0 0.0
    %2289 = vmatprep.subr.mxu0 0.0
    %2290 = vmatpush1.msra.mxu0 0.0
    %2291 = vmatprep.subr.mxu0 0.0
    %2292 = vmatpush1.msra.mxu0 0.0
    %2293 = vmatprep.subr.mxu0 0.0
    %2294 = vmatpush1.msra.mxu0 0.0
    %2295 = vmatprep.subr.mxu0 0.0
    %2296 = vmatpush1.msra.mxu0 0.0
    %2297 = vmatprep.subr.mxu0 0.0
    %2298 = vmatpush1.msra.mxu0 0.0
    %2299 = vmatprep.subr.mxu0 0.0
    %2300 = vmatpush1.msra.mxu0 0.0
    %2301 = vmatprep.subr.mxu0 0.0
    %2302 = vmatpush1.msra.mxu0 0.0
    %2303 = vmatprep.subr.mxu0 0.0
    %2304 = vmatpush1.msra.mxu0 0.0
    %2305 = vmatprep.subr.mxu0 0.0
    %2306 = vmatpush1.msra.mxu0 0.0
    %2307 = vmatprep.subr.mxu0 0.0
    %2308 = vmatpush1.msra.mxu0 0.0
    %2309 = vmatprep.subr.mxu0 0.0
    %2310 = vmatpush1.msra.mxu0 0.0
    %2311 = vmatprep.subr.mxu0 0.0
    %2312 = vmatpush1.msra.mxu0 0.0
    %2313 = vmatprep.subr.mxu0 0.0
    %2314 = vmatpush1.msra.mxu0 0.0
    %2315 = vmatprep.subr.mxu0 0.0
    %2316 = vmatpush1.msra.mxu0 0.0
    %2317 = vmatprep.subr.mxu0 0.0
    %2318 = vmatpush1.msra.mxu0 0.0
    %2319 = vmatprep.subr.mxu0 0.0
    %2320 = vmatpush1.msra.mxu0 0.0
    %2321 = vmatprep.subr.mxu0 0.0
    %2322 = vmatpush1.msra.mxu0 0.0
    %2323 = vmatprep.subr.mxu0 0.0
    %2324 = vmatpush1.msra.mxu0 0.0
    %2325 = vmatprep.mubr.f32.mxu0 0.0
    %2326 = vmatmul.mubr.f32.gmra.mrb[0].mxu0 %v2179
    %v2327 = vpop.f32.mrb[0].mxu0
    %v2328 = vadd.f32 0.0, %v2327
    %v2329 = vpop.f32.mrb[0].mxu0
    %2330 = vmatprep.mubr.f32.mxu0 0.0
    %2331 = vmatmul.mubr.f32.gmra.mrb[0].mxu0 %v2182
    %v2332 = vpop.f32.mrb[0].mxu0
    %v2333 = vadd.f32 0.0, %v2332
    %v2334 = vpop.f32.mrb[0].mxu0
    %2335 = vdwg.mxu0
    %s2336 = scalar_lea.vmem %s5, 576
    %v2337 = vld [vmem:[%s2336] sm:$0xff]
    %v2338 = vld [vmem:[%s2336 + $0x8] sm:$0xff]
    %v2339 = vld [vmem:[%s2336 + $0x10] sm:$0xff]
    %v2340 = vld [vmem:[%s2336 + $0x18] sm:$0xff]
    %v2341 = vld [vmem:[%s2336 + $0x20] sm:$0xff]
    %v2342 = vld [vmem:[%s2336 + $0x28] sm:$0xff]
    %v2343 = vld [vmem:[%s2336 + $0x30] sm:$0xff]
    %v2344 = vld [vmem:[%s2336 + $0x38] sm:$0xff]
    %v2345 = vld [vmem:[%s2336 + $0x40] sm:$0xff]
    %v2346 = vld [vmem:[%s2336 + $0x48] sm:$0xff]
    %v2347 = vld [vmem:[%s2336 + $0x50] sm:$0xff]
    %v2348 = vld [vmem:[%s2336 + $0x58] sm:$0xff]
    %v2349 = vld [vmem:[%s2336 + $0x60] sm:$0xff]
    %v2350 = vld [vmem:[%s2336 + $0x68] sm:$0xff]
    %v2351 = vld [vmem:[%s2336 + $0x70] sm:$0xff]
    %v2352 = vld [vmem:[%s2336 + $0x78] sm:$0xff]
    %v2353 = vld [vmem:[%s2336 + $0x80] sm:$0xff]
    %v2354 = vld [vmem:[%s2336 + $0x88] sm:$0xff]
    %v2355 = vld [vmem:[%s2336 + $0x90] sm:$0xff]
    %v2356 = vld [vmem:[%s2336 + $0x98] sm:$0xff]
    %v2357 = vld [vmem:[%s2336 + $0xa0] sm:$0xff]
    %v2358 = vld [vmem:[%s2336 + $0xa8] sm:$0xff]
    %v2359 = vld [vmem:[%s2336 + $0xb0] sm:$0xff]
    %v2360 = vld [vmem:[%s2336 + $0xb8] sm:$0xff]
    %v2361 = vld [vmem:[%s2336 + $0xc0] sm:$0xff]
    %v2362 = vld [vmem:[%s2336 + $0xc8] sm:$0xff]
    %v2363 = vld [vmem:[%s2336 + $0xd0] sm:$0xff]
    %v2364 = vld [vmem:[%s2336 + $0xd8] sm:$0xff]
    %v2365 = vld [vmem:[%s2336 + $0xe0] sm:$0xff]
    %v2366 = vld [vmem:[%s2336 + $0xe8] sm:$0xff]
    %v2367 = vld [vmem:[%s2336 + $0xf0] sm:$0xff]
    %v2368 = vld [vmem:[%s2336 + $0xf8] sm:$0xff]
    %v2369 = vld [vmem:[%s2336 + $0x100] sm:$0xff]
    %v2370 = vld [vmem:[%s2336 + $0x108] sm:$0xff]
    %v2371 = vld [vmem:[%s2336 + $0x110] sm:$0xff]
    %v2372 = vld [vmem:[%s2336 + $0x118] sm:$0xff]
    %v2373 = vld [vmem:[%s2336 + $0x120] sm:$0xff]
    %v2374 = vld [vmem:[%s2336 + $0x128] sm:$0xff]
    %v2375 = vld [vmem:[%s2336 + $0x130] sm:$0xff]
    %v2376 = vld [vmem:[%s2336 + $0x138] sm:$0xff]
    %v2377 = vld [vmem:[%s2336 + $0x140] sm:$0xff]
    %v2378 = vld [vmem:[%s2336 + $0x148] sm:$0xff]
    %v2379 = vld [vmem:[%s2336 + $0x150] sm:$0xff]
    %v2380 = vld [vmem:[%s2336 + $0x158] sm:$0xff]
    %v2381 = vld [vmem:[%s2336 + $0x160] sm:$0xff]
    %v2382 = vld [vmem:[%s2336 + $0x168] sm:$0xff]
    %v2383 = vld [vmem:[%s2336 + $0x170] sm:$0xff]
    %v2384 = vld [vmem:[%s2336 + $0x178] sm:$0xff]
    %v2385 = vld [vmem:[%s2336 + $0x180] sm:$0xff]
    %v2386 = vld [vmem:[%s2336 + $0x188] sm:$0xff]
    %v2387 = vld [vmem:[%s2336 + $0x190] sm:$0xff]
    %v2388 = vld [vmem:[%s2336 + $0x198] sm:$0xff]
    %v2389 = vld [vmem:[%s2336 + $0x1a0] sm:$0xff]
    %v2390 = vld [vmem:[%s2336 + $0x1a8] sm:$0xff]
    %v2391 = vld [vmem:[%s2336 + $0x1b0] sm:$0xff]
    %v2392 = vld [vmem:[%s2336 + $0x1b8] sm:$0xff]
    %v2393 = vld [vmem:[%s2336 + $0x1c0] sm:$0xff]
    %v2394 = vld [vmem:[%s2336 + $0x1c8] sm:$0xff]
    %v2395 = vld [vmem:[%s2336 + $0x1d0] sm:$0xff]
    %v2396 = vld [vmem:[%s2336 + $0x1d8] sm:$0xff]
    %v2397 = vld [vmem:[%s2336 + $0x1e0] sm:$0xff]
    %v2398 = vld [vmem:[%s2336 + $0x1e8] sm:$0xff]
    %v2399 = vld [vmem:[%s2336 + $0x1f0] sm:$0xff]
    %v2400 = vld [vmem:[%s2336 + $0x1f8] sm:$0xff]
    %v2401 = vld [vmem:[%s2336 + $0x200] sm:$0xff]
    %v2402 = vld [vmem:[%s2336 + $0x208] sm:$0xff]
    %v2403 = vld [vmem:[%s2336 + $0x210] sm:$0xff]
    %v2404 = vld [vmem:[%s2336 + $0x218] sm:$0xff]
    %v2405 = vld [vmem:[%s2336 + $0x220] sm:$0xff]
    %v2406 = vld [vmem:[%s2336 + $0x228] sm:$0xff]
    %v2407 = vld [vmem:[%s2336 + $0x230] sm:$0xff]
    %v2408 = vld [vmem:[%s2336 + $0x238] sm:$0xff]
    %vm2409 = vcmask 261120
    %v2411 = vsel %vm2409, %v2328, 0
    %v2414 = vsel %vm2409, %v2333, 0
    %2416 = vmatprep.subr.mxu0 %v2338
    %2417 = vmatpush1.msra.mxu0 %v2337
    %2418 = vmatprep.subr.mxu0 %v2340
    %2419 = vmatpush1.msra.mxu0 %v2339
    %2420 = vmatprep.subr.mxu0 %v2342
    %2421 = vmatpush1.msra.mxu0 %v2341
    %2422 = vmatprep.subr.mxu0 %v2344
    %2423 = vmatpush1.msra.mxu0 %v2343
    %2424 = vmatprep.subr.mxu0 %v2346
    %2425 = vmatpush1.msra.mxu0 %v2345
    %2426 = vmatprep.subr.mxu0 %v2348
    %2427 = vmatpush1.msra.mxu0 %v2347
    %2428 = vmatprep.subr.mxu0 %v2350
    %2429 = vmatpush1.msra.mxu0 %v2349
    %2430 = vmatprep.subr.mxu0 %v2352
    %2431 = vmatpush1.msra.mxu0 %v2351
    %2432 = vmatprep.subr.mxu0 %v2354
    %2433 = vmatpush1.msra.mxu0 %v2353
    %2434 = vmatprep.subr.mxu0 %v2356
    %2435 = vmatpush1.msra.mxu0 %v2355
    %2436 = vmatprep.subr.mxu0 %v2358
    %2437 = vmatpush1.msra.mxu0 %v2357
    %2438 = vmatprep.subr.mxu0 %v2360
    %2439 = vmatpush1.msra.mxu0 %v2359
    %2440 = vmatprep.subr.mxu0 %v2362
    %2441 = vmatpush1.msra.mxu0 %v2361
    %2442 = vmatprep.subr.mxu0 %v2364
    %2443 = vmatpush1.msra.mxu0 %v2363
    %2444 = vmatprep.subr.mxu0 %v2366
    %2445 = vmatpush1.msra.mxu0 %v2365
    %2446 = vmatprep.subr.mxu0 %v2368
    %2447 = vmatpush1.msra.mxu0 %v2367
    %2448 = vmatprep.subr.mxu0 %v2370
    %2449 = vmatpush1.msra.mxu0 %v2369
    %2450 = vmatprep.subr.mxu0 %v2372
    %2451 = vmatpush1.msra.mxu0 %v2371
    %2452 = vmatprep.subr.mxu0 %v2374
    %2453 = vmatpush1.msra.mxu0 %v2373
    %2454 = vmatprep.subr.mxu0 %v2376
    %2455 = vmatpush1.msra.mxu0 %v2375
    %2456 = vmatprep.subr.mxu0 %v2378
    %2457 = vmatpush1.msra.mxu0 %v2377
    %2458 = vmatprep.subr.mxu0 %v2380
    %2459 = vmatpush1.msra.mxu0 %v2379
    %2460 = vmatprep.subr.mxu0 %v2382
    %2461 = vmatpush1.msra.mxu0 %v2381
    %2462 = vmatprep.subr.mxu0 %v2384
    %2463 = vmatpush1.msra.mxu0 %v2383
    %2464 = vmatprep.subr.mxu0 %v2386
    %2465 = vmatpush1.msra.mxu0 %v2385
    %2466 = vmatprep.subr.mxu0 %v2388
    %2467 = vmatpush1.msra.mxu0 %v2387
    %2468 = vmatprep.subr.mxu0 %v2390
    %2469 = vmatpush1.msra.mxu0 %v2389
    %2470 = vmatprep.subr.mxu0 %v2392
    %2471 = vmatpush1.msra.mxu0 %v2391
    %2472 = vmatprep.subr.mxu0 %v2394
    %2473 = vmatpush1.msra.mxu0 %v2393
    %2474 = vmatprep.subr.mxu0 %v2396
    %2475 = vmatpush1.msra.mxu0 %v2395
    %2476 = vmatprep.subr.mxu0 %v2398
    %2477 = vmatpush1.msra.mxu0 %v2397
    %2478 = vmatprep.subr.mxu0 %v2400
    %2479 = vmatpush1.msra.mxu0 %v2399
    %2480 = vmatprep.mubr.f32.mxu0 %v2253
    %2481 = vmatmul.mubr.f32.gmra.mrb[0].mxu0 %v2251
    %v2482 = vpop.f32.mrb[0].mxu0
    %v2483 = vadd.f32 0.0, %v2482
    %v2484 = vpop.f32.mrb[0].mxu0
    %v2485 = vadd.f32 0.0, %v2484
    %2486 = vmatprep.mubr.f32.mxu0 %v2259
    %2487 = vmatmul.mubr.f32.gmra.mrb[0].mxu0 %v2257
    %v2488 = vpop.f32.mrb[0].mxu0
    %v2489 = vadd.f32 0.0, %v2488
    %v2490 = vpop.f32.mrb[0].mxu0
    %v2491 = vadd.f32 0.0, %v2490
    %2492 = vdwg.mxu0
    %2493 = vmatprep.subr.mxu0 %v2402
    %2494 = vmatpush1.msra.mxu0 %v2401
    %2495 = vmatprep.subr.mxu0 %v2404
    %2496 = vmatpush1.msra.mxu0 %v2403
    %2497 = vmatprep.subr.mxu0 %v2406
    %2498 = vmatpush1.msra.mxu0 %v2405
    %2499 = vmatprep.subr.mxu0 %v2408
    %2500 = vmatpush1.msra.mxu0 %v2407
    %2501 = vmatprep.subr.mxu0 0.0
    %2502 = vmatpush1.msra.mxu0 0.0
    %2503 = vmatprep.subr.mxu0 0.0
    %2504 = vmatpush1.msra.mxu0 0.0
    %2505 = vmatprep.subr.mxu0 0.0
    %2506 = vmatpush1.msra.mxu0 0.0
    %2507 = vmatprep.subr.mxu0 0.0
    %2508 = vmatpush1.msra.mxu0 0.0
    %2509 = vmatprep.subr.mxu0 0.0
    %2510 = vmatpush1.msra.mxu0 0.0
    %2511 = vmatprep.subr.mxu0 0.0
    %2512 = vmatpush1.msra.mxu0 0.0
    %2513 = vmatprep.subr.mxu0 0.0
    %2514 = vmatpush1.msra.mxu0 0.0
    %2515 = vmatprep.subr.mxu0 0.0
    %2516 = vmatpush1.msra.mxu0 0.0
    %2517 = vmatprep.subr.mxu0 0.0
    %2518 = vmatpush1.msra.mxu0 0.0
    %2519 = vmatprep.subr.mxu0 0.0
    %2520 = vmatpush1.msra.mxu0 0.0
    %2521 = vmatprep.subr.mxu0 0.0
    %2522 = vmatpush1.msra.mxu0 0.0
    %2523 = vmatprep.subr.mxu0 0.0
    %2524 = vmatpush1.msra.mxu0 0.0
    %2525 = vmatprep.subr.mxu0 0.0
    %2526 = vmatpush1.msra.mxu0 0.0
    %2527 = vmatprep.subr.mxu0 0.0
    %2528 = vmatpush1.msra.mxu0 0.0
    %2529 = vmatprep.subr.mxu0 0.0
    %2530 = vmatpush1.msra.mxu0 0.0
    %2531 = vmatprep.subr.mxu0 0.0
    %2532 = vmatpush1.msra.mxu0 0.0
    %2533 = vmatprep.subr.mxu0 0.0
    %2534 = vmatpush1.msra.mxu0 0.0
    %2535 = vmatprep.subr.mxu0 0.0
    %2536 = vmatpush1.msra.mxu0 0.0
    %2537 = vmatprep.subr.mxu0 0.0
    %2538 = vmatpush1.msra.mxu0 0.0
    %2539 = vmatprep.subr.mxu0 0.0
    %2540 = vmatpush1.msra.mxu0 0.0
    %2541 = vmatprep.subr.mxu0 0.0
    %2542 = vmatpush1.msra.mxu0 0.0
    %2543 = vmatprep.subr.mxu0 0.0
    %2544 = vmatpush1.msra.mxu0 0.0
    %2545 = vmatprep.subr.mxu0 0.0
    %2546 = vmatpush1.msra.mxu0 0.0
    %2547 = vmatprep.subr.mxu0 0.0
    %2548 = vmatpush1.msra.mxu0 0.0
    %2549 = vmatprep.subr.mxu0 0.0
    %2550 = vmatpush1.msra.mxu0 0.0
    %2551 = vmatprep.subr.mxu0 0.0
    %2552 = vmatpush1.msra.mxu0 0.0
    %2553 = vmatprep.subr.mxu0 0.0
    %2554 = vmatpush1.msra.mxu0 0.0
    %2555 = vmatprep.subr.mxu0 0.0
    %2556 = vmatpush1.msra.mxu0 0.0
    %2557 = vmatprep.mubr.f32.mxu0 0.0
    %2558 = vmatmul.mubr.f32.gmra.mrb[0].mxu0 %v2411
    %v2559 = vpop.f32.mrb[0].mxu0
    %v2560 = vadd.f32 %v2483, %v2559
    %v2561 = vpop.f32.mrb[0].mxu0
    %v2562 = vadd.f32 %v2485, %v2561
    %2563 = vmatprep.mubr.f32.mxu0 0.0
    %2564 = vmatmul.mubr.f32.gmra.mrb[0].mxu0 %v2414
    %v2565 = vpop.f32.mrb[0].mxu0
    %v2566 = vadd.f32 %v2489, %v2565
    %v2567 = vpop.f32.mrb[0].mxu0
    %v2568 = vadd.f32 %v2491, %v2567
    %2569 = vdwg.mxu0
    %v2571 = vsel %vm2409, %v2095, 0
    %v2574 = vsel %vm2409, %v2100, 0
    %2576 = vmatprep.subr.mxu0 %v2104
    %2577 = vmatpush1.msra.mxu0 %v2103
    %2578 = vmatprep.subr.mxu0 %v2106
    %2579 = vmatpush1.msra.mxu0 %v2105
    %2580 = vmatprep.subr.mxu0 %v2108
    %2581 = vmatpush1.msra.mxu0 %v2107
    %2582 = vmatprep.subr.mxu0 %v2110
    %2583 = vmatpush1.msra.mxu0 %v2109
    %2584 = vmatprep.subr.mxu0 %v2112
    %2585 = vmatpush1.msra.mxu0 %v2111
    %2586 = vmatprep.subr.mxu0 %v2114
    %2587 = vmatpush1.msra.mxu0 %v2113
    %2588 = vmatprep.subr.mxu0 %v2116
    %2589 = vmatpush1.msra.mxu0 %v2115
    %2590 = vmatprep.subr.mxu0 %v2118
    %2591 = vmatpush1.msra.mxu0 %v2117
    %2592 = vmatprep.subr.mxu0 %v2120
    %2593 = vmatpush1.msra.mxu0 %v2119
    %2594 = vmatprep.subr.mxu0 %v2122
    %2595 = vmatpush1.msra.mxu0 %v2121
    %2596 = vmatprep.subr.mxu0 %v2124
    %2597 = vmatpush1.msra.mxu0 %v2123
    %2598 = vmatprep.subr.mxu0 %v2126
    %2599 = vmatpush1.msra.mxu0 %v2125
    %2600 = vmatprep.subr.mxu0 %v2128
    %2601 = vmatpush1.msra.mxu0 %v2127
    %2602 = vmatprep.subr.mxu0 %v2130
    %2603 = vmatpush1.msra.mxu0 %v2129
    %2604 = vmatprep.subr.mxu0 %v2132
    %2605 = vmatpush1.msra.mxu0 %v2131
    %2606 = vmatprep.subr.mxu0 %v2134
    %2607 = vmatpush1.msra.mxu0 %v2133
    %2608 = vmatprep.subr.mxu0 %v2136
    %2609 = vmatpush1.msra.mxu0 %v2135
    %2610 = vmatprep.subr.mxu0 %v2138
    %2611 = vmatpush1.msra.mxu0 %v2137
    %2612 = vmatprep.subr.mxu0 %v2140
    %2613 = vmatpush1.msra.mxu0 %v2139
    %2614 = vmatprep.subr.mxu0 %v2142
    %2615 = vmatpush1.msra.mxu0 %v2141
    %2616 = vmatprep.subr.mxu0 %v2144
    %2617 = vmatpush1.msra.mxu0 %v2143
    %2618 = vmatprep.subr.mxu0 %v2146
    %2619 = vmatpush1.msra.mxu0 %v2145
    %2620 = vmatprep.subr.mxu0 %v2148
    %2621 = vmatpush1.msra.mxu0 %v2147
    %2622 = vmatprep.subr.mxu0 %v2150
    %2623 = vmatpush1.msra.mxu0 %v2149
    %2624 = vmatprep.subr.mxu0 %v2152
    %2625 = vmatpush1.msra.mxu0 %v2151
    %2626 = vmatprep.subr.mxu0 %v2154
    %2627 = vmatpush1.msra.mxu0 %v2153
    %2628 = vmatprep.subr.mxu0 %v2156
    %2629 = vmatpush1.msra.mxu0 %v2155
    %2630 = vmatprep.subr.mxu0 %v2158
    %2631 = vmatpush1.msra.mxu0 %v2157
    %2632 = vmatprep.subr.mxu0 %v2160
    %2633 = vmatpush1.msra.mxu0 %v2159
    %2634 = vmatprep.subr.mxu0 %v2162
    %2635 = vmatpush1.msra.mxu0 %v2161
    %2636 = vmatprep.subr.mxu0 %v2164
    %2637 = vmatpush1.msra.mxu0 %v2163
    %2638 = vmatprep.subr.mxu0 %v2166
    %2639 = vmatpush1.msra.mxu0 %v2165
    %2640 = vmatprep.mubr.f32.mxu0 %v2020
    %2641 = vmatmul.mubr.f32.gmra.mrb[0].mxu0 %v2018
    %v2642 = vpop.f32.mrb[0].mxu0
    %v2643 = vadd.f32 %v2560, %v2642
    %v2644 = vpop.f32.mrb[0].mxu0
    %v2645 = vadd.f32 %v2562, %v2644
    %2646 = vmatprep.mubr.f32.mxu0 %v2026
    %2647 = vmatmul.mubr.f32.gmra.mrb[0].mxu0 %v2024
    %v2648 = vpop.f32.mrb[0].mxu0
    %v2649 = vadd.f32 %v2566, %v2648
    %v2650 = vpop.f32.mrb[0].mxu0
    %v2651 = vadd.f32 %v2568, %v2650
    %2652 = vdwg.mxu0
    %2653 = vmatprep.subr.mxu0 %v2168
    %2654 = vmatpush1.msra.mxu0 %v2167
    %2655 = vmatprep.subr.mxu0 %v2170
    %2656 = vmatpush1.msra.mxu0 %v2169
    %2657 = vmatprep.subr.mxu0 %v2172
    %2658 = vmatpush1.msra.mxu0 %v2171
    %2659 = vmatprep.subr.mxu0 %v2174
    %2660 = vmatpush1.msra.mxu0 %v2173
    %2661 = vmatprep.subr.mxu0 0.0
    %2662 = vmatpush1.msra.mxu0 0.0
    %2663 = vmatprep.subr.mxu0 0.0
    %2664 = vmatpush1.msra.mxu0 0.0
    %2665 = vmatprep.subr.mxu0 0.0
    %2666 = vmatpush1.msra.mxu0 0.0
    %2667 = vmatprep.subr.mxu0 0.0
    %2668 = vmatpush1.msra.mxu0 0.0
    %2669 = vmatprep.subr.mxu0 0.0
    %2670 = vmatpush1.msra.mxu0 0.0
    %2671 = vmatprep.subr.mxu0 0.0
    %2672 = vmatpush1.msra.mxu0 0.0
    %2673 = vmatprep.subr.mxu0 0.0
    %2674 = vmatpush1.msra.mxu0 0.0
    %2675 = vmatprep.subr.mxu0 0.0
    %2676 = vmatpush1.msra.mxu0 0.0
    %2677 = vmatprep.subr.mxu0 0.0
    %2678 = vmatpush1.msra.mxu0 0.0
    %2679 = vmatprep.subr.mxu0 0.0
    %2680 = vmatpush1.msra.mxu0 0.0
    %2681 = vmatprep.subr.mxu0 0.0
    %2682 = vmatpush1.msra.mxu0 0.0
    %2683 = vmatprep.subr.mxu0 0.0
    %2684 = vmatpush1.msra.mxu0 0.0
    %2685 = vmatprep.subr.mxu0 0.0
    %2686 = vmatpush1.msra.mxu0 0.0
    %2687 = vmatprep.subr.mxu0 0.0
    %2688 = vmatpush1.msra.mxu0 0.0
    %2689 = vmatprep.subr.mxu0 0.0
    %2690 = vmatpush1.msra.mxu0 0.0
    %2691 = vmatprep.subr.mxu0 0.0
    %2692 = vmatpush1.msra.mxu0 0.0
    %2693 = vmatprep.subr.mxu0 0.0
    %2694 = vmatpush1.msra.mxu0 0.0
    %2695 = vmatprep.subr.mxu0 0.0
    %2696 = vmatpush1.msra.mxu0 0.0
    %2697 = vmatprep.subr.mxu0 0.0
    %2698 = vmatpush1.msra.mxu0 0.0
    %2699 = vmatprep.subr.mxu0 0.0
    %2700 = vmatpush1.msra.mxu0 0.0
    %2701 = vmatprep.subr.mxu0 0.0
    %2702 = vmatpush1.msra.mxu0 0.0
    %2703 = vmatprep.subr.mxu0 0.0
    %2704 = vmatpush1.msra.mxu0 0.0
    %2705 = vmatprep.subr.mxu0 0.0
    %2706 = vmatpush1.msra.mxu0 0.0
    %2707 = vmatprep.subr.mxu0 0.0
    %2708 = vmatpush1.msra.mxu0 0.0
    %2709 = vmatprep.subr.mxu0 0.0
    %2710 = vmatpush1.msra.mxu0 0.0
    %2711 = vmatprep.subr.mxu0 0.0
    %2712 = vmatpush1.msra.mxu0 0.0
    %2713 = vmatprep.subr.mxu0 0.0
    %2714 = vmatpush1.msra.mxu0 0.0
    %2715 = vmatprep.subr.mxu0 0.0
    %2716 = vmatpush1.msra.mxu0 0.0
    %2717 = vmatprep.mubr.f32.mxu0 0.0
    %2718 = vmatmul.mubr.f32.gmra.mrb[0].mxu0 %v2571
    %v2719 = vpop.f32.mrb[0].mxu0
    %v2720 = vadd.f32 %v2643, %v2719
    %v2721 = vpop.f32.mrb[0].mxu0
    %v2722 = vadd.f32 %v2645, %v2721
    %2723 = vmatprep.mubr.f32.mxu0 0.0
    %2724 = vmatmul.mubr.f32.gmra.mrb[0].mxu0 %v2574
    %v2725 = vpop.f32.mrb[0].mxu0
    %v2726 = vadd.f32 %v2649, %v2725
    %v2727 = vpop.f32.mrb[0].mxu0
    %v2728 = vadd.f32 %v2651, %v2727
    %2729 = vdwg.mxu0
    %s2730 = scalar_lea.vmem %s4, 32
    %v2731 = vld [vmem:[%s2730] sm:$0xff]
    %v2732 = vld [vmem:[%s2730 + $0x8] sm:$0x3f]
    %v2734 = vsel %vm1934, %v2731, 0
    %v2737 = vsel %vm1934, %v2732, 0
    %2739 = vmatprep.subr.mxu0 %v1918
    %2740 = vmatpush1.msra.mxu0 %v1917
    %2741 = vmatprep.subr.mxu0 %v1921
    %2742 = vmatpush1.msra.mxu0 %v1920
    %2743 = vmatprep.subr.mxu0 %v1924
    %2744 = vmatpush1.msra.mxu0 %v1923
    %2745 = vmatprep.subr.mxu0 %v1927
    %2746 = vmatpush1.msra.mxu0 %v1926
    %2747 = vmatprep.subr.mxu0 %v1946
    %2748 = vmatpush1.msra.mxu0 %v1943
    %2749 = vmatprep.subr.mxu0 0.0
    %2750 = vmatpush1.msra.mxu0 0.0
    %2751 = vmatprep.subr.mxu0 0.0
    %2752 = vmatpush1.msra.mxu0 0.0
    %2753 = vmatprep.subr.mxu0 0.0
    %2754 = vmatpush1.msra.mxu0 0.0
    %2755 = vmatprep.subr.mxu0 0.0
    %2756 = vmatpush1.msra.mxu0 0.0
    %2757 = vmatprep.subr.mxu0 0.0
    %2758 = vmatpush1.msra.mxu0 0.0
    %2759 = vmatprep.subr.mxu0 0.0
    %2760 = vmatpush1.msra.mxu0 0.0
    %2761 = vmatprep.subr.mxu0 0.0
    %2762 = vmatpush1.msra.mxu0 0.0
    %2763 = vmatprep.subr.mxu0 0.0
    %2764 = vmatpush1.msra.mxu0 0.0
    %2765 = vmatprep.subr.mxu0 0.0
    %2766 = vmatpush1.msra.mxu0 0.0
    %2767 = vmatprep.subr.mxu0 0.0
    %2768 = vmatpush1.msra.mxu0 0.0
    %2769 = vmatprep.subr.mxu0 0.0
    %2770 = vmatpush1.msra.mxu0 0.0
    %2771 = vmatprep.subr.mxu0 0.0
    %2772 = vmatpush1.msra.mxu0 0.0
    %2773 = vmatprep.subr.mxu0 0.0
    %2774 = vmatpush1.msra.mxu0 0.0
    %2775 = vmatprep.subr.mxu0 0.0
    %2776 = vmatpush1.msra.mxu0 0.0
    %2777 = vmatprep.subr.mxu0 0.0
    %2778 = vmatpush1.msra.mxu0 0.0
    %2779 = vmatprep.subr.mxu0 0.0
    %2780 = vmatpush1.msra.mxu0 0.0
    %2781 = vmatprep.subr.mxu0 0.0
    %2782 = vmatpush1.msra.mxu0 0.0
    %2783 = vmatprep.subr.mxu0 0.0
    %2784 = vmatpush1.msra.mxu0 0.0
    %2785 = vmatprep.subr.mxu0 0.0
    %2786 = vmatpush1.msra.mxu0 0.0
    %2787 = vmatprep.subr.mxu0 0.0
    %2788 = vmatpush1.msra.mxu0 0.0
    %2789 = vmatprep.subr.mxu0 0.0
    %2790 = vmatpush1.msra.mxu0 0.0
    %2791 = vmatprep.subr.mxu0 0.0
    %2792 = vmatpush1.msra.mxu0 0.0
    %2793 = vmatprep.subr.mxu0 0.0
    %2794 = vmatpush1.msra.mxu0 0.0
    %2795 = vmatprep.subr.mxu0 0.0
    %2796 = vmatpush1.msra.mxu0 0.0
    %2797 = vmatprep.subr.mxu0 0.0
    %2798 = vmatpush1.msra.mxu0 0.0
    %2799 = vmatprep.subr.mxu0 0.0
    %2800 = vmatpush1.msra.mxu0 0.0
    %2801 = vmatprep.subr.mxu0 0.0
    %2802 = vmatpush1.msra.mxu0 0.0
    %2803 = vmatprep.mubr.f32.mxu0 0.0
    %2804 = vmatmul.mubr.f32.gmra.mrb[0].mxu0 %v2734
    %v2805 = vpop.f32.mrb[0].mxu0
    %v2806 = vadd.f32 0.0, %v2805
    %v2807 = vpop.f32.mrb[0].mxu0
    %v2808 = vadd.f32 0.0, %v2807
    %2809 = vmatprep.mubr.f32.mxu0 0.0
    %2810 = vmatmul.mubr.f32.gmra.mrb[0].mxu0 %v2737
    %v2811 = vpop.f32.mrb[0].mxu0
    %v2812 = vadd.f32 0.0, %v2811
    %v2813 = vpop.f32.mrb[0].mxu0
    %v2814 = vadd.f32 0.0, %v2813
    %2815 = vdwg.mxu0
    %2816 = vmatprep.subr.mxu0 0.0
    %2817 = vmatpush1.msra.mxu0 %v1919
    %2818 = vmatprep.subr.mxu0 0.0
    %2819 = vmatpush1.msra.mxu0 %v1922
    %2820 = vmatprep.subr.mxu0 0.0
    %2821 = vmatpush1.msra.mxu0 %v1925
    %2822 = vmatprep.subr.mxu0 0.0
    %2823 = vmatpush1.msra.mxu0 %v1928
    %2824 = vmatprep.subr.mxu0 0.0
    %2825 = vmatpush1.msra.mxu0 %v1949
    %2826 = vmatprep.subr.mxu0 0.0
    %2827 = vmatpush1.msra.mxu0 0.0
    %2828 = vmatprep.subr.mxu0 0.0
    %2829 = vmatpush1.msra.mxu0 0.0
    %2830 = vmatprep.subr.mxu0 0.0
    %2831 = vmatpush1.msra.mxu0 0.0
    %2832 = vmatprep.subr.mxu0 0.0
    %2833 = vmatpush1.msra.mxu0 0.0
    %2834 = vmatprep.subr.mxu0 0.0
    %2835 = vmatpush1.msra.mxu0 0.0
    %2836 = vmatprep.subr.mxu0 0.0
    %2837 = vmatpush1.msra.mxu0 0.0
    %2838 = vmatprep.subr.mxu0 0.0
    %2839 = vmatpush1.msra.mxu0 0.0
    %2840 = vmatprep.subr.mxu0 0.0
    %2841 = vmatpush1.msra.mxu0 0.0
    %2842 = vmatprep.subr.mxu0 0.0
    %2843 = vmatpush1.msra.mxu0 0.0
    %2844 = vmatprep.subr.mxu0 0.0
    %2845 = vmatpush1.msra.mxu0 0.0
    %2846 = vmatprep.subr.mxu0 0.0
    %2847 = vmatpush1.msra.mxu0 0.0
    %2848 = vmatprep.subr.mxu0 0.0
    %2849 = vmatpush1.msra.mxu0 0.0
    %2850 = vmatprep.subr.mxu0 0.0
    %2851 = vmatpush1.msra.mxu0 0.0
    %2852 = vmatprep.subr.mxu0 0.0
    %2853 = vmatpush1.msra.mxu0 0.0
    %2854 = vmatprep.subr.mxu0 0.0
    %2855 = vmatpush1.msra.mxu0 0.0
    %2856 = vmatprep.subr.mxu0 0.0
    %2857 = vmatpush1.msra.mxu0 0.0
    %2858 = vmatprep.subr.mxu0 0.0
    %2859 = vmatpush1.msra.mxu0 0.0
    %2860 = vmatprep.subr.mxu0 0.0
    %2861 = vmatpush1.msra.mxu0 0.0
    %2862 = vmatprep.subr.mxu0 0.0
    %2863 = vmatpush1.msra.mxu0 0.0
    %2864 = vmatprep.subr.mxu0 0.0
    %2865 = vmatpush1.msra.mxu0 0.0
    %2866 = vmatprep.subr.mxu0 0.0
    %2867 = vmatpush1.msra.mxu0 0.0
    %2868 = vmatprep.subr.mxu0 0.0
    %2869 = vmatpush1.msra.mxu0 0.0
    %2870 = vmatprep.subr.mxu0 0.0
    %2871 = vmatpush1.msra.mxu0 0.0
    %2872 = vmatprep.subr.mxu0 0.0
    %2873 = vmatpush1.msra.mxu0 0.0
    %2874 = vmatprep.subr.mxu0 0.0
    %2875 = vmatpush1.msra.mxu0 0.0
    %2876 = vmatprep.subr.mxu0 0.0
    %2877 = vmatpush1.msra.mxu0 0.0
    %2878 = vmatprep.subr.mxu0 0.0
    %2879 = vmatpush1.msra.mxu0 0.0
    %2880 = vmatprep.mubr.f32.mxu0 0.0
    %2881 = vmatmul.mubr.f32.gmra.mrb[0].mxu0 %v2734
    %v2882 = vpop.f32.mrb[0].mxu0
    %v2883 = vadd.f32 0.0, %v2882
    %v2884 = vpop.f32.mrb[0].mxu0
    %2885 = vmatprep.mubr.f32.mxu0 0.0
    %2886 = vmatmul.mubr.f32.gmra.mrb[0].mxu0 %v2737
    %v2887 = vpop.f32.mrb[0].mxu0
    %v2888 = vadd.f32 0.0, %v2887
    %v2889 = vpop.f32.mrb[0].mxu0
    %2890 = vdwg.mxu0
    %s2891 = scalar_lea.vmem %s5, 1152
    %v2892 = vld [vmem:[%s2891] sm:$0xff]
    %v2893 = vld [vmem:[%s2891 + $0x8] sm:$0xff]
    %v2894 = vld [vmem:[%s2891 + $0x10] sm:$0xff]
    %v2895 = vld [vmem:[%s2891 + $0x18] sm:$0xff]
    %v2896 = vld [vmem:[%s2891 + $0x20] sm:$0xff]
    %v2897 = vld [vmem:[%s2891 + $0x28] sm:$0xff]
    %v2898 = vld [vmem:[%s2891 + $0x30] sm:$0xff]
    %v2899 = vld [vmem:[%s2891 + $0x38] sm:$0xff]
    %v2900 = vld [vmem:[%s2891 + $0x40] sm:$0xff]
    %v2901 = vld [vmem:[%s2891 + $0x48] sm:$0xff]
    %v2902 = vld [vmem:[%s2891 + $0x50] sm:$0xff]
    %v2903 = vld [vmem:[%s2891 + $0x58] sm:$0xff]
    %v2904 = vld [vmem:[%s2891 + $0x60] sm:$0xff]
    %v2905 = vld [vmem:[%s2891 + $0x68] sm:$0xff]
    %v2906 = vld [vmem:[%s2891 + $0x70] sm:$0xff]
    %v2907 = vld [vmem:[%s2891 + $0x78] sm:$0xff]
    %v2908 = vld [vmem:[%s2891 + $0x80] sm:$0xff]
    %v2909 = vld [vmem:[%s2891 + $0x88] sm:$0xff]
    %v2910 = vld [vmem:[%s2891 + $0x90] sm:$0xff]
    %v2911 = vld [vmem:[%s2891 + $0x98] sm:$0xff]
    %v2912 = vld [vmem:[%s2891 + $0xa0] sm:$0xff]
    %v2913 = vld [vmem:[%s2891 + $0xa8] sm:$0xff]
    %v2914 = vld [vmem:[%s2891 + $0xb0] sm:$0xff]
    %v2915 = vld [vmem:[%s2891 + $0xb8] sm:$0xff]
    %v2916 = vld [vmem:[%s2891 + $0xc0] sm:$0xff]
    %v2917 = vld [vmem:[%s2891 + $0xc8] sm:$0xff]
    %v2918 = vld [vmem:[%s2891 + $0xd0] sm:$0xff]
    %v2919 = vld [vmem:[%s2891 + $0xd8] sm:$0xff]
    %v2920 = vld [vmem:[%s2891 + $0xe0] sm:$0xff]
    %v2921 = vld [vmem:[%s2891 + $0xe8] sm:$0xff]
    %v2922 = vld [vmem:[%s2891 + $0xf0] sm:$0xff]
    %v2923 = vld [vmem:[%s2891 + $0xf8] sm:$0xff]
    %v2924 = vld [vmem:[%s2891 + $0x100] sm:$0xff]
    %v2925 = vld [vmem:[%s2891 + $0x108] sm:$0xff]
    %v2926 = vld [vmem:[%s2891 + $0x110] sm:$0xff]
    %v2927 = vld [vmem:[%s2891 + $0x118] sm:$0xff]
    %v2928 = vld [vmem:[%s2891 + $0x120] sm:$0xff]
    %v2929 = vld [vmem:[%s2891 + $0x128] sm:$0xff]
    %v2930 = vld [vmem:[%s2891 + $0x130] sm:$0xff]
    %v2931 = vld [vmem:[%s2891 + $0x138] sm:$0xff]
    %v2932 = vld [vmem:[%s2891 + $0x140] sm:$0xff]
    %v2933 = vld [vmem:[%s2891 + $0x148] sm:$0xff]
    %v2934 = vld [vmem:[%s2891 + $0x150] sm:$0xff]
    %v2935 = vld [vmem:[%s2891 + $0x158] sm:$0xff]
    %v2936 = vld [vmem:[%s2891 + $0x160] sm:$0xff]
    %v2937 = vld [vmem:[%s2891 + $0x168] sm:$0xff]
    %v2938 = vld [vmem:[%s2891 + $0x170] sm:$0xff]
    %v2939 = vld [vmem:[%s2891 + $0x178] sm:$0xff]
    %v2940 = vld [vmem:[%s2891 + $0x180] sm:$0xff]
    %v2941 = vld [vmem:[%s2891 + $0x188] sm:$0xff]
    %v2942 = vld [vmem:[%s2891 + $0x190] sm:$0xff]
    %v2943 = vld [vmem:[%s2891 + $0x198] sm:$0xff]
    %v2944 = vld [vmem:[%s2891 + $0x1a0] sm:$0xff]
    %v2945 = vld [vmem:[%s2891 + $0x1a8] sm:$0xff]
    %v2946 = vld [vmem:[%s2891 + $0x1b0] sm:$0xff]
    %v2947 = vld [vmem:[%s2891 + $0x1b8] sm:$0xff]
    %v2948 = vld [vmem:[%s2891 + $0x1c0] sm:$0xff]
    %v2949 = vld [vmem:[%s2891 + $0x1c8] sm:$0xff]
    %v2950 = vld [vmem:[%s2891 + $0x1d0] sm:$0xff]
    %v2951 = vld [vmem:[%s2891 + $0x1d8] sm:$0xff]
    %v2952 = vld [vmem:[%s2891 + $0x1e0] sm:$0xff]
    %v2953 = vld [vmem:[%s2891 + $0x1e8] sm:$0xff]
    %v2954 = vld [vmem:[%s2891 + $0x1f0] sm:$0xff]
    %v2955 = vld [vmem:[%s2891 + $0x1f8] sm:$0xff]
    %v2956 = vld [vmem:[%s2891 + $0x200] sm:$0xff]
    %v2957 = vld [vmem:[%s2891 + $0x208] sm:$0xff]
    %v2958 = vld [vmem:[%s2891 + $0x210] sm:$0xff]
    %v2959 = vld [vmem:[%s2891 + $0x218] sm:$0xff]
    %v2960 = vld [vmem:[%s2891 + $0x220] sm:$0xff]
    %v2961 = vld [vmem:[%s2891 + $0x228] sm:$0xff]
    %v2962 = vld [vmem:[%s2891 + $0x230] sm:$0xff]
    %v2963 = vld [vmem:[%s2891 + $0x238] sm:$0xff]
    %v2965 = vsel %vm2409, %v2883, 0
    %v2968 = vsel %vm2409, %v2888, 0
    %2970 = vmatprep.subr.mxu0 %v2893
    %2971 = vmatpush1.msra.mxu0 %v2892
    %2972 = vmatprep.subr.mxu0 %v2895
    %2973 = vmatpush1.msra.mxu0 %v2894
    %2974 = vmatprep.subr.mxu0 %v2897
    %2975 = vmatpush1.msra.mxu0 %v2896
    %2976 = vmatprep.subr.mxu0 %v2899
    %2977 = vmatpush1.msra.mxu0 %v2898
    %2978 = vmatprep.subr.mxu0 %v2901
    %2979 = vmatpush1.msra.mxu0 %v2900
    %2980 = vmatprep.subr.mxu0 %v2903
    %2981 = vmatpush1.msra.mxu0 %v2902
    %2982 = vmatprep.subr.mxu0 %v2905
    %2983 = vmatpush1.msra.mxu0 %v2904
    %2984 = vmatprep.subr.mxu0 %v2907
    %2985 = vmatpush1.msra.mxu0 %v2906
    %2986 = vmatprep.subr.mxu0 %v2909
    %2987 = vmatpush1.msra.mxu0 %v2908
    %2988 = vmatprep.subr.mxu0 %v2911
    %2989 = vmatpush1.msra.mxu0 %v2910
    %2990 = vmatprep.subr.mxu0 %v2913
    %2991 = vmatpush1.msra.mxu0 %v2912
    %2992 = vmatprep.subr.mxu0 %v2915
    %2993 = vmatpush1.msra.mxu0 %v2914
    %2994 = vmatprep.subr.mxu0 %v2917
    %2995 = vmatpush1.msra.mxu0 %v2916
    %2996 = vmatprep.subr.mxu0 %v2919
    %2997 = vmatpush1.msra.mxu0 %v2918
    %2998 = vmatprep.subr.mxu0 %v2921
    %2999 = vmatpush1.msra.mxu0 %v2920
    %3000 = vmatprep.subr.mxu0 %v2923
    %3001 = vmatpush1.msra.mxu0 %v2922
    %3002 = vmatprep.subr.mxu0 %v2925
    %3003 = vmatpush1.msra.mxu0 %v2924
    %3004 = vmatprep.subr.mxu0 %v2927
    %3005 = vmatpush1.msra.mxu0 %v2926
    %3006 = vmatprep.subr.mxu0 %v2929
    %3007 = vmatpush1.msra.mxu0 %v2928
    %3008 = vmatprep.subr.mxu0 %v2931
    %3009 = vmatpush1.msra.mxu0 %v2930
    %3010 = vmatprep.subr.mxu0 %v2933
    %3011 = vmatpush1.msra.mxu0 %v2932
    %3012 = vmatprep.subr.mxu0 %v2935
    %3013 = vmatpush1.msra.mxu0 %v2934
    %3014 = vmatprep.subr.mxu0 %v2937
    %3015 = vmatpush1.msra.mxu0 %v2936
    %3016 = vmatprep.subr.mxu0 %v2939
    %3017 = vmatpush1.msra.mxu0 %v2938
    %3018 = vmatprep.subr.mxu0 %v2941
    %3019 = vmatpush1.msra.mxu0 %v2940
    %3020 = vmatprep.subr.mxu0 %v2943
    %3021 = vmatpush1.msra.mxu0 %v2942
    %3022 = vmatprep.subr.mxu0 %v2945
    %3023 = vmatpush1.msra.mxu0 %v2944
    %3024 = vmatprep.subr.mxu0 %v2947
    %3025 = vmatpush1.msra.mxu0 %v2946
    %3026 = vmatprep.subr.mxu0 %v2949
    %3027 = vmatpush1.msra.mxu0 %v2948
    %3028 = vmatprep.subr.mxu0 %v2951
    %3029 = vmatpush1.msra.mxu0 %v2950
    %3030 = vmatprep.subr.mxu0 %v2953
    %3031 = vmatpush1.msra.mxu0 %v2952
    %3032 = vmatprep.subr.mxu0 %v2955
    %3033 = vmatpush1.msra.mxu0 %v2954
    %3034 = vmatprep.mubr.f32.mxu0 %v2808
    %3035 = vmatmul.mubr.f32.gmra.mrb[0].mxu0 %v2806
    %v3036 = vpop.f32.mrb[0].mxu0
    %v3037 = vadd.f32 0.0, %v3036
    %v3038 = vpop.f32.mrb[0].mxu0
    %v3039 = vadd.f32 0.0, %v3038
    %3040 = vmatprep.mubr.f32.mxu0 %v2814
    %3041 = vmatmul.mubr.f32.gmra.mrb[0].mxu0 %v2812
    %v3042 = vpop.f32.mrb[0].mxu0
    %v3043 = vadd.f32 0.0, %v3042
    %v3044 = vpop.f32.mrb[0].mxu0
    %v3045 = vadd.f32 0.0, %v3044
    %3046 = vdwg.mxu0
    %3047 = vmatprep.subr.mxu0 %v2957
    %3048 = vmatpush1.msra.mxu0 %v2956
    %3049 = vmatprep.subr.mxu0 %v2959
    %3050 = vmatpush1.msra.mxu0 %v2958
    %3051 = vmatprep.subr.mxu0 %v2961
    %3052 = vmatpush1.msra.mxu0 %v2960
    %3053 = vmatprep.subr.mxu0 %v2963
    %3054 = vmatpush1.msra.mxu0 %v2962
    %3055 = vmatprep.subr.mxu0 0.0
    %3056 = vmatpush1.msra.mxu0 0.0
    %3057 = vmatprep.subr.mxu0 0.0
    %3058 = vmatpush1.msra.mxu0 0.0
    %3059 = vmatprep.subr.mxu0 0.0
    %3060 = vmatpush1.msra.mxu0 0.0
    %3061 = vmatprep.subr.mxu0 0.0
    %3062 = vmatpush1.msra.mxu0 0.0
    %3063 = vmatprep.subr.mxu0 0.0
    %3064 = vmatpush1.msra.mxu0 0.0
    %3065 = vmatprep.subr.mxu0 0.0
    %3066 = vmatpush1.msra.mxu0 0.0
    %3067 = vmatprep.subr.mxu0 0.0
    %3068 = vmatpush1.msra.mxu0 0.0
    %3069 = vmatprep.subr.mxu0 0.0
    %3070 = vmatpush1.msra.mxu0 0.0
    %3071 = vmatprep.subr.mxu0 0.0
    %3072 = vmatpush1.msra.mxu0 0.0
    %3073 = vmatprep.subr.mxu0 0.0
    %3074 = vmatpush1.msra.mxu0 0.0
    %3075 = vmatprep.subr.mxu0 0.0
    %3076 = vmatpush1.msra.mxu0 0.0
    %3077 = vmatprep.subr.mxu0 0.0
    %3078 = vmatpush1.msra.mxu0 0.0
    %3079 = vmatprep.subr.mxu0 0.0
    %3080 = vmatpush1.msra.mxu0 0.0
    %3081 = vmatprep.subr.mxu0 0.0
    %3082 = vmatpush1.msra.mxu0 0.0
    %3083 = vmatprep.subr.mxu0 0.0
    %3084 = vmatpush1.msra.mxu0 0.0
    %3085 = vmatprep.subr.mxu0 0.0
    %3086 = vmatpush1.msra.mxu0 0.0
    %3087 = vmatprep.subr.mxu0 0.0
    %3088 = vmatpush1.msra.mxu0 0.0
    %3089 = vmatprep.subr.mxu0 0.0
    %3090 = vmatpush1.msra.mxu0 0.0
    %3091 = vmatprep.subr.mxu0 0.0
    %3092 = vmatpush1.msra.mxu0 0.0
    %3093 = vmatprep.subr.mxu0 0.0
    %3094 = vmatpush1.msra.mxu0 0.0
    %3095 = vmatprep.subr.mxu0 0.0
    %3096 = vmatpush1.msra.mxu0 0.0
    %3097 = vmatprep.subr.mxu0 0.0
    %3098 = vmatpush1.msra.mxu0 0.0
    %3099 = vmatprep.subr.mxu0 0.0
    %3100 = vmatpush1.msra.mxu0 0.0
    %3101 = vmatprep.subr.mxu0 0.0
    %3102 = vmatpush1.msra.mxu0 0.0
    %3103 = vmatprep.subr.mxu0 0.0
    %3104 = vmatpush1.msra.mxu0 0.0
    %3105 = vmatprep.subr.mxu0 0.0
    %3106 = vmatpush1.msra.mxu0 0.0
    %3107 = vmatprep.subr.mxu0 0.0
    %3108 = vmatpush1.msra.mxu0 0.0
    %3109 = vmatprep.subr.mxu0 0.0
    %3110 = vmatpush1.msra.mxu0 0.0
    %3111 = vmatprep.mubr.f32.mxu0 0.0
    %3112 = vmatmul.mubr.f32.gmra.mrb[0].mxu0 %v2965
    %v3113 = vpop.f32.mrb[0].mxu0
    %v3114 = vadd.f32 %v3037, %v3113
    %v3115 = vpop.f32.mrb[0].mxu0
    %v3116 = vadd.f32 %v3039, %v3115
    %3117 = vmatprep.mubr.f32.mxu0 0.0
    %3118 = vmatmul.mubr.f32.gmra.mrb[0].mxu0 %v2968
    %v3119 = vpop.f32.mrb[0].mxu0
    %v3120 = vadd.f32 %v3043, %v3119
    %v3121 = vpop.f32.mrb[0].mxu0
    %v3122 = vadd.f32 %v3045, %v3121
    %3123 = vdwg.mxu0
    %v3124 = vadd.f32 %v2720, %v3114
    %v3125 = vadd.f32 %v2722, %v3116
    %v3126 = vadd.f32 %v2726, %v3120
    %v3127 = vadd.f32 %v2728, %v3122
    %s3128 = scalar_lea.vmem %s4, 48
    %v3129 = vld [vmem:[%s3128] sm:$0xff]
    %v3130 = vld [vmem:[%s3128 + $0x8] sm:$0x3f]
    %v3132 = vsel %vm1934, %v3129, 0
    %v3135 = vsel %vm1934, %v3130, 0
    %3137 = vmatprep.subr.mxu0 %v1918
    %3138 = vmatpush1.msra.mxu0 %v1917
    %3139 = vmatprep.subr.mxu0 %v1921
    %3140 = vmatpush1.msra.mxu0 %v1920
    %3141 = vmatprep.subr.mxu0 %v1924
    %3142 = vmatpush1.msra.mxu0 %v1923
    %3143 = vmatprep.subr.mxu0 %v1927
    %3144 = vmatpush1.msra.mxu0 %v1926
    %3145 = vmatprep.subr.mxu0 %v1946
    %3146 = vmatpush1.msra.mxu0 %v1943
    %3147 = vmatprep.subr.mxu0 0.0
    %3148 = vmatpush1.msra.mxu0 0.0
    %3149 = vmatprep.subr.mxu0 0.0
    %3150 = vmatpush1.msra.mxu0 0.0
    %3151 = vmatprep.subr.mxu0 0.0
    %3152 = vmatpush1.msra.mxu0 0.0
    %3153 = vmatprep.subr.mxu0 0.0
    %3154 = vmatpush1.msra.mxu0 0.0
    %3155 = vmatprep.subr.mxu0 0.0
    %3156 = vmatpush1.msra.mxu0 0.0
    %3157 = vmatprep.subr.mxu0 0.0
    %3158 = vmatpush1.msra.mxu0 0.0
    %3159 = vmatprep.subr.mxu0 0.0
    %3160 = vmatpush1.msra.mxu0 0.0
    %3161 = vmatprep.subr.mxu0 0.0
    %3162 = vmatpush1.msra.mxu0 0.0
    %3163 = vmatprep.subr.mxu0 0.0
    %3164 = vmatpush1.msra.mxu0 0.0
    %3165 = vmatprep.subr.mxu0 0.0
    %3166 = vmatpush1.msra.mxu0 0.0
    %3167 = vmatprep.subr.mxu0 0.0
    %3168 = vmatpush1.msra.mxu0 0.0
    %3169 = vmatprep.subr.mxu0 0.0
    %3170 = vmatpush1.msra.mxu0 0.0
    %3171 = vmatprep.subr.mxu0 0.0
    %3172 = vmatpush1.msra.mxu0 0.0
    %3173 = vmatprep.subr.mxu0 0.0
    %3174 = vmatpush1.msra.mxu0 0.0
    %3175 = vmatprep.subr.mxu0 0.0
    %3176 = vmatpush1.msra.mxu0 0.0
    %3177 = vmatprep.subr.mxu0 0.0
    %3178 = vmatpush1.msra.mxu0 0.0
    %3179 = vmatprep.subr.mxu0 0.0
    %3180 = vmatpush1.msra.mxu0 0.0
    %3181 = vmatprep.subr.mxu0 0.0
    %3182 = vmatpush1.msra.mxu0 0.0
    %3183 = vmatprep.subr.mxu0 0.0
    %3184 = vmatpush1.msra.mxu0 0.0
    %3185 = vmatprep.subr.mxu0 0.0
    %3186 = vmatpush1.msra.mxu0 0.0
    %3187 = vmatprep.subr.mxu0 0.0
    %3188 = vmatpush1.msra.mxu0 0.0
    %3189 = vmatprep.subr.mxu0 0.0
    %3190 = vmatpush1.msra.mxu0 0.0
    %3191 = vmatprep.subr.mxu0 0.0
    %3192 = vmatpush1.msra.mxu0 0.0
    %3193 = vmatprep.subr.mxu0 0.0
    %3194 = vmatpush1.msra.mxu0 0.0
    %3195 = vmatprep.subr.mxu0 0.0
    %3196 = vmatpush1.msra.mxu0 0.0
    %3197 = vmatprep.subr.mxu0 0.0
    %3198 = vmatpush1.msra.mxu0 0.0
    %3199 = vmatprep.subr.mxu0 0.0
    %3200 = vmatpush1.msra.mxu0 0.0
    %3201 = vmatprep.mubr.f32.mxu0 0.0
    %3202 = vmatmul.mubr.f32.gmra.mrb[0].mxu0 %v3132
    %v3203 = vpop.f32.mrb[0].mxu0
    %v3204 = vadd.f32 0.0, %v3203
    %v3205 = vpop.f32.mrb[0].mxu0
    %v3206 = vadd.f32 0.0, %v3205
    %3207 = vmatprep.mubr.f32.mxu0 0.0
    %3208 = vmatmul.mubr.f32.gmra.mrb[0].mxu0 %v3135
    %v3209 = vpop.f32.mrb[0].mxu0
    %v3210 = vadd.f32 0.0, %v3209
    %v3211 = vpop.f32.mrb[0].mxu0
    %v3212 = vadd.f32 0.0, %v3211
    %3213 = vdwg.mxu0
    %3214 = vmatprep.subr.mxu0 0.0
    %3215 = vmatpush1.msra.mxu0 %v1919
    %3216 = vmatprep.subr.mxu0 0.0
    %3217 = vmatpush1.msra.mxu0 %v1922
    %3218 = vmatprep.subr.mxu0 0.0
    %3219 = vmatpush1.msra.mxu0 %v1925
    %3220 = vmatprep.subr.mxu0 0.0
    %3221 = vmatpush1.msra.mxu0 %v1928
    %3222 = vmatprep.subr.mxu0 0.0
    %3223 = vmatpush1.msra.mxu0 %v1949
    %3224 = vmatprep.subr.mxu0 0.0
    %3225 = vmatpush1.msra.mxu0 0.0
    %3226 = vmatprep.subr.mxu0 0.0
    %3227 = vmatpush1.msra.mxu0 0.0
    %3228 = vmatprep.subr.mxu0 0.0
    %3229 = vmatpush1.msra.mxu0 0.0
    %3230 = vmatprep.subr.mxu0 0.0
    %3231 = vmatpush1.msra.mxu0 0.0
    %3232 = vmatprep.subr.mxu0 0.0
    %3233 = vmatpush1.msra.mxu0 0.0
    %3234 = vmatprep.subr.mxu0 0.0
    %3235 = vmatpush1.msra.mxu0 0.0
    %3236 = vmatprep.subr.mxu0 0.0
    %3237 = vmatpush1.msra.mxu0 0.0
    %3238 = vmatprep.subr.mxu0 0.0
    %3239 = vmatpush1.msra.mxu0 0.0
    %3240 = vmatprep.subr.mxu0 0.0
    %3241 = vmatpush1.msra.mxu0 0.0
    %3242 = vmatprep.subr.mxu0 0.0
    %3243 = vmatpush1.msra.mxu0 0.0
    %3244 = vmatprep.subr.mxu0 0.0
    %3245 = vmatpush1.msra.mxu0 0.0
    %3246 = vmatprep.subr.mxu0 0.0
    %3247 = vmatpush1.msra.mxu0 0.0
    %3248 = vmatprep.subr.mxu0 0.0
    %3249 = vmatpush1.msra.mxu0 0.0
    %3250 = vmatprep.subr.mxu0 0.0
    %3251 = vmatpush1.msra.mxu0 0.0
    %3252 = vmatprep.subr.mxu0 0.0
    %3253 = vmatpush1.msra.mxu0 0.0
    %3254 = vmatprep.subr.mxu0 0.0
    %3255 = vmatpush1.msra.mxu0 0.0
    %3256 = vmatprep.subr.mxu0 0.0
    %3257 = vmatpush1.msra.mxu0 0.0
    %3258 = vmatprep.subr.mxu0 0.0
    %3259 = vmatpush1.msra.mxu0 0.0
    %3260 = vmatprep.subr.mxu0 0.0
    %3261 = vmatpush1.msra.mxu0 0.0
    %3262 = vmatprep.subr.mxu0 0.0
    %3263 = vmatpush1.msra.mxu0 0.0
    %3264 = vmatprep.subr.mxu0 0.0
    %3265 = vmatpush1.msra.mxu0 0.0
    %3266 = vmatprep.subr.mxu0 0.0
    %3267 = vmatpush1.msra.mxu0 0.0
    %3268 = vmatprep.subr.mxu0 0.0
    %3269 = vmatpush1.msra.mxu0 0.0
    %3270 = vmatprep.subr.mxu0 0.0
    %3271 = vmatpush1.msra.mxu0 0.0
    %3272 = vmatprep.subr.mxu0 0.0
    %3273 = vmatpush1.msra.mxu0 0.0
    %3274 = vmatprep.subr.mxu0 0.0
    %3275 = vmatpush1.msra.mxu0 0.0
    %3276 = vmatprep.subr.mxu0 0.0
    %3277 = vmatpush1.msra.mxu0 0.0
    %3278 = vmatprep.mubr.f32.mxu0 0.0
    %3279 = vmatmul.mubr.f32.gmra.mrb[0].mxu0 %v3132
    %v3280 = vpop.f32.mrb[0].mxu0
    %v3281 = vadd.f32 0.0, %v3280
    %v3282 = vpop.f32.mrb[0].mxu0
    %3283 = vmatprep.mubr.f32.mxu0 0.0
    %3284 = vmatmul.mubr.f32.gmra.mrb[0].mxu0 %v3135
    %v3285 = vpop.f32.mrb[0].mxu0
    %v3286 = vadd.f32 0.0, %v3285
    %v3287 = vpop.f32.mrb[0].mxu0
    %3288 = vdwg.mxu0
    %s3289 = scalar_lea.vmem %s5, 1728
    %v3290 = vld [vmem:[%s3289] sm:$0xff]
    %v3291 = vld [vmem:[%s3289 + $0x8] sm:$0xff]
    %v3292 = vld [vmem:[%s3289 + $0x10] sm:$0xff]
    %v3293 = vld [vmem:[%s3289 + $0x18] sm:$0xff]
    %v3294 = vld [vmem:[%s3289 + $0x20] sm:$0xff]
    %v3295 = vld [vmem:[%s3289 + $0x28] sm:$0xff]
    %v3296 = vld [vmem:[%s3289 + $0x30] sm:$0xff]
    %v3297 = vld [vmem:[%s3289 + $0x38] sm:$0xff]
    %v3298 = vld [vmem:[%s3289 + $0x40] sm:$0xff]
    %v3299 = vld [vmem:[%s3289 + $0x48] sm:$0xff]
    %v3300 = vld [vmem:[%s3289 + $0x50] sm:$0xff]
    %v3301 = vld [vmem:[%s3289 + $0x58] sm:$0xff]
    %v3302 = vld [vmem:[%s3289 + $0x60] sm:$0xff]
    %v3303 = vld [vmem:[%s3289 + $0x68] sm:$0xff]
    %v3304 = vld [vmem:[%s3289 + $0x70] sm:$0xff]
    %v3305 = vld [vmem:[%s3289 + $0x78] sm:$0xff]
    %v3306 = vld [vmem:[%s3289 + $0x80] sm:$0xff]
    %v3307 = vld [vmem:[%s3289 + $0x88] sm:$0xff]
    %v3308 = vld [vmem:[%s3289 + $0x90] sm:$0xff]
    %v3309 = vld [vmem:[%s3289 + $0x98] sm:$0xff]
    %v3310 = vld [vmem:[%s3289 + $0xa0] sm:$0xff]
    %v3311 = vld [vmem:[%s3289 + $0xa8] sm:$0xff]
    %v3312 = vld [vmem:[%s3289 + $0xb0] sm:$0xff]
    %v3313 = vld [vmem:[%s3289 + $0xb8] sm:$0xff]
    %v3314 = vld [vmem:[%s3289 + $0xc0] sm:$0xff]
    %v3315 = vld [vmem:[%s3289 + $0xc8] sm:$0xff]
    %v3316 = vld [vmem:[%s3289 + $0xd0] sm:$0xff]
    %v3317 = vld [vmem:[%s3289 + $0xd8] sm:$0xff]
    %v3318 = vld [vmem:[%s3289 + $0xe0] sm:$0xff]
    %v3319 = vld [vmem:[%s3289 + $0xe8] sm:$0xff]
    %v3320 = vld [vmem:[%s3289 + $0xf0] sm:$0xff]
    %v3321 = vld [vmem:[%s3289 + $0xf8] sm:$0xff]
    %v3322 = vld [vmem:[%s3289 + $0x100] sm:$0xff]
    %v3323 = vld [vmem:[%s3289 + $0x108] sm:$0xff]
    %v3324 = vld [vmem:[%s3289 + $0x110] sm:$0xff]
    %v3325 = vld [vmem:[%s3289 + $0x118] sm:$0xff]
    %v3326 = vld [vmem:[%s3289 + $0x120] sm:$0xff]
    %v3327 = vld [vmem:[%s3289 + $0x128] sm:$0xff]
    %v3328 = vld [vmem:[%s3289 + $0x130] sm:$0xff]
    %v3329 = vld [vmem:[%s3289 + $0x138] sm:$0xff]
    %v3330 = vld [vmem:[%s3289 + $0x140] sm:$0xff]
    %v3331 = vld [vmem:[%s3289 + $0x148] sm:$0xff]
    %v3332 = vld [vmem:[%s3289 + $0x150] sm:$0xff]
    %v3333 = vld [vmem:[%s3289 + $0x158] sm:$0xff]
    %v3334 = vld [vmem:[%s3289 + $0x160] sm:$0xff]
    %v3335 = vld [vmem:[%s3289 + $0x168] sm:$0xff]
    %v3336 = vld [vmem:[%s3289 + $0x170] sm:$0xff]
    %v3337 = vld [vmem:[%s3289 + $0x178] sm:$0xff]
    %v3338 = vld [vmem:[%s3289 + $0x180] sm:$0xff]
    %v3339 = vld [vmem:[%s3289 + $0x188] sm:$0xff]
    %v3340 = vld [vmem:[%s3289 + $0x190] sm:$0xff]
    %v3341 = vld [vmem:[%s3289 + $0x198] sm:$0xff]
    %v3342 = vld [vmem:[%s3289 + $0x1a0] sm:$0xff]
    %v3343 = vld [vmem:[%s3289 + $0x1a8] sm:$0xff]
    %v3344 = vld [vmem:[%s3289 + $0x1b0] sm:$0xff]
    %v3345 = vld [vmem:[%s3289 + $0x1b8] sm:$0xff]
    %v3346 = vld [vmem:[%s3289 + $0x1c0] sm:$0xff]
    %v3347 = vld [vmem:[%s3289 + $0x1c8] sm:$0xff]
    %v3348 = vld [vmem:[%s3289 + $0x1d0] sm:$0xff]
    %v3349 = vld [vmem:[%s3289 + $0x1d8] sm:$0xff]
    %v3350 = vld [vmem:[%s3289 + $0x1e0] sm:$0xff]
    %v3351 = vld [vmem:[%s3289 + $0x1e8] sm:$0xff]
    %v3352 = vld [vmem:[%s3289 + $0x1f0] sm:$0xff]
    %v3353 = vld [vmem:[%s3289 + $0x1f8] sm:$0xff]
    %v3354 = vld [vmem:[%s3289 + $0x200] sm:$0xff]
    %v3355 = vld [vmem:[%s3289 + $0x208] sm:$0xff]
    %v3356 = vld [vmem:[%s3289 + $0x210] sm:$0xff]
    %v3357 = vld [vmem:[%s3289 + $0x218] sm:$0xff]
    %v3358 = vld [vmem:[%s3289 + $0x220] sm:$0xff]
    %v3359 = vld [vmem:[%s3289 + $0x228] sm:$0xff]
    %v3360 = vld [vmem:[%s3289 + $0x230] sm:$0xff]
    %v3361 = vld [vmem:[%s3289 + $0x238] sm:$0xff]
    %v3363 = vsel %vm2409, %v3281, 0
    %v3366 = vsel %vm2409, %v3286, 0
    %3368 = vmatprep.subr.mxu0 %v3291
    %3369 = vmatpush1.msra.mxu0 %v3290
    %3370 = vmatprep.subr.mxu0 %v3293
    %3371 = vmatpush1.msra.mxu0 %v3292
    %3372 = vmatprep.subr.mxu0 %v3295
    %3373 = vmatpush1.msra.mxu0 %v3294
    %3374 = vmatprep.subr.mxu0 %v3297
    %3375 = vmatpush1.msra.mxu0 %v3296
    %3376 = vmatprep.subr.mxu0 %v3299
    %3377 = vmatpush1.msra.mxu0 %v3298
    %3378 = vmatprep.subr.mxu0 %v3301
    %3379 = vmatpush1.msra.mxu0 %v3300
    %3380 = vmatprep.subr.mxu0 %v3303
    %3381 = vmatpush1.msra.mxu0 %v3302
    %3382 = vmatprep.subr.mxu0 %v3305
    %3383 = vmatpush1.msra.mxu0 %v3304
    %3384 = vmatprep.subr.mxu0 %v3307
    %3385 = vmatpush1.msra.mxu0 %v3306
    %3386 = vmatprep.subr.mxu0 %v3309
    %3387 = vmatpush1.msra.mxu0 %v3308
    %3388 = vmatprep.subr.mxu0 %v3311
    %3389 = vmatpush1.msra.mxu0 %v3310
    %3390 = vmatprep.subr.mxu0 %v3313
    %3391 = vmatpush1.msra.mxu0 %v3312
    %3392 = vmatprep.subr.mxu0 %v3315
    %3393 = vmatpush1.msra.mxu0 %v3314
    %3394 = vmatprep.subr.mxu0 %v3317
    %3395 = vmatpush1.msra.mxu0 %v3316
    %3396 = vmatprep.subr.mxu0 %v3319
    %3397 = vmatpush1.msra.mxu0 %v3318
    %3398 = vmatprep.subr.mxu0 %v3321
    %3399 = vmatpush1.msra.mxu0 %v3320
    %3400 = vmatprep.subr.mxu0 %v3323
    %3401 = vmatpush1.msra.mxu0 %v3322
    %3402 = vmatprep.subr.mxu0 %v3325
    %3403 = vmatpush1.msra.mxu0 %v3324
    %3404 = vmatprep.subr.mxu0 %v3327
    %3405 = vmatpush1.msra.mxu0 %v3326
    %3406 = vmatprep.subr.mxu0 %v3329
    %3407 = vmatpush1.msra.mxu0 %v3328
    %3408 = vmatprep.subr.mxu0 %v3331
    %3409 = vmatpush1.msra.mxu0 %v3330
    %3410 = vmatprep.subr.mxu0 %v3333
    %3411 = vmatpush1.msra.mxu0 %v3332
    %3412 = vmatprep.subr.mxu0 %v3335
    %3413 = vmatpush1.msra.mxu0 %v3334
    %3414 = vmatprep.subr.mxu0 %v3337
    %3415 = vmatpush1.msra.mxu0 %v3336
    %3416 = vmatprep.subr.mxu0 %v3339
    %3417 = vmatpush1.msra.mxu0 %v3338
    %3418 = vmatprep.subr.mxu0 %v3341
    %3419 = vmatpush1.msra.mxu0 %v3340
    %3420 = vmatprep.subr.mxu0 %v3343
    %3421 = vmatpush1.msra.mxu0 %v3342
    %3422 = vmatprep.subr.mxu0 %v3345
    %3423 = vmatpush1.msra.mxu0 %v3344
    %3424 = vmatprep.subr.mxu0 %v3347
    %3425 = vmatpush1.msra.mxu0 %v3346
    %3426 = vmatprep.subr.mxu0 %v3349
    %3427 = vmatpush1.msra.mxu0 %v3348
    %3428 = vmatprep.subr.mxu0 %v3351
    %3429 = vmatpush1.msra.mxu0 %v3350
    %3430 = vmatprep.subr.mxu0 %v3353
    %3431 = vmatpush1.msra.mxu0 %v3352
    %3432 = vmatprep.mubr.f32.mxu0 %v3206
    %3433 = vmatmul.mubr.f32.gmra.mrb[0].mxu0 %v3204
    %v3434 = vpop.f32.mrb[0].mxu0
    %v3435 = vadd.f32 0.0, %v3434
    %v3436 = vpop.f32.mrb[0].mxu0
    %v3437 = vadd.f32 0.0, %v3436
    %3438 = vmatprep.mubr.f32.mxu0 %v3212
    %3439 = vmatmul.mubr.f32.gmra.mrb[0].mxu0 %v3210
    %v3440 = vpop.f32.mrb[0].mxu0
    %v3441 = vadd.f32 0.0, %v3440
    %v3442 = vpop.f32.mrb[0].mxu0
    %v3443 = vadd.f32 0.0, %v3442
    %3444 = vdwg.mxu0
    %3445 = vmatprep.subr.mxu0 %v3355
    %3446 = vmatpush1.msra.mxu0 %v3354
    %3447 = vmatprep.subr.mxu0 %v3357
    %3448 = vmatpush1.msra.mxu0 %v3356
    %3449 = vmatprep.subr.mxu0 %v3359
    %3450 = vmatpush1.msra.mxu0 %v3358
    %3451 = vmatprep.subr.mxu0 %v3361
    %3452 = vmatpush1.msra.mxu0 %v3360
    %3453 = vmatprep.subr.mxu0 0.0
    %3454 = vmatpush1.msra.mxu0 0.0
    %3455 = vmatprep.subr.mxu0 0.0
    %3456 = vmatpush1.msra.mxu0 0.0
    %3457 = vmatprep.subr.mxu0 0.0
    %3458 = vmatpush1.msra.mxu0 0.0
    %3459 = vmatprep.subr.mxu0 0.0
    %3460 = vmatpush1.msra.mxu0 0.0
    %3461 = vmatprep.subr.mxu0 0.0
    %3462 = vmatpush1.msra.mxu0 0.0
    %3463 = vmatprep.subr.mxu0 0.0
    %3464 = vmatpush1.msra.mxu0 0.0
    %3465 = vmatprep.subr.mxu0 0.0
    %3466 = vmatpush1.msra.mxu0 0.0
    %3467 = vmatprep.subr.mxu0 0.0
    %3468 = vmatpush1.msra.mxu0 0.0
    %3469 = vmatprep.subr.mxu0 0.0
    %3470 = vmatpush1.msra.mxu0 0.0
    %3471 = vmatprep.subr.mxu0 0.0
    %3472 = vmatpush1.msra.mxu0 0.0
    %3473 = vmatprep.subr.mxu0 0.0
    %3474 = vmatpush1.msra.mxu0 0.0
    %3475 = vmatprep.subr.mxu0 0.0
    %3476 = vmatpush1.msra.mxu0 0.0
    %3477 = vmatprep.subr.mxu0 0.0
    %3478 = vmatpush1.msra.mxu0 0.0
    %3479 = vmatprep.subr.mxu0 0.0
    %3480 = vmatpush1.msra.mxu0 0.0
    %3481 = vmatprep.subr.mxu0 0.0
    %3482 = vmatpush1.msra.mxu0 0.0
    %3483 = vmatprep.subr.mxu0 0.0
    %3484 = vmatpush1.msra.mxu0 0.0
    %3485 = vmatprep.subr.mxu0 0.0
    %3486 = vmatpush1.msra.mxu0 0.0
    %3487 = vmatprep.subr.mxu0 0.0
    %3488 = vmatpush1.msra.mxu0 0.0
    %3489 = vmatprep.subr.mxu0 0.0
    %3490 = vmatpush1.msra.mxu0 0.0
    %3491 = vmatprep.subr.mxu0 0.0
    %3492 = vmatpush1.msra.mxu0 0.0
    %3493 = vmatprep.subr.mxu0 0.0
    %3494 = vmatpush1.msra.mxu0 0.0
    %3495 = vmatprep.subr.mxu0 0.0
    %3496 = vmatpush1.msra.mxu0 0.0
    %3497 = vmatprep.subr.mxu0 0.0
    %3498 = vmatpush1.msra.mxu0 0.0
    %3499 = vmatprep.subr.mxu0 0.0
    %3500 = vmatpush1.msra.mxu0 0.0
    %3501 = vmatprep.subr.mxu0 0.0
    %3502 = vmatpush1.msra.mxu0 0.0
    %3503 = vmatprep.subr.mxu0 0.0
    %3504 = vmatpush1.msra.mxu0 0.0
    %3505 = vmatprep.subr.mxu0 0.0
    %3506 = vmatpush1.msra.mxu0 0.0
    %3507 = vmatprep.subr.mxu0 0.0
    %3508 = vmatpush1.msra.mxu0 0.0
    %3509 = vmatprep.mubr.f32.mxu0 0.0
    %3510 = vmatmul.mubr.f32.gmra.mrb[0].mxu0 %v3363
    %v3511 = vpop.f32.mrb[0].mxu0
    %v3512 = vadd.f32 %v3435, %v3511
    %v3513 = vpop.f32.mrb[0].mxu0
    %v3514 = vadd.f32 %v3437, %v3513
    %3515 = vmatprep.mubr.f32.mxu0 0.0
    %3516 = vmatmul.mubr.f32.gmra.mrb[0].mxu0 %v3366
    %v3517 = vpop.f32.mrb[0].mxu0
    %v3518 = vadd.f32 %v3441, %v3517
    %v3519 = vpop.f32.mrb[0].mxu0
    %v3520 = vadd.f32 %v3443, %v3519
    %3521 = vdwg.mxu0
    %v3522 = vadd.f32 %v3124, %v3512
    %v3523 = vadd.f32 %v3125, %v3514
    %v3524 = vadd.f32 %v3126, %v3518
    %v3525 = vadd.f32 %v3127, %v3520
    %s3526 = scalar_lea.vmem %s4, 64
    %v3527 = vld [vmem:[%s3526] sm:$0xff]
    %v3528 = vld [vmem:[%s3526 + $0x8] sm:$0x3f]
    %v3530 = vsel %vm1934, %v3527, 0
    %v3533 = vsel %vm1934, %v3528, 0
    %3535 = vmatprep.subr.mxu0 %v1918
    %3536 = vmatpush1.msra.mxu0 %v1917
    %3537 = vmatprep.subr.mxu0 %v1921
    %3538 = vmatpush1.msra.mxu0 %v1920
    %3539 = vmatprep.subr.mxu0 %v1924
    %3540 = vmatpush1.msra.mxu0 %v1923
    %3541 = vmatprep.subr.mxu0 %v1927
    %3542 = vmatpush1.msra.mxu0 %v1926
    %3543 = vmatprep.subr.mxu0 %v1946
    %3544 = vmatpush1.msra.mxu0 %v1943
    %3545 = vmatprep.subr.mxu0 0.0
    %3546 = vmatpush1.msra.mxu0 0.0
    %3547 = vmatprep.subr.mxu0 0.0
    %3548 = vmatpush1.msra.mxu0 0.0
    %3549 = vmatprep.subr.mxu0 0.0
    %3550 = vmatpush1.msra.mxu0 0.0
    %3551 = vmatprep.subr.mxu0 0.0
    %3552 = vmatpush1.msra.mxu0 0.0
    %3553 = vmatprep.subr.mxu0 0.0
    %3554 = vmatpush1.msra.mxu0 0.0
    %3555 = vmatprep.subr.mxu0 0.0
    %3556 = vmatpush1.msra.mxu0 0.0
    %3557 = vmatprep.subr.mxu0 0.0
    %3558 = vmatpush1.msra.mxu0 0.0
    %3559 = vmatprep.subr.mxu0 0.0
    %3560 = vmatpush1.msra.mxu0 0.0
    %3561 = vmatprep.subr.mxu0 0.0
    %3562 = vmatpush1.msra.mxu0 0.0
    %3563 = vmatprep.subr.mxu0 0.0
    %3564 = vmatpush1.msra.mxu0 0.0
    %3565 = vmatprep.subr.mxu0 0.0
    %3566 = vmatpush1.msra.mxu0 0.0
    %3567 = vmatprep.subr.mxu0 0.0
    %3568 = vmatpush1.msra.mxu0 0.0
    %3569 = vmatprep.subr.mxu0 0.0
    %3570 = vmatpush1.msra.mxu0 0.0
    %3571 = vmatprep.subr.mxu0 0.0
    %3572 = vmatpush1.msra.mxu0 0.0
    %3573 = vmatprep.subr.mxu0 0.0
    %3574 = vmatpush1.msra.mxu0 0.0
    %3575 = vmatprep.subr.mxu0 0.0
    %3576 = vmatpush1.msra.mxu0 0.0
    %3577 = vmatprep.subr.mxu0 0.0
    %3578 = vmatpush1.msra.mxu0 0.0
    %3579 = vmatprep.subr.mxu0 0.0
    %3580 = vmatpush1.msra.mxu0 0.0
    %3581 = vmatprep.subr.mxu0 0.0
    %3582 = vmatpush1.msra.mxu0 0.0
    %3583 = vmatprep.subr.mxu0 0.0
    %3584 = vmatpush1.msra.mxu0 0.0
    %3585 = vmatprep.subr.mxu0 0.0
    %3586 = vmatpush1.msra.mxu0 0.0
    %3587 = vmatprep.subr.mxu0 0.0
    %3588 = vmatpush1.msra.mxu0 0.0
    %3589 = vmatprep.subr.mxu0 0.0
    %3590 = vmatpush1.msra.mxu0 0.0
    %3591 = vmatprep.subr.mxu0 0.0
    %3592 = vmatpush1.msra.mxu0 0.0
    %3593 = vmatprep.subr.mxu0 0.0
    %3594 = vmatpush1.msra.mxu0 0.0
    %3595 = vmatprep.subr.mxu0 0.0
    %3596 = vmatpush1.msra.mxu0 0.0
    %3597 = vmatprep.subr.mxu0 0.0
    %3598 = vmatpush1.msra.mxu0 0.0
    %3599 = vmatprep.mubr.f32.mxu0 0.0
    %3600 = vmatmul.mubr.f32.gmra.mrb[0].mxu0 %v3530
    %v3601 = vpop.f32.mrb[0].mxu0
    %v3602 = vadd.f32 0.0, %v3601
    %v3603 = vpop.f32.mrb[0].mxu0
    %v3604 = vadd.f32 0.0, %v3603
    %3605 = vmatprep.mubr.f32.mxu0 0.0
    %3606 = vmatmul.mubr.f32.gmra.mrb[0].mxu0 %v3533
    %v3607 = vpop.f32.mrb[0].mxu0
    %v3608 = vadd.f32 0.0, %v3607
    %v3609 = vpop.f32.mrb[0].mxu0
    %v3610 = vadd.f32 0.0, %v3609
    %3611 = vdwg.mxu0
    %3612 = vmatprep.subr.mxu0 0.0
    %3613 = vmatpush1.msra.mxu0 %v1919
    %3614 = vmatprep.subr.mxu0 0.0
    %3615 = vmatpush1.msra.mxu0 %v1922
    %3616 = vmatprep.subr.mxu0 0.0
    %3617 = vmatpush1.msra.mxu0 %v1925
    %3618 = vmatprep.subr.mxu0 0.0
    %3619 = vmatpush1.msra.mxu0 %v1928
    %3620 = vmatprep.subr.mxu0 0.0
    %3621 = vmatpush1.msra.mxu0 %v1949
    %3622 = vmatprep.subr.mxu0 0.0
    %3623 = vmatpush1.msra.mxu0 0.0
    %3624 = vmatprep.subr.mxu0 0.0
    %3625 = vmatpush1.msra.mxu0 0.0
    %3626 = vmatprep.subr.mxu0 0.0
    %3627 = vmatpush1.msra.mxu0 0.0
    %3628 = vmatprep.subr.mxu0 0.0
    %3629 = vmatpush1.msra.mxu0 0.0
    %3630 = vmatprep.subr.mxu0 0.0
    %3631 = vmatpush1.msra.mxu0 0.0
    %3632 = vmatprep.subr.mxu0 0.0
    %3633 = vmatpush1.msra.mxu0 0.0
    %3634 = vmatprep.subr.mxu0 0.0
    %3635 = vmatpush1.msra.mxu0 0.0
    %3636 = vmatprep.subr.mxu0 0.0
    %3637 = vmatpush1.msra.mxu0 0.0
    %3638 = vmatprep.subr.mxu0 0.0
    %3639 = vmatpush1.msra.mxu0 0.0
    %3640 = vmatprep.subr.mxu0 0.0
    %3641 = vmatpush1.msra.mxu0 0.0
    %3642 = vmatprep.subr.mxu0 0.0
    %3643 = vmatpush1.msra.mxu0 0.0
    %3644 = vmatprep.subr.mxu0 0.0
    %3645 = vmatpush1.msra.mxu0 0.0
    %3646 = vmatprep.subr.mxu0 0.0
    %3647 = vmatpush1.msra.mxu0 0.0
    %3648 = vmatprep.subr.mxu0 0.0
    %3649 = vmatpush1.msra.mxu0 0.0
    %3650 = vmatprep.subr.mxu0 0.0
    %3651 = vmatpush1.msra.mxu0 0.0
    %3652 = vmatprep.subr.mxu0 0.0
    %3653 = vmatpush1.msra.mxu0 0.0
    %3654 = vmatprep.subr.mxu0 0.0
    %3655 = vmatpush1.msra.mxu0 0.0
    %3656 = vmatprep.subr.mxu0 0.0
    %3657 = vmatpush1.msra.mxu0 0.0
    %3658 = vmatprep.subr.mxu0 0.0
    %3659 = vmatpush1.msra.mxu0 0.0
    %3660 = vmatprep.subr.mxu0 0.0
    %3661 = vmatpush1.msra.mxu0 0.0
    %3662 = vmatprep.subr.mxu0 0.0
    %3663 = vmatpush1.msra.mxu0 0.0
    %3664 = vmatprep.subr.mxu0 0.0
    %3665 = vmatpush1.msra.mxu0 0.0
    %3666 = vmatprep.subr.mxu0 0.0
    %3667 = vmatpush1.msra.mxu0 0.0
    %3668 = vmatprep.subr.mxu0 0.0
    %3669 = vmatpush1.msra.mxu0 0.0
    %3670 = vmatprep.subr.mxu0 0.0
    %3671 = vmatpush1.msra.mxu0 0.0
    %3672 = vmatprep.subr.mxu0 0.0
    %3673 = vmatpush1.msra.mxu0 0.0
    %3674 = vmatprep.subr.mxu0 0.0
    %3675 = vmatpush1.msra.mxu0 0.0
    %3676 = vmatprep.mubr.f32.mxu0 0.0
    %3677 = vmatmul.mubr.f32.gmra.mrb[0].mxu0 %v3530
    %v3678 = vpop.f32.mrb[0].mxu0
    %v3679 = vadd.f32 0.0, %v3678
    %v3680 = vpop.f32.mrb[0].mxu0
    %3681 = vmatprep.mubr.f32.mxu0 0.0
    %3682 = vmatmul.mubr.f32.gmra.mrb[0].mxu0 %v3533
    %v3683 = vpop.f32.mrb[0].mxu0
    %v3684 = vadd.f32 0.0, %v3683
    %v3685 = vpop.f32.mrb[0].mxu0
    %3686 = vdwg.mxu0
    %s3687 = scalar_lea.vmem %s5, 2304
    %v3688 = vld [vmem:[%s3687] sm:$0xff]
    %v3689 = vld [vmem:[%s3687 + $0x8] sm:$0xff]
    %v3690 = vld [vmem:[%s3687 + $0x10] sm:$0xff]
    %v3691 = vld [vmem:[%s3687 + $0x18] sm:$0xff]
    %v3692 = vld [vmem:[%s3687 + $0x20] sm:$0xff]
    %v3693 = vld [vmem:[%s3687 + $0x28] sm:$0xff]
    %v3694 = vld [vmem:[%s3687 + $0x30] sm:$0xff]
    %v3695 = vld [vmem:[%s3687 + $0x38] sm:$0xff]
    %v3696 = vld [vmem:[%s3687 + $0x40] sm:$0xff]
    %v3697 = vld [vmem:[%s3687 + $0x48] sm:$0xff]
    %v3698 = vld [vmem:[%s3687 + $0x50] sm:$0xff]
    %v3699 = vld [vmem:[%s3687 + $0x58] sm:$0xff]
    %v3700 = vld [vmem:[%s3687 + $0x60] sm:$0xff]
    %v3701 = vld [vmem:[%s3687 + $0x68] sm:$0xff]
    %v3702 = vld [vmem:[%s3687 + $0x70] sm:$0xff]
    %v3703 = vld [vmem:[%s3687 + $0x78] sm:$0xff]
    %v3704 = vld [vmem:[%s3687 + $0x80] sm:$0xff]
    %v3705 = vld [vmem:[%s3687 + $0x88] sm:$0xff]
    %v3706 = vld [vmem:[%s3687 + $0x90] sm:$0xff]
    %v3707 = vld [vmem:[%s3687 + $0x98] sm:$0xff]
    %v3708 = vld [vmem:[%s3687 + $0xa0] sm:$0xff]
    %v3709 = vld [vmem:[%s3687 + $0xa8] sm:$0xff]
    %v3710 = vld [vmem:[%s3687 + $0xb0] sm:$0xff]
    %v3711 = vld [vmem:[%s3687 + $0xb8] sm:$0xff]
    %v3712 = vld [vmem:[%s3687 + $0xc0] sm:$0xff]
    %v3713 = vld [vmem:[%s3687 + $0xc8] sm:$0xff]
    %v3714 = vld [vmem:[%s3687 + $0xd0] sm:$0xff]
    %v3715 = vld [vmem:[%s3687 + $0xd8] sm:$0xff]
    %v3716 = vld [vmem:[%s3687 + $0xe0] sm:$0xff]
    %v3717 = vld [vmem:[%s3687 + $0xe8] sm:$0xff]
    %v3718 = vld [vmem:[%s3687 + $0xf0] sm:$0xff]
    %v3719 = vld [vmem:[%s3687 + $0xf8] sm:$0xff]
    %v3720 = vld [vmem:[%s3687 + $0x100] sm:$0xff]
    %v3721 = vld [vmem:[%s3687 + $0x108] sm:$0xff]
    %v3722 = vld [vmem:[%s3687 + $0x110] sm:$0xff]
    %v3723 = vld [vmem:[%s3687 + $0x118] sm:$0xff]
    %v3724 = vld [vmem:[%s3687 + $0x120] sm:$0xff]
    %v3725 = vld [vmem:[%s3687 + $0x128] sm:$0xff]
    %v3726 = vld [vmem:[%s3687 + $0x130] sm:$0xff]
    %v3727 = vld [vmem:[%s3687 + $0x138] sm:$0xff]
    %v3728 = vld [vmem:[%s3687 + $0x140] sm:$0xff]
    %v3729 = vld [vmem:[%s3687 + $0x148] sm:$0xff]
    %v3730 = vld [vmem:[%s3687 + $0x150] sm:$0xff]
    %v3731 = vld [vmem:[%s3687 + $0x158] sm:$0xff]
    %v3732 = vld [vmem:[%s3687 + $0x160] sm:$0xff]
    %v3733 = vld [vmem:[%s3687 + $0x168] sm:$0xff]
    %v3734 = vld [vmem:[%s3687 + $0x170] sm:$0xff]
    %v3735 = vld [vmem:[%s3687 + $0x178] sm:$0xff]
    %v3736 = vld [vmem:[%s3687 + $0x180] sm:$0xff]
    %v3737 = vld [vmem:[%s3687 + $0x188] sm:$0xff]
    %v3738 = vld [vmem:[%s3687 + $0x190] sm:$0xff]
    %v3739 = vld [vmem:[%s3687 + $0x198] sm:$0xff]
    %v3740 = vld [vmem:[%s3687 + $0x1a0] sm:$0xff]
    %v3741 = vld [vmem:[%s3687 + $0x1a8] sm:$0xff]
    %v3742 = vld [vmem:[%s3687 + $0x1b0] sm:$0xff]
    %v3743 = vld [vmem:[%s3687 + $0x1b8] sm:$0xff]
    %v3744 = vld [vmem:[%s3687 + $0x1c0] sm:$0xff]
    %v3745 = vld [vmem:[%s3687 + $0x1c8] sm:$0xff]
    %v3746 = vld [vmem:[%s3687 + $0x1d0] sm:$0xff]
    %v3747 = vld [vmem:[%s3687 + $0x1d8] sm:$0xff]
    %v3748 = vld [vmem:[%s3687 + $0x1e0] sm:$0xff]
    %v3749 = vld [vmem:[%s3687 + $0x1e8] sm:$0xff]
    %v3750 = vld [vmem:[%s3687 + $0x1f0] sm:$0xff]
    %v3751 = vld [vmem:[%s3687 + $0x1f8] sm:$0xff]
    %v3752 = vld [vmem:[%s3687 + $0x200] sm:$0xff]
    %v3753 = vld [vmem:[%s3687 + $0x208] sm:$0xff]
    %v3754 = vld [vmem:[%s3687 + $0x210] sm:$0xff]
    %v3755 = vld [vmem:[%s3687 + $0x218] sm:$0xff]
    %v3756 = vld [vmem:[%s3687 + $0x220] sm:$0xff]
    %v3757 = vld [vmem:[%s3687 + $0x228] sm:$0xff]
    %v3758 = vld [vmem:[%s3687 + $0x230] sm:$0xff]
    %v3759 = vld [vmem:[%s3687 + $0x238] sm:$0xff]
    %v3761 = vsel %vm2409, %v3679, 0
    %v3764 = vsel %vm2409, %v3684, 0
    %3766 = vmatprep.subr.mxu0 %v3689
    %3767 = vmatpush1.msra.mxu0 %v3688
    %3768 = vmatprep.subr.mxu0 %v3691
    %3769 = vmatpush1.msra.mxu0 %v3690
    %3770 = vmatprep.subr.mxu0 %v3693
    %3771 = vmatpush1.msra.mxu0 %v3692
    %3772 = vmatprep.subr.mxu0 %v3695
    %3773 = vmatpush1.msra.mxu0 %v3694
    %3774 = vmatprep.subr.mxu0 %v3697
    %3775 = vmatpush1.msra.mxu0 %v3696
    %3776 = vmatprep.subr.mxu0 %v3699
    %3777 = vmatpush1.msra.mxu0 %v3698
    %3778 = vmatprep.subr.mxu0 %v3701
    %3779 = vmatpush1.msra.mxu0 %v3700
    %3780 = vmatprep.subr.mxu0 %v3703
    %3781 = vmatpush1.msra.mxu0 %v3702
    %3782 = vmatprep.subr.mxu0 %v3705
    %3783 = vmatpush1.msra.mxu0 %v3704
    %3784 = vmatprep.subr.mxu0 %v3707
    %3785 = vmatpush1.msra.mxu0 %v3706
    %3786 = vmatprep.subr.mxu0 %v3709
    %3787 = vmatpush1.msra.mxu0 %v3708
    %3788 = vmatprep.subr.mxu0 %v3711
    %3789 = vmatpush1.msra.mxu0 %v3710
    %3790 = vmatprep.subr.mxu0 %v3713
    %3791 = vmatpush1.msra.mxu0 %v3712
    %3792 = vmatprep.subr.mxu0 %v3715
    %3793 = vmatpush1.msra.mxu0 %v3714
    %3794 = vmatprep.subr.mxu0 %v3717
    %3795 = vmatpush1.msra.mxu0 %v3716
    %3796 = vmatprep.subr.mxu0 %v3719
    %3797 = vmatpush1.msra.mxu0 %v3718
    %3798 = vmatprep.subr.mxu0 %v3721
    %3799 = vmatpush1.msra.mxu0 %v3720
    %3800 = vmatprep.subr.mxu0 %v3723
    %3801 = vmatpush1.msra.mxu0 %v3722
    %3802 = vmatprep.subr.mxu0 %v3725
    %3803 = vmatpush1.msra.mxu0 %v3724
    %3804 = vmatprep.subr.mxu0 %v3727
    %3805 = vmatpush1.msra.mxu0 %v3726
    %3806 = vmatprep.subr.mxu0 %v3729
    %3807 = vmatpush1.msra.mxu0 %v3728
    %3808 = vmatprep.subr.mxu0 %v3731
    %3809 = vmatpush1.msra.mxu0 %v3730
    %3810 = vmatprep.subr.mxu0 %v3733
    %3811 = vmatpush1.msra.mxu0 %v3732
    %3812 = vmatprep.subr.mxu0 %v3735
    %3813 = vmatpush1.msra.mxu0 %v3734
    %3814 = vmatprep.subr.mxu0 %v3737
    %3815 = vmatpush1.msra.mxu0 %v3736
    %3816 = vmatprep.subr.mxu0 %v3739
    %3817 = vmatpush1.msra.mxu0 %v3738
    %3818 = vmatprep.subr.mxu0 %v3741
    %3819 = vmatpush1.msra.mxu0 %v3740
    %3820 = vmatprep.subr.mxu0 %v3743
    %3821 = vmatpush1.msra.mxu0 %v3742
    %3822 = vmatprep.subr.mxu0 %v3745
    %3823 = vmatpush1.msra.mxu0 %v3744
    %3824 = vmatprep.subr.mxu0 %v3747
    %3825 = vmatpush1.msra.mxu0 %v3746
    %3826 = vmatprep.subr.mxu0 %v3749
    %3827 = vmatpush1.msra.mxu0 %v3748
    %3828 = vmatprep.subr.mxu0 %v3751
    %3829 = vmatpush1.msra.mxu0 %v3750
    %3830 = vmatprep.mubr.f32.mxu0 %v3604
    %3831 = vmatmul.mubr.f32.gmra.mrb[0].mxu0 %v3602
    %v3832 = vpop.f32.mrb[0].mxu0
    %v3833 = vadd.f32 0.0, %v3832
    %v3834 = vpop.f32.mrb[0].mxu0
    %v3835 = vadd.f32 0.0, %v3834
    %3836 = vmatprep.mubr.f32.mxu0 %v3610
    %3837 = vmatmul.mubr.f32.gmra.mrb[0].mxu0 %v3608
    %v3838 = vpop.f32.mrb[0].mxu0
    %v3839 = vadd.f32 0.0, %v3838
    %v3840 = vpop.f32.mrb[0].mxu0
    %v3841 = vadd.f32 0.0, %v3840
    %3842 = vdwg.mxu0
    %3843 = vmatprep.subr.mxu0 %v3753
    %3844 = vmatpush1.msra.mxu0 %v3752
    %3845 = vmatprep.subr.mxu0 %v3755
    %3846 = vmatpush1.msra.mxu0 %v3754
    %3847 = vmatprep.subr.mxu0 %v3757
    %3848 = vmatpush1.msra.mxu0 %v3756
    %3849 = vmatprep.subr.mxu0 %v3759
    %3850 = vmatpush1.msra.mxu0 %v3758
    %3851 = vmatprep.subr.mxu0 0.0
    %3852 = vmatpush1.msra.mxu0 0.0
    %3853 = vmatprep.subr.mxu0 0.0
    %3854 = vmatpush1.msra.mxu0 0.0
    %3855 = vmatprep.subr.mxu0 0.0
    %3856 = vmatpush1.msra.mxu0 0.0
    %3857 = vmatprep.subr.mxu0 0.0
    %3858 = vmatpush1.msra.mxu0 0.0
    %3859 = vmatprep.subr.mxu0 0.0
    %3860 = vmatpush1.msra.mxu0 0.0
    %3861 = vmatprep.subr.mxu0 0.0
    %3862 = vmatpush1.msra.mxu0 0.0
    %3863 = vmatprep.subr.mxu0 0.0
    %3864 = vmatpush1.msra.mxu0 0.0
    %3865 = vmatprep.subr.mxu0 0.0
    %3866 = vmatpush1.msra.mxu0 0.0
    %3867 = vmatprep.subr.mxu0 0.0
    %3868 = vmatpush1.msra.mxu0 0.0
    %3869 = vmatprep.subr.mxu0 0.0
    %3870 = vmatpush1.msra.mxu0 0.0
    %3871 = vmatprep.subr.mxu0 0.0
    %3872 = vmatpush1.msra.mxu0 0.0
    %3873 = vmatprep.subr.mxu0 0.0
    %3874 = vmatpush1.msra.mxu0 0.0
    %3875 = vmatprep.subr.mxu0 0.0
    %3876 = vmatpush1.msra.mxu0 0.0
    %3877 = vmatprep.subr.mxu0 0.0
    %3878 = vmatpush1.msra.mxu0 0.0
    %3879 = vmatprep.subr.mxu0 0.0
    %3880 = vmatpush1.msra.mxu0 0.0
    %3881 = vmatprep.subr.mxu0 0.0
    %3882 = vmatpush1.msra.mxu0 0.0
    %3883 = vmatprep.subr.mxu0 0.0
    %3884 = vmatpush1.msra.mxu0 0.0
    %3885 = vmatprep.subr.mxu0 0.0
    %3886 = vmatpush1.msra.mxu0 0.0
    %3887 = vmatprep.subr.mxu0 0.0
    %3888 = vmatpush1.msra.mxu0 0.0
    %3889 = vmatprep.subr.mxu0 0.0
    %3890 = vmatpush1.msra.mxu0 0.0
    %3891 = vmatprep.subr.mxu0 0.0
    %3892 = vmatpush1.msra.mxu0 0.0
    %3893 = vmatprep.subr.mxu0 0.0
    %3894 = vmatpush1.msra.mxu0 0.0
    %3895 = vmatprep.subr.mxu0 0.0
    %3896 = vmatpush1.msra.mxu0 0.0
    %3897 = vmatprep.subr.mxu0 0.0
    %3898 = vmatpush1.msra.mxu0 0.0
    %3899 = vmatprep.subr.mxu0 0.0
    %3900 = vmatpush1.msra.mxu0 0.0
    %3901 = vmatprep.subr.mxu0 0.0
    %3902 = vmatpush1.msra.mxu0 0.0
    %3903 = vmatprep.subr.mxu0 0.0
    %3904 = vmatpush1.msra.mxu0 0.0
    %3905 = vmatprep.subr.mxu0 0.0
    %3906 = vmatpush1.msra.mxu0 0.0
    %3907 = vmatprep.mubr.f32.mxu0 0.0
    %3908 = vmatmul.mubr.f32.gmra.mrb[0].mxu0 %v3761
    %v3909 = vpop.f32.mrb[0].mxu0
    %v3910 = vadd.f32 %v3833, %v3909
    %v3911 = vpop.f32.mrb[0].mxu0
    %v3912 = vadd.f32 %v3835, %v3911
    %3913 = vmatprep.mubr.f32.mxu0 0.0
    %3914 = vmatmul.mubr.f32.gmra.mrb[0].mxu0 %v3764
    %v3915 = vpop.f32.mrb[0].mxu0
    %v3916 = vadd.f32 %v3839, %v3915
    %v3917 = vpop.f32.mrb[0].mxu0
    %v3918 = vadd.f32 %v3841, %v3917
    %3919 = vdwg.mxu0
    %v3920 = vadd.f32 %v3522, %v3910
    %v3921 = vadd.f32 %v3523, %v3912
    %v3922 = vadd.f32 %v3524, %v3916
    %v3923 = vadd.f32 %v3525, %v3918
    %v3924 = vld [vmem:[%s6] sm:$0x3]
    %v3926 = vlaneseq
    %v3927 = vshrl.u32 %v3926, 7
    %v3928 = vsub.s32 0, %v3927
    %v3929 = vrot.slane %v3924, %v3928
    %v3930 = vlaneseq
    %v3931 = vshrl.u32 %v3930, 7
    %v3932 = vsub.s32 1, %v3931
    %v3933 = vrot.slane %v3924, %v3932
    %v3936 = vadd.f32 %v3920, %v3929
    %v3937 = vadd.f32 %v3921, %v3933
    %v3938 = vadd.f32 %v3922, %v3929
    %v3939 = vadd.f32 %v3923, %v3933
    %v3940 = vmax.f32 %v3936, 0.0
    %v3941 = vmax.f32 %v3937, 0.0
    %v3942 = vmax.f32 %v3938, 0.0
    %v3943 = vmax.f32 %v3939, 0.0
    %v3944 = vld [vmem:[%s7] sm:$0xf]
    %vm3945 = vcmask 113664
    %v3947 = vsel %vm3945, %v3944, 0
    %vm3949 = vcmask 1045504
    %v3951 = vsel %vm3949, %v3942, 0
    %v3954 = vsel %vm3949, %v3943, 0
    %3956 = vmatprep.subr.mxu0 %v3941
    %3957 = vmatpush1.msra.mxu0 %v3940
    %3958 = vmatprep.subr.mxu0 %v3954
    %3959 = vmatpush1.msra.mxu0 %v3951
    %3960 = vmatprep.subr.mxu0 0.0
    %3961 = vmatpush1.msra.mxu0 0.0
    %3962 = vmatprep.subr.mxu0 0.0
    %3963 = vmatpush1.msra.mxu0 0.0
    %3964 = vmatprep.subr.mxu0 0.0
    %3965 = vmatpush1.msra.mxu0 0.0
    %3966 = vmatprep.subr.mxu0 0.0
    %3967 = vmatpush1.msra.mxu0 0.0
    %3968 = vmatprep.subr.mxu0 0.0
    %3969 = vmatpush1.msra.mxu0 0.0
    %3970 = vmatprep.subr.mxu0 0.0
    %3971 = vmatpush1.msra.mxu0 0.0
    %3972 = vmatprep.subr.mxu0 0.0
    %3973 = vmatpush1.msra.mxu0 0.0
    %3974 = vmatprep.subr.mxu0 0.0
    %3975 = vmatpush1.msra.mxu0 0.0
    %3976 = vmatprep.subr.mxu0 0.0
    %3977 = vmatpush1.msra.mxu0 0.0
    %3978 = vmatprep.subr.mxu0 0.0
    %3979 = vmatpush1.msra.mxu0 0.0
    %3980 = vmatprep.subr.mxu0 0.0
    %3981 = vmatpush1.msra.mxu0 0.0
    %3982 = vmatprep.subr.mxu0 0.0
    %3983 = vmatpush1.msra.mxu0 0.0
    %3984 = vmatprep.subr.mxu0 0.0
    %3985 = vmatpush1.msra.mxu0 0.0
    %3986 = vmatprep.subr.mxu0 0.0
    %3987 = vmatpush1.msra.mxu0 0.0
    %3988 = vmatprep.subr.mxu0 0.0
    %3989 = vmatpush1.msra.mxu0 0.0
    %3990 = vmatprep.subr.mxu0 0.0
    %3991 = vmatpush1.msra.mxu0 0.0
    %3992 = vmatprep.subr.mxu0 0.0
    %3993 = vmatpush1.msra.mxu0 0.0
    %3994 = vmatprep.subr.mxu0 0.0
    %3995 = vmatpush1.msra.mxu0 0.0
    %3996 = vmatprep.subr.mxu0 0.0
    %3997 = vmatpush1.msra.mxu0 0.0
    %3998 = vmatprep.subr.mxu0 0.0
    %3999 = vmatpush1.msra.mxu0 0.0
    %4000 = vmatprep.subr.mxu0 0.0
    %4001 = vmatpush1.msra.mxu0 0.0
    %4002 = vmatprep.subr.mxu0 0.0
    %4003 = vmatpush1.msra.mxu0 0.0
    %4004 = vmatprep.subr.mxu0 0.0
    %4005 = vmatpush1.msra.mxu0 0.0
    %4006 = vmatprep.subr.mxu0 0.0
    %4007 = vmatpush1.msra.mxu0 0.0
    %4008 = vmatprep.subr.mxu0 0.0
    %4009 = vmatpush1.msra.mxu0 0.0
    %4010 = vmatprep.subr.mxu0 0.0
    %4011 = vmatpush1.msra.mxu0 0.0
    %4012 = vmatprep.subr.mxu0 0.0
    %4013 = vmatpush1.msra.mxu0 0.0
    %4014 = vmatprep.subr.mxu0 0.0
    %4015 = vmatpush1.msra.mxu0 0.0
    %4016 = vmatprep.subr.mxu0 0.0
    %4017 = vmatpush1.msra.mxu0 0.0
    %4018 = vmatprep.subr.mxu0 0.0
    %4019 = vmatpush1.msra.mxu0 0.0
    %4020 = vmatprep.mubr.f32.mxu0 0.0
    %4021 = vmatmul.mubr.f32.gmra.mrb[0].mxu0 %v3947
    %v4022 = vpop.f32.mrb[0].mxu0
    %v4023 = vadd.f32 0.0, %v4022
    %v4024 = vpop.f32.mrb[0].mxu0
    %v4025 = vadd.f32 0.0, %v4024
    %4026 = vdwg.mxu0
    %v4027 = vld [vmem:[%s8] sm:$0xff]
    %v4028 = vld [vmem:[%s8 + $0x8] sm:$0xff]
    %v4029 = vld [vmem:[%s8 + $0x10] sm:$0xff]
    %v4030 = vld [vmem:[%s8 + $0x18] sm:$0xff]
    %v4031 = vld [vmem:[%s8 + $0x20] sm:$0xff]
    %v4032 = vld [vmem:[%s8 + $0x28] sm:$0xff]
    %v4033 = vld [vmem:[%s8 + $0x30] sm:$0xff]
    %v4034 = vld [vmem:[%s8 + $0x38] sm:$0xff]
    %v4035 = vld [vmem:[%s8 + $0x40] sm:$0xff]
    %v4036 = vld [vmem:[%s8 + $0x48] sm:$0xff]
    %v4037 = vld [vmem:[%s8 + $0x50] sm:$0xff]
    %v4038 = vld [vmem:[%s8 + $0x58] sm:$0xff]
    %v4039 = vld [vmem:[%s8 + $0x60] sm:$0xff]
    %v4040 = vld [vmem:[%s8 + $0x68] sm:$0xff]
    %v4041 = vld [vmem:[%s8 + $0x70] sm:$0xff]
    %v4042 = vld [vmem:[%s8 + $0x78] sm:$0xff]
    %v4043 = vld [vmem:[%s8 + $0x80] sm:$0xff]
    %v4044 = vld [vmem:[%s8 + $0x88] sm:$0xff]
    %v4045 = vld [vmem:[%s8 + $0x90] sm:$0xff]
    %v4046 = vld [vmem:[%s8 + $0x98] sm:$0xff]
    %v4047 = vld [vmem:[%s8 + $0xa0] sm:$0xff]
    %v4048 = vld [vmem:[%s8 + $0xa8] sm:$0xff]
    %v4049 = vld [vmem:[%s8 + $0xb0] sm:$0xff]
    %v4050 = vld [vmem:[%s8 + $0xb8] sm:$0xff]
    %v4051 = vld [vmem:[%s8 + $0xc0] sm:$0xff]
    %v4052 = vld [vmem:[%s8 + $0xc8] sm:$0xff]
    %v4053 = vld [vmem:[%s8 + $0xd0] sm:$0xff]
    %v4054 = vld [vmem:[%s8 + $0xd8] sm:$0xff]
    %s4055 = scalar_lea.vmem %s7, 4
    %v4056 = vld [vmem:[%s4055] sm:$0xf]
    %v4058 = vsel %vm3945, %v4056, 0
    %4060 = vmatprep.subr.mxu0 %v3941
    %4061 = vmatpush1.msra.mxu0 %v3940
    %4062 = vmatprep.subr.mxu0 %v3954
    %4063 = vmatpush1.msra.mxu0 %v3951
    %4064 = vmatprep.subr.mxu0 0.0
    %4065 = vmatpush1.msra.mxu0 0.0
    %4066 = vmatprep.subr.mxu0 0.0
    %4067 = vmatpush1.msra.mxu0 0.0
    %4068 = vmatprep.subr.mxu0 0.0
    %4069 = vmatpush1.msra.mxu0 0.0
    %4070 = vmatprep.subr.mxu0 0.0
    %4071 = vmatpush1.msra.mxu0 0.0
    %4072 = vmatprep.subr.mxu0 0.0
    %4073 = vmatpush1.msra.mxu0 0.0
    %4074 = vmatprep.subr.mxu0 0.0
    %4075 = vmatpush1.msra.mxu0 0.0
    %4076 = vmatprep.subr.mxu0 0.0
    %4077 = vmatpush1.msra.mxu0 0.0
    %4078 = vmatprep.subr.mxu0 0.0
    %4079 = vmatpush1.msra.mxu0 0.0
    %4080 = vmatprep.subr.mxu0 0.0
    %4081 = vmatpush1.msra.mxu0 0.0
    %4082 = vmatprep.subr.mxu0 0.0
    %4083 = vmatpush1.msra.mxu0 0.0
    %4084 = vmatprep.subr.mxu0 0.0
    %4085 = vmatpush1.msra.mxu0 0.0
    %4086 = vmatprep.subr.mxu0 0.0
    %4087 = vmatpush1.msra.mxu0 0.0
    %4088 = vmatprep.subr.mxu0 0.0
    %4089 = vmatpush1.msra.mxu0 0.0
    %4090 = vmatprep.subr.mxu0 0.0
    %4091 = vmatpush1.msra.mxu0 0.0
    %4092 = vmatprep.subr.mxu0 0.0
    %4093 = vmatpush1.msra.mxu0 0.0
    %4094 = vmatprep.subr.mxu0 0.0
    %4095 = vmatpush1.msra.mxu0 0.0
    %4096 = vmatprep.subr.mxu0 0.0
    %4097 = vmatpush1.msra.mxu0 0.0
    %4098 = vmatprep.subr.mxu0 0.0
    %4099 = vmatpush1.msra.mxu0 0.0
    %4100 = vmatprep.subr.mxu0 0.0
    %4101 = vmatpush1.msra.mxu0 0.0
    %4102 = vmatprep.subr.mxu0 0.0
    %4103 = vmatpush1.msra.mxu0 0.0
    %4104 = vmatprep.subr.mxu0 0.0
    %4105 = vmatpush1.msra.mxu0 0.0
    %4106 = vmatprep.subr.mxu0 0.0
    %4107 = vmatpush1.msra.mxu0 0.0
    %4108 = vmatprep.subr.mxu0 0.0
    %4109 = vmatpush1.msra.mxu0 0.0
    %4110 = vmatprep.subr.mxu0 0.0
    %4111 = vmatpush1.msra.mxu0 0.0
    %4112 = vmatprep.subr.mxu0 0.0
    %4113 = vmatpush1.msra.mxu0 0.0
    %4114 = vmatprep.subr.mxu0 0.0
    %4115 = vmatpush1.msra.mxu0 0.0
    %4116 = vmatprep.subr.mxu0 0.0
    %4117 = vmatpush1.msra.mxu0 0.0
    %4118 = vmatprep.subr.mxu0 0.0
    %4119 = vmatpush1.msra.mxu0 0.0
    %4120 = vmatprep.subr.mxu0 0.0
    %4121 = vmatpush1.msra.mxu0 0.0
    %4122 = vmatprep.subr.mxu0 0.0
    %4123 = vmatpush1.msra.mxu0 0.0
    %4124 = vmatprep.mubr.f32.mxu0 0.0
    %4125 = vmatmul.mubr.f32.gmra.mrb[0].mxu0 %v4058
    %v4126 = vpop.f32.mrb[0].mxu0
    %v4127 = vadd.f32 0.0, %v4126
    %v4128 = vpop.f32.mrb[0].mxu0
    %v4129 = vadd.f32 0.0, %v4128
    %4130 = vdwg.mxu0
    %s4131 = scalar_lea.vmem %s8, 224
    %v4132 = vld [vmem:[%s4131] sm:$0xff]
    %v4133 = vld [vmem:[%s4131 + $0x8] sm:$0xff]
    %v4134 = vld [vmem:[%s4131 + $0x10] sm:$0xff]
    %v4135 = vld [vmem:[%s4131 + $0x18] sm:$0xff]
    %v4136 = vld [vmem:[%s4131 + $0x20] sm:$0xff]
    %v4137 = vld [vmem:[%s4131 + $0x28] sm:$0xff]
    %v4138 = vld [vmem:[%s4131 + $0x30] sm:$0xff]
    %v4139 = vld [vmem:[%s4131 + $0x38] sm:$0xff]
    %v4140 = vld [vmem:[%s4131 + $0x40] sm:$0xff]
    %v4141 = vld [vmem:[%s4131 + $0x48] sm:$0xff]
    %v4142 = vld [vmem:[%s4131 + $0x50] sm:$0xff]
    %v4143 = vld [vmem:[%s4131 + $0x58] sm:$0xff]
    %v4144 = vld [vmem:[%s4131 + $0x60] sm:$0xff]
    %v4145 = vld [vmem:[%s4131 + $0x68] sm:$0xff]
    %v4146 = vld [vmem:[%s4131 + $0x70] sm:$0xff]
    %v4147 = vld [vmem:[%s4131 + $0x78] sm:$0xff]
    %v4148 = vld [vmem:[%s4131 + $0x80] sm:$0xff]
    %v4149 = vld [vmem:[%s4131 + $0x88] sm:$0xff]
    %v4150 = vld [vmem:[%s4131 + $0x90] sm:$0xff]
    %v4151 = vld [vmem:[%s4131 + $0x98] sm:$0xff]
    %v4152 = vld [vmem:[%s4131 + $0xa0] sm:$0xff]
    %v4153 = vld [vmem:[%s4131 + $0xa8] sm:$0xff]
    %v4154 = vld [vmem:[%s4131 + $0xb0] sm:$0xff]
    %v4155 = vld [vmem:[%s4131 + $0xb8] sm:$0xff]
    %v4156 = vld [vmem:[%s4131 + $0xc0] sm:$0xff]
    %v4157 = vld [vmem:[%s4131 + $0xc8] sm:$0xff]
    %v4158 = vld [vmem:[%s4131 + $0xd0] sm:$0xff]
    %v4159 = vld [vmem:[%s4131 + $0xd8] sm:$0xff]
    %vm4160 = vcmask 785408
    %v4162 = vsel %vm4160, %v4129, 0
    %4164 = vmatprep.subr.mxu0 0.0
    %4165 = vmatpush1.msra.mxu0 %v4132
    %4166 = vmatprep.subr.mxu0 0.0
    %4167 = vmatpush1.msra.mxu0 %v4133
    %4168 = vmatprep.subr.mxu0 0.0
    %4169 = vmatpush1.msra.mxu0 %v4134
    %4170 = vmatprep.subr.mxu0 0.0
    %4171 = vmatpush1.msra.mxu0 %v4135
    %4172 = vmatprep.subr.mxu0 0.0
    %4173 = vmatpush1.msra.mxu0 %v4136
    %4174 = vmatprep.subr.mxu0 0.0
    %4175 = vmatpush1.msra.mxu0 %v4137
    %4176 = vmatprep.subr.mxu0 0.0
    %4177 = vmatpush1.msra.mxu0 %v4138
    %4178 = vmatprep.subr.mxu0 0.0
    %4179 = vmatpush1.msra.mxu0 %v4139
    %4180 = vmatprep.subr.mxu0 0.0
    %4181 = vmatpush1.msra.mxu0 %v4140
    %4182 = vmatprep.subr.mxu0 0.0
    %4183 = vmatpush1.msra.mxu0 %v4141
    %4184 = vmatprep.subr.mxu0 0.0
    %4185 = vmatpush1.msra.mxu0 %v4142
    %4186 = vmatprep.subr.mxu0 0.0
    %4187 = vmatpush1.msra.mxu0 %v4143
    %4188 = vmatprep.subr.mxu0 0.0
    %4189 = vmatpush1.msra.mxu0 %v4144
    %4190 = vmatprep.subr.mxu0 0.0
    %4191 = vmatpush1.msra.mxu0 %v4145
    %4192 = vmatprep.subr.mxu0 0.0
    %4193 = vmatpush1.msra.mxu0 %v4146
    %4194 = vmatprep.subr.mxu0 0.0
    %4195 = vmatpush1.msra.mxu0 %v4147
    %4196 = vmatprep.subr.mxu0 0.0
    %4197 = vmatpush1.msra.mxu0 %v4148
    %4198 = vmatprep.subr.mxu0 0.0
    %4199 = vmatpush1.msra.mxu0 %v4149
    %4200 = vmatprep.subr.mxu0 0.0
    %4201 = vmatpush1.msra.mxu0 %v4150
    %4202 = vmatprep.subr.mxu0 0.0
    %4203 = vmatpush1.msra.mxu0 %v4151
    %4204 = vmatprep.subr.mxu0 0.0
    %4205 = vmatpush1.msra.mxu0 %v4152
    %4206 = vmatprep.subr.mxu0 0.0
    %4207 = vmatpush1.msra.mxu0 %v4153
    %4208 = vmatprep.subr.mxu0 0.0
    %4209 = vmatpush1.msra.mxu0 %v4154
    %4210 = vmatprep.subr.mxu0 0.0
    %4211 = vmatpush1.msra.mxu0 %v4155
    %4212 = vmatprep.subr.mxu0 0.0
    %4213 = vmatpush1.msra.mxu0 %v4156
    %4214 = vmatprep.subr.mxu0 0.0
    %4215 = vmatpush1.msra.mxu0 %v4157
    %4216 = vmatprep.subr.mxu0 0.0
    %4217 = vmatpush1.msra.mxu0 %v4158
    %4218 = vmatprep.subr.mxu0 0.0
    %4219 = vmatpush1.msra.mxu0 %v4159
    %4220 = vmatprep.subr.mxu0 0.0
    %4221 = vmatpush1.msra.mxu0 0.0
    %4222 = vmatprep.subr.mxu0 0.0
    %4223 = vmatpush1.msra.mxu0 0.0
    %4224 = vmatprep.subr.mxu0 0.0
    %4225 = vmatpush1.msra.mxu0 0.0
    %4226 = vmatprep.subr.mxu0 0.0
    %4227 = vmatpush1.msra.mxu0 0.0
    %4228 = vmatprep.mubr.f32.mxu0 %v4162
    %4229 = vmatmul.mubr.f32.gmra.mrb[0].mxu0 %v4127
    %v4230 = vpop.f32.mrb[0].mxu0
    %v4231 = vadd.f32 0.0, %v4230
    %v4232 = vpop.f32.mrb[0].mxu0
    %4233 = vdwg.mxu0
    %v4235 = vsel %vm4160, %v4025, 0
    %4237 = vmatprep.subr.mxu0 0.0
    %4238 = vmatpush1.msra.mxu0 %v4027
    %4239 = vmatprep.subr.mxu0 0.0
    %4240 = vmatpush1.msra.mxu0 %v4028
    %4241 = vmatprep.subr.mxu0 0.0
    %4242 = vmatpush1.msra.mxu0 %v4029
    %4243 = vmatprep.subr.mxu0 0.0
    %4244 = vmatpush1.msra.mxu0 %v4030
    %4245 = vmatprep.subr.mxu0 0.0
    %4246 = vmatpush1.msra.mxu0 %v4031
    %4247 = vmatprep.subr.mxu0 0.0
    %4248 = vmatpush1.msra.mxu0 %v4032
    %4249 = vmatprep.subr.mxu0 0.0
    %4250 = vmatpush1.msra.mxu0 %v4033
    %4251 = vmatprep.subr.mxu0 0.0
    %4252 = vmatpush1.msra.mxu0 %v4034
    %4253 = vmatprep.subr.mxu0 0.0
    %4254 = vmatpush1.msra.mxu0 %v4035
    %4255 = vmatprep.subr.mxu0 0.0
    %4256 = vmatpush1.msra.mxu0 %v4036
    %4257 = vmatprep.subr.mxu0 0.0
    %4258 = vmatpush1.msra.mxu0 %v4037
    %4259 = vmatprep.subr.mxu0 0.0
    %4260 = vmatpush1.msra.mxu0 %v4038
    %4261 = vmatprep.subr.mxu0 0.0
    %4262 = vmatpush1.msra.mxu0 %v4039
    %4263 = vmatprep.subr.mxu0 0.0
    %4264 = vmatpush1.msra.mxu0 %v4040
    %4265 = vmatprep.subr.mxu0 0.0
    %4266 = vmatpush1.msra.mxu0 %v4041
    %4267 = vmatprep.subr.mxu0 0.0
    %4268 = vmatpush1.msra.mxu0 %v4042
    %4269 = vmatprep.subr.mxu0 0.0
    %4270 = vmatpush1.msra.mxu0 %v4043
    %4271 = vmatprep.subr.mxu0 0.0
    %4272 = vmatpush1.msra.mxu0 %v4044
    %4273 = vmatprep.subr.mxu0 0.0
    %4274 = vmatpush1.msra.mxu0 %v4045
    %4275 = vmatprep.subr.mxu0 0.0
    %4276 = vmatpush1.msra.mxu0 %v4046
    %4277 = vmatprep.subr.mxu0 0.0
    %4278 = vmatpush1.msra.mxu0 %v4047
    %4279 = vmatprep.subr.mxu0 0.0
    %4280 = vmatpush1.msra.mxu0 %v4048
    %4281 = vmatprep.subr.mxu0 0.0
    %4282 = vmatpush1.msra.mxu0 %v4049
    %4283 = vmatprep.subr.mxu0 0.0
    %4284 = vmatpush1.msra.mxu0 %v4050
    %4285 = vmatprep.subr.mxu0 0.0
    %4286 = vmatpush1.msra.mxu0 %v4051
    %4287 = vmatprep.subr.mxu0 0.0
    %4288 = vmatpush1.msra.mxu0 %v4052
    %4289 = vmatprep.subr.mxu0 0.0
    %4290 = vmatpush1.msra.mxu0 %v4053
    %4291 = vmatprep.subr.mxu0 0.0
    %4292 = vmatpush1.msra.mxu0 %v4054
    %4293 = vmatprep.subr.mxu0 0.0
    %4294 = vmatpush1.msra.mxu0 0.0
    %4295 = vmatprep.subr.mxu0 0.0
    %4296 = vmatpush1.msra.mxu0 0.0
    %4297 = vmatprep.subr.mxu0 0.0
    %4298 = vmatpush1.msra.mxu0 0.0
    %4299 = vmatprep.subr.mxu0 0.0
    %4300 = vmatpush1.msra.mxu0 0.0
    %4301 = vmatprep.mubr.f32.mxu0 %v4235
    %4302 = vmatmul.mubr.f32.gmra.mrb[0].mxu0 %v4023
    %v4303 = vpop.f32.mrb[0].mxu0
    %v4304 = vadd.f32 %v4231, %v4303
    %v4305 = vpop.f32.mrb[0].mxu0
    %4306 = vdwg.mxu0
    %s4307 = scalar_lea.vmem %s7, 8
    %v4308 = vld [vmem:[%s4307] sm:$0xf]
    %v4310 = vsel %vm3945, %v4308, 0
    %4312 = vmatprep.subr.mxu0 %v3941
    %4313 = vmatpush1.msra.mxu0 %v3940
    %4314 = vmatprep.subr.mxu0 %v3954
    %4315 = vmatpush1.msra.mxu0 %v3951
    %4316 = vmatprep.subr.mxu0 0.0
    %4317 = vmatpush1.msra.mxu0 0.0
    %4318 = vmatprep.subr.mxu0 0.0
    %4319 = vmatpush1.msra.mxu0 0.0
    %4320 = vmatprep.subr.mxu0 0.0
    %4321 = vmatpush1.msra.mxu0 0.0
    %4322 = vmatprep.subr.mxu0 0.0
    %4323 = vmatpush1.msra.mxu0 0.0
    %4324 = vmatprep.subr.mxu0 0.0
    %4325 = vmatpush1.msra.mxu0 0.0
    %4326 = vmatprep.subr.mxu0 0.0
    %4327 = vmatpush1.msra.mxu0 0.0
    %4328 = vmatprep.subr.mxu0 0.0
    %4329 = vmatpush1.msra.mxu0 0.0
    %4330 = vmatprep.subr.mxu0 0.0
    %4331 = vmatpush1.msra.mxu0 0.0
    %4332 = vmatprep.subr.mxu0 0.0
    %4333 = vmatpush1.msra.mxu0 0.0
    %4334 = vmatprep.subr.mxu0 0.0
    %4335 = vmatpush1.msra.mxu0 0.0
    %4336 = vmatprep.subr.mxu0 0.0
    %4337 = vmatpush1.msra.mxu0 0.0
    %4338 = vmatprep.subr.mxu0 0.0
    %4339 = vmatpush1.msra.mxu0 0.0
    %4340 = vmatprep.subr.mxu0 0.0
    %4341 = vmatpush1.msra.mxu0 0.0
    %4342 = vmatprep.subr.mxu0 0.0
    %4343 = vmatpush1.msra.mxu0 0.0
    %4344 = vmatprep.subr.mxu0 0.0
    %4345 = vmatpush1.msra.mxu0 0.0
    %4346 = vmatprep.subr.mxu0 0.0
    %4347 = vmatpush1.msra.mxu0 0.0
    %4348 = vmatprep.subr.mxu0 0.0
    %4349 = vmatpush1.msra.mxu0 0.0
    %4350 = vmatprep.subr.mxu0 0.0
    %4351 = vmatpush1.msra.mxu0 0.0
    %4352 = vmatprep.subr.mxu0 0.0
    %4353 = vmatpush1.msra.mxu0 0.0
    %4354 = vmatprep.subr.mxu0 0.0
    %4355 = vmatpush1.msra.mxu0 0.0
    %4356 = vmatprep.subr.mxu0 0.0
    %4357 = vmatpush1.msra.mxu0 0.0
    %4358 = vmatprep.subr.mxu0 0.0
    %4359 = vmatpush1.msra.mxu0 0.0
    %4360 = vmatprep.subr.mxu0 0.0
    %4361 = vmatpush1.msra.mxu0 0.0
    %4362 = vmatprep.subr.mxu0 0.0
    %4363 = vmatpush1.msra.mxu0 0.0
    %4364 = vmatprep.subr.mxu0 0.0
    %4365 = vmatpush1.msra.mxu0 0.0
    %4366 = vmatprep.subr.mxu0 0.0
    %4367 = vmatpush1.msra.mxu0 0.0
    %4368 = vmatprep.subr.mxu0 0.0
    %4369 = vmatpush1.msra.mxu0 0.0
    %4370 = vmatprep.subr.mxu0 0.0
    %4371 = vmatpush1.msra.mxu0 0.0
    %4372 = vmatprep.subr.mxu0 0.0
    %4373 = vmatpush1.msra.mxu0 0.0
    %4374 = vmatprep.subr.mxu0 0.0
    %4375 = vmatpush1.msra.mxu0 0.0
    %4376 = vmatprep.mubr.f32.mxu0 0.0
    %4377 = vmatmul.mubr.f32.gmra.mrb[0].mxu0 %v4310
    %v4378 = vpop.f32.mrb[0].mxu0
    %v4379 = vadd.f32 0.0, %v4378
    %v4380 = vpop.f32.mrb[0].mxu0
    %v4381 = vadd.f32 0.0, %v4380
    %4382 = vdwg.mxu0
    %s4383 = scalar_lea.vmem %s8, 448
    %v4384 = vld [vmem:[%s4383] sm:$0xff]
    %v4385 = vld [vmem:[%s4383 + $0x8] sm:$0xff]
    %v4386 = vld [vmem:[%s4383 + $0x10] sm:$0xff]
    %v4387 = vld [vmem:[%s4383 + $0x18] sm:$0xff]
    %v4388 = vld [vmem:[%s4383 + $0x20] sm:$0xff]
    %v4389 = vld [vmem:[%s4383 + $0x28] sm:$0xff]
    %v4390 = vld [vmem:[%s4383 + $0x30] sm:$0xff]
    %v4391 = vld [vmem:[%s4383 + $0x38] sm:$0xff]
    %v4392 = vld [vmem:[%s4383 + $0x40] sm:$0xff]
    %v4393 = vld [vmem:[%s4383 + $0x48] sm:$0xff]
    %v4394 = vld [vmem:[%s4383 + $0x50] sm:$0xff]
    %v4395 = vld [vmem:[%s4383 + $0x58] sm:$0xff]
    %v4396 = vld [vmem:[%s4383 + $0x60] sm:$0xff]
    %v4397 = vld [vmem:[%s4383 + $0x68] sm:$0xff]
    %v4398 = vld [vmem:[%s4383 + $0x70] sm:$0xff]
    %v4399 = vld [vmem:[%s4383 + $0x78] sm:$0xff]
    %v4400 = vld [vmem:[%s4383 + $0x80] sm:$0xff]
    %v4401 = vld [vmem:[%s4383 + $0x88] sm:$0xff]
    %v4402 = vld [vmem:[%s4383 + $0x90] sm:$0xff]
    %v4403 = vld [vmem:[%s4383 + $0x98] sm:$0xff]
    %v4404 = vld [vmem:[%s4383 + $0xa0] sm:$0xff]
    %v4405 = vld [vmem:[%s4383 + $0xa8] sm:$0xff]
    %v4406 = vld [vmem:[%s4383 + $0xb0] sm:$0xff]
    %v4407 = vld [vmem:[%s4383 + $0xb8] sm:$0xff]
    %v4408 = vld [vmem:[%s4383 + $0xc0] sm:$0xff]
    %v4409 = vld [vmem:[%s4383 + $0xc8] sm:$0xff]
    %v4410 = vld [vmem:[%s4383 + $0xd0] sm:$0xff]
    %v4411 = vld [vmem:[%s4383 + $0xd8] sm:$0xff]
    %v4413 = vsel %vm4160, %v4381, 0
    %4415 = vmatprep.subr.mxu0 0.0
    %4416 = vmatpush1.msra.mxu0 %v4384
    %4417 = vmatprep.subr.mxu0 0.0
    %4418 = vmatpush1.msra.mxu0 %v4385
    %4419 = vmatprep.subr.mxu0 0.0
    %4420 = vmatpush1.msra.mxu0 %v4386
    %4421 = vmatprep.subr.mxu0 0.0
    %4422 = vmatpush1.msra.mxu0 %v4387
    %4423 = vmatprep.subr.mxu0 0.0
    %4424 = vmatpush1.msra.mxu0 %v4388
    %4425 = vmatprep.subr.mxu0 0.0
    %4426 = vmatpush1.msra.mxu0 %v4389
    %4427 = vmatprep.subr.mxu0 0.0
    %4428 = vmatpush1.msra.mxu0 %v4390
    %4429 = vmatprep.subr.mxu0 0.0
    %4430 = vmatpush1.msra.mxu0 %v4391
    %4431 = vmatprep.subr.mxu0 0.0
    %4432 = vmatpush1.msra.mxu0 %v4392
    %4433 = vmatprep.subr.mxu0 0.0
    %4434 = vmatpush1.msra.mxu0 %v4393
    %4435 = vmatprep.subr.mxu0 0.0
    %4436 = vmatpush1.msra.mxu0 %v4394
    %4437 = vmatprep.subr.mxu0 0.0
    %4438 = vmatpush1.msra.mxu0 %v4395
    %4439 = vmatprep.subr.mxu0 0.0
    %4440 = vmatpush1.msra.mxu0 %v4396
    %4441 = vmatprep.subr.mxu0 0.0
    %4442 = vmatpush1.msra.mxu0 %v4397
    %4443 = vmatprep.subr.mxu0 0.0
    %4444 = vmatpush1.msra.mxu0 %v4398
    %4445 = vmatprep.subr.mxu0 0.0
    %4446 = vmatpush1.msra.mxu0 %v4399
    %4447 = vmatprep.subr.mxu0 0.0
    %4448 = vmatpush1.msra.mxu0 %v4400
    %4449 = vmatprep.subr.mxu0 0.0
    %4450 = vmatpush1.msra.mxu0 %v4401
    %4451 = vmatprep.subr.mxu0 0.0
    %4452 = vmatpush1.msra.mxu0 %v4402
    %4453 = vmatprep.subr.mxu0 0.0
    %4454 = vmatpush1.msra.mxu0 %v4403
    %4455 = vmatprep.subr.mxu0 0.0
    %4456 = vmatpush1.msra.mxu0 %v4404
    %4457 = vmatprep.subr.mxu0 0.0
    %4458 = vmatpush1.msra.mxu0 %v4405
    %4459 = vmatprep.subr.mxu0 0.0
    %4460 = vmatpush1.msra.mxu0 %v4406
    %4461 = vmatprep.subr.mxu0 0.0
    %4462 = vmatpush1.msra.mxu0 %v4407
    %4463 = vmatprep.subr.mxu0 0.0
    %4464 = vmatpush1.msra.mxu0 %v4408
    %4465 = vmatprep.subr.mxu0 0.0
    %4466 = vmatpush1.msra.mxu0 %v4409
    %4467 = vmatprep.subr.mxu0 0.0
    %4468 = vmatpush1.msra.mxu0 %v4410
    %4469 = vmatprep.subr.mxu0 0.0
    %4470 = vmatpush1.msra.mxu0 %v4411
    %4471 = vmatprep.subr.mxu0 0.0
    %4472 = vmatpush1.msra.mxu0 0.0
    %4473 = vmatprep.subr.mxu0 0.0
    %4474 = vmatpush1.msra.mxu0 0.0
    %4475 = vmatprep.subr.mxu0 0.0
    %4476 = vmatpush1.msra.mxu0 0.0
    %4477 = vmatprep.subr.mxu0 0.0
    %4478 = vmatpush1.msra.mxu0 0.0
    %4479 = vmatprep.mubr.f32.mxu0 %v4413
    %4480 = vmatmul.mubr.f32.gmra.mrb[0].mxu0 %v4379
    %v4481 = vpop.f32.mrb[0].mxu0
    %v4482 = vadd.f32 0.0, %v4481
    %v4483 = vpop.f32.mrb[0].mxu0
    %4484 = vdwg.mxu0
    %v4485 = vadd.f32 %v4304, %v4482
    %s4486 = scalar_lea.vmem %s7, 12
    %v4487 = vld [vmem:[%s4486] sm:$0xf]
    %v4489 = vsel %vm3945, %v4487, 0
    %4491 = vmatprep.subr.mxu0 %v3941
    %4492 = vmatpush1.msra.mxu0 %v3940
    %4493 = vmatprep.subr.mxu0 %v3954
    %4494 = vmatpush1.msra.mxu0 %v3951
    %4495 = vmatprep.subr.mxu0 0.0
    %4496 = vmatpush1.msra.mxu0 0.0
    %4497 = vmatprep.subr.mxu0 0.0
    %4498 = vmatpush1.msra.mxu0 0.0
    %4499 = vmatprep.subr.mxu0 0.0
    %4500 = vmatpush1.msra.mxu0 0.0
    %4501 = vmatprep.subr.mxu0 0.0
    %4502 = vmatpush1.msra.mxu0 0.0
    %4503 = vmatprep.subr.mxu0 0.0
    %4504 = vmatpush1.msra.mxu0 0.0
    %4505 = vmatprep.subr.mxu0 0.0
    %4506 = vmatpush1.msra.mxu0 0.0
    %4507 = vmatprep.subr.mxu0 0.0
    %4508 = vmatpush1.msra.mxu0 0.0
    %4509 = vmatprep.subr.mxu0 0.0
    %4510 = vmatpush1.msra.mxu0 0.0
    %4511 = vmatprep.subr.mxu0 0.0
    %4512 = vmatpush1.msra.mxu0 0.0
    %4513 = vmatprep.subr.mxu0 0.0
    %4514 = vmatpush1.msra.mxu0 0.0
    %4515 = vmatprep.subr.mxu0 0.0
    %4516 = vmatpush1.msra.mxu0 0.0
    %4517 = vmatprep.subr.mxu0 0.0
    %4518 = vmatpush1.msra.mxu0 0.0
    %4519 = vmatprep.subr.mxu0 0.0
    %4520 = vmatpush1.msra.mxu0 0.0
    %4521 = vmatprep.subr.mxu0 0.0
    %4522 = vmatpush1.msra.mxu0 0.0
    %4523 = vmatprep.subr.mxu0 0.0
    %4524 = vmatpush1.msra.mxu0 0.0
    %4525 = vmatprep.subr.mxu0 0.0
    %4526 = vmatpush1.msra.mxu0 0.0
    %4527 = vmatprep.subr.mxu0 0.0
    %4528 = vmatpush1.msra.mxu0 0.0
    %4529 = vmatprep.subr.mxu0 0.0
    %4530 = vmatpush1.msra.mxu0 0.0
    %4531 = vmatprep.subr.mxu0 0.0
    %4532 = vmatpush1.msra.mxu0 0.0
    %4533 = vmatprep.subr.mxu0 0.0
    %4534 = vmatpush1.msra.mxu0 0.0
    %4535 = vmatprep.subr.mxu0 0.0
    %4536 = vmatpush1.msra.mxu0 0.0
    %4537 = vmatprep.subr.mxu0 0.0
    %4538 = vmatpush1.msra.mxu0 0.0
    %4539 = vmatprep.subr.mxu0 0.0
    %4540 = vmatpush1.msra.mxu0 0.0
    %4541 = vmatprep.subr.mxu0 0.0
    %4542 = vmatpush1.msra.mxu0 0.0
    %4543 = vmatprep.subr.mxu0 0.0
    %4544 = vmatpush1.msra.mxu0 0.0
    %4545 = vmatprep.subr.mxu0 0.0
    %4546 = vmatpush1.msra.mxu0 0.0
    %4547 = vmatprep.subr.mxu0 0.0
    %4548 = vmatpush1.msra.mxu0 0.0
    %4549 = vmatprep.subr.mxu0 0.0
    %4550 = vmatpush1.msra.mxu0 0.0
    %4551 = vmatprep.subr.mxu0 0.0
    %4552 = vmatpush1.msra.mxu0 0.0
    %4553 = vmatprep.subr.mxu0 0.0
    %4554 = vmatpush1.msra.mxu0 0.0
    %4555 = vmatprep.mubr.f32.mxu0 0.0
    %4556 = vmatmul.mubr.f32.gmra.mrb[0].mxu0 %v4489
    %v4557 = vpop.f32.mrb[0].mxu0
    %v4558 = vadd.f32 0.0, %v4557
    %v4559 = vpop.f32.mrb[0].mxu0
    %v4560 = vadd.f32 0.0, %v4559
    %4561 = vdwg.mxu0
    %s4562 = scalar_lea.vmem %s8, 672
    %v4563 = vld [vmem:[%s4562] sm:$0xff]
    %v4564 = vld [vmem:[%s4562 + $0x8] sm:$0xff]
    %v4565 = vld [vmem:[%s4562 + $0x10] sm:$0xff]
    %v4566 = vld [vmem:[%s4562 + $0x18] sm:$0xff]
    %v4567 = vld [vmem:[%s4562 + $0x20] sm:$0xff]
    %v4568 = vld [vmem:[%s4562 + $0x28] sm:$0xff]
    %v4569 = vld [vmem:[%s4562 + $0x30] sm:$0xff]
    %v4570 = vld [vmem:[%s4562 + $0x38] sm:$0xff]
    %v4571 = vld [vmem:[%s4562 + $0x40] sm:$0xff]
    %v4572 = vld [vmem:[%s4562 + $0x48] sm:$0xff]
    %v4573 = vld [vmem:[%s4562 + $0x50] sm:$0xff]
    %v4574 = vld [vmem:[%s4562 + $0x58] sm:$0xff]
    %v4575 = vld [vmem:[%s4562 + $0x60] sm:$0xff]
    %v4576 = vld [vmem:[%s4562 + $0x68] sm:$0xff]
    %v4577 = vld [vmem:[%s4562 + $0x70] sm:$0xff]
    %v4578 = vld [vmem:[%s4562 + $0x78] sm:$0xff]
    %v4579 = vld [vmem:[%s4562 + $0x80] sm:$0xff]
    %v4580 = vld [vmem:[%s4562 + $0x88] sm:$0xff]
    %v4581 = vld [vmem:[%s4562 + $0x90] sm:$0xff]
    %v4582 = vld [vmem:[%s4562 + $0x98] sm:$0xff]
    %v4583 = vld [vmem:[%s4562 + $0xa0] sm:$0xff]
    %v4584 = vld [vmem:[%s4562 + $0xa8] sm:$0xff]
    %v4585 = vld [vmem:[%s4562 + $0xb0] sm:$0xff]
    %v4586 = vld [vmem:[%s4562 + $0xb8] sm:$0xff]
    %v4587 = vld [vmem:[%s4562 + $0xc0] sm:$0xff]
    %v4588 = vld [vmem:[%s4562 + $0xc8] sm:$0xff]
    %v4589 = vld [vmem:[%s4562 + $0xd0] sm:$0xff]
    %v4590 = vld [vmem:[%s4562 + $0xd8] sm:$0xff]
    %v4592 = vsel %vm4160, %v4560, 0
    %4594 = vmatprep.subr.mxu0 0.0
    %4595 = vmatpush1.msra.mxu0 %v4563
    %4596 = vmatprep.subr.mxu0 0.0
    %4597 = vmatpush1.msra.mxu0 %v4564
    %4598 = vmatprep.subr.mxu0 0.0
    %4599 = vmatpush1.msra.mxu0 %v4565
    %4600 = vmatprep.subr.mxu0 0.0
    %4601 = vmatpush1.msra.mxu0 %v4566
    %4602 = vmatprep.subr.mxu0 0.0
    %4603 = vmatpush1.msra.mxu0 %v4567
    %4604 = vmatprep.subr.mxu0 0.0
    %4605 = vmatpush1.msra.mxu0 %v4568
    %4606 = vmatprep.subr.mxu0 0.0
    %4607 = vmatpush1.msra.mxu0 %v4569
    %4608 = vmatprep.subr.mxu0 0.0
    %4609 = vmatpush1.msra.mxu0 %v4570
    %4610 = vmatprep.subr.mxu0 0.0
    %4611 = vmatpush1.msra.mxu0 %v4571
    %4612 = vmatprep.subr.mxu0 0.0
    %4613 = vmatpush1.msra.mxu0 %v4572
    %4614 = vmatprep.subr.mxu0 0.0
    %4615 = vmatpush1.msra.mxu0 %v4573
    %4616 = vmatprep.subr.mxu0 0.0
    %4617 = vmatpush1.msra.mxu0 %v4574
    %4618 = vmatprep.subr.mxu0 0.0
    %4619 = vmatpush1.msra.mxu0 %v4575
    %4620 = vmatprep.subr.mxu0 0.0
    %4621 = vmatpush1.msra.mxu0 %v4576
    %4622 = vmatprep.subr.mxu0 0.0
    %4623 = vmatpush1.msra.mxu0 %v4577
    %4624 = vmatprep.subr.mxu0 0.0
    %4625 = vmatpush1.msra.mxu0 %v4578
    %4626 = vmatprep.subr.mxu0 0.0
    %4627 = vmatpush1.msra.mxu0 %v4579
    %4628 = vmatprep.subr.mxu0 0.0
    %4629 = vmatpush1.msra.mxu0 %v4580
    %4630 = vmatprep.subr.mxu0 0.0
    %4631 = vmatpush1.msra.mxu0 %v4581
    %4632 = vmatprep.subr.mxu0 0.0
    %4633 = vmatpush1.msra.mxu0 %v4582
    %4634 = vmatprep.subr.mxu0 0.0
    %4635 = vmatpush1.msra.mxu0 %v4583
    %4636 = vmatprep.subr.mxu0 0.0
    %4637 = vmatpush1.msra.mxu0 %v4584
    %4638 = vmatprep.subr.mxu0 0.0
    %4639 = vmatpush1.msra.mxu0 %v4585
    %4640 = vmatprep.subr.mxu0 0.0
    %4641 = vmatpush1.msra.mxu0 %v4586
    %4642 = vmatprep.subr.mxu0 0.0
    %4643 = vmatpush1.msra.mxu0 %v4587
    %4644 = vmatprep.subr.mxu0 0.0
    %4645 = vmatpush1.msra.mxu0 %v4588
    %4646 = vmatprep.subr.mxu0 0.0
    %4647 = vmatpush1.msra.mxu0 %v4589
    %4648 = vmatprep.subr.mxu0 0.0
    %4649 = vmatpush1.msra.mxu0 %v4590
    %4650 = vmatprep.subr.mxu0 0.0
    %4651 = vmatpush1.msra.mxu0 0.0
    %4652 = vmatprep.subr.mxu0 0.0
    %4653 = vmatpush1.msra.mxu0 0.0
    %4654 = vmatprep.subr.mxu0 0.0
    %4655 = vmatpush1.msra.mxu0 0.0
    %4656 = vmatprep.subr.mxu0 0.0
    %4657 = vmatpush1.msra.mxu0 0.0
    %4658 = vmatprep.mubr.f32.mxu0 %v4592
    %4659 = vmatmul.mubr.f32.gmra.mrb[0].mxu0 %v4558
    %v4660 = vpop.f32.mrb[0].mxu0
    %v4661 = vadd.f32 0.0, %v4660
    %v4662 = vpop.f32.mrb[0].mxu0
    %4663 = vdwg.mxu0
    %v4664 = vadd.f32 %v4485, %v4661
    %s4665 = scalar_lea.vmem %s7, 16
    %v4666 = vld [vmem:[%s4665] sm:$0xf]
    %v4668 = vsel %vm3945, %v4666, 0
    %4670 = vmatprep.subr.mxu0 %v3941
    %4671 = vmatpush1.msra.mxu0 %v3940
    %4672 = vmatprep.subr.mxu0 %v3954
    %4673 = vmatpush1.msra.mxu0 %v3951
    %4674 = vmatprep.subr.mxu0 0.0
    %4675 = vmatpush1.msra.mxu0 0.0
    %4676 = vmatprep.subr.mxu0 0.0
    %4677 = vmatpush1.msra.mxu0 0.0
    %4678 = vmatprep.subr.mxu0 0.0
    %4679 = vmatpush1.msra.mxu0 0.0
    %4680 = vmatprep.subr.mxu0 0.0
    %4681 = vmatpush1.msra.mxu0 0.0
    %4682 = vmatprep.subr.mxu0 0.0
    %4683 = vmatpush1.msra.mxu0 0.0
    %4684 = vmatprep.subr.mxu0 0.0
    %4685 = vmatpush1.msra.mxu0 0.0
    %4686 = vmatprep.subr.mxu0 0.0
    %4687 = vmatpush1.msra.mxu0 0.0
    %4688 = vmatprep.subr.mxu0 0.0
    %4689 = vmatpush1.msra.mxu0 0.0
    %4690 = vmatprep.subr.mxu0 0.0
    %4691 = vmatpush1.msra.mxu0 0.0
    %4692 = vmatprep.subr.mxu0 0.0
    %4693 = vmatpush1.msra.mxu0 0.0
    %4694 = vmatprep.subr.mxu0 0.0
    %4695 = vmatpush1.msra.mxu0 0.0
    %4696 = vmatprep.subr.mxu0 0.0
    %4697 = vmatpush1.msra.mxu0 0.0
    %4698 = vmatprep.subr.mxu0 0.0
    %4699 = vmatpush1.msra.mxu0 0.0
    %4700 = vmatprep.subr.mxu0 0.0
    %4701 = vmatpush1.msra.mxu0 0.0
    %4702 = vmatprep.subr.mxu0 0.0
    %4703 = vmatpush1.msra.mxu0 0.0
    %4704 = vmatprep.subr.mxu0 0.0
    %4705 = vmatpush1.msra.mxu0 0.0
    %4706 = vmatprep.subr.mxu0 0.0
    %4707 = vmatpush1.msra.mxu0 0.0
    %4708 = vmatprep.subr.mxu0 0.0
    %4709 = vmatpush1.msra.mxu0 0.0
    %4710 = vmatprep.subr.mxu0 0.0
    %4711 = vmatpush1.msra.mxu0 0.0
    %4712 = vmatprep.subr.mxu0 0.0
    %4713 = vmatpush1.msra.mxu0 0.0
    %4714 = vmatprep.subr.mxu0 0.0
    %4715 = vmatpush1.msra.mxu0 0.0
    %4716 = vmatprep.subr.mxu0 0.0
    %4717 = vmatpush1.msra.mxu0 0.0
    %4718 = vmatprep.subr.mxu0 0.0
    %4719 = vmatpush1.msra.mxu0 0.0
    %4720 = vmatprep.subr.mxu0 0.0
    %4721 = vmatpush1.msra.mxu0 0.0
    %4722 = vmatprep.subr.mxu0 0.0
    %4723 = vmatpush1.msra.mxu0 0.0
    %4724 = vmatprep.subr.mxu0 0.0
    %4725 = vmatpush1.msra.mxu0 0.0
    %4726 = vmatprep.subr.mxu0 0.0
    %4727 = vmatpush1.msra.mxu0 0.0
    %4728 = vmatprep.subr.mxu0 0.0
    %4729 = vmatpush1.msra.mxu0 0.0
    %4730 = vmatprep.subr.mxu0 0.0
    %4731 = vmatpush1.msra.mxu0 0.0
    %4732 = vmatprep.subr.mxu0 0.0
    %4733 = vmatpush1.msra.mxu0 0.0
    %4734 = vmatprep.mubr.f32.mxu0 0.0
    %4735 = vmatmul.mubr.f32.gmra.mrb[0].mxu0 %v4668
    %v4736 = vpop.f32.mrb[0].mxu0
    %v4737 = vadd.f32 0.0, %v4736
    %v4738 = vpop.f32.mrb[0].mxu0
    %v4739 = vadd.f32 0.0, %v4738
    %4740 = vdwg.mxu0
    %s4741 = scalar_lea.vmem %s8, 896
    %v4742 = vld [vmem:[%s4741] sm:$0xff]
    %v4743 = vld [vmem:[%s4741 + $0x8] sm:$0xff]
    %v4744 = vld [vmem:[%s4741 + $0x10] sm:$0xff]
    %v4745 = vld [vmem:[%s4741 + $0x18] sm:$0xff]
    %v4746 = vld [vmem:[%s4741 + $0x20] sm:$0xff]
    %v4747 = vld [vmem:[%s4741 + $0x28] sm:$0xff]
    %v4748 = vld [vmem:[%s4741 + $0x30] sm:$0xff]
    %v4749 = vld [vmem:[%s4741 + $0x38] sm:$0xff]
    %v4750 = vld [vmem:[%s4741 + $0x40] sm:$0xff]
    %v4751 = vld [vmem:[%s4741 + $0x48] sm:$0xff]
    %v4752 = vld [vmem:[%s4741 + $0x50] sm:$0xff]
    %v4753 = vld [vmem:[%s4741 + $0x58] sm:$0xff]
    %v4754 = vld [vmem:[%s4741 + $0x60] sm:$0xff]
    %v4755 = vld [vmem:[%s4741 + $0x68] sm:$0xff]
    %v4756 = vld [vmem:[%s4741 + $0x70] sm:$0xff]
    %v4757 = vld [vmem:[%s4741 + $0x78] sm:$0xff]
    %v4758 = vld [vmem:[%s4741 + $0x80] sm:$0xff]
    %v4759 = vld [vmem:[%s4741 + $0x88] sm:$0xff]
    %v4760 = vld [vmem:[%s4741 + $0x90] sm:$0xff]
    %v4761 = vld [vmem:[%s4741 + $0x98] sm:$0xff]
    %v4762 = vld [vmem:[%s4741 + $0xa0] sm:$0xff]
    %v4763 = vld [vmem:[%s4741 + $0xa8] sm:$0xff]
    %v4764 = vld [vmem:[%s4741 + $0xb0] sm:$0xff]
    %v4765 = vld [vmem:[%s4741 + $0xb8] sm:$0xff]
    %v4766 = vld [vmem:[%s4741 + $0xc0] sm:$0xff]
    %v4767 = vld [vmem:[%s4741 + $0xc8] sm:$0xff]
    %v4768 = vld [vmem:[%s4741 + $0xd0] sm:$0xff]
    %v4769 = vld [vmem:[%s4741 + $0xd8] sm:$0xff]
    %v4771 = vsel %vm4160, %v4739, 0
    %4773 = vmatprep.subr.mxu0 0.0
    %4774 = vmatpush1.msra.mxu0 %v4742
    %4775 = vmatprep.subr.mxu0 0.0
    %4776 = vmatpush1.msra.mxu0 %v4743
    %4777 = vmatprep.subr.mxu0 0.0
    %4778 = vmatpush1.msra.mxu0 %v4744
    %4779 = vmatprep.subr.mxu0 0.0
    %4780 = vmatpush1.msra.mxu0 %v4745
    %4781 = vmatprep.subr.mxu0 0.0
    %4782 = vmatpush1.msra.mxu0 %v4746
    %4783 = vmatprep.subr.mxu0 0.0
    %4784 = vmatpush1.msra.mxu0 %v4747
    %4785 = vmatprep.subr.mxu0 0.0
    %4786 = vmatpush1.msra.mxu0 %v4748
    %4787 = vmatprep.subr.mxu0 0.0
    %4788 = vmatpush1.msra.mxu0 %v4749
    %4789 = vmatprep.subr.mxu0 0.0
    %4790 = vmatpush1.msra.mxu0 %v4750
    %4791 = vmatprep.subr.mxu0 0.0
    %4792 = vmatpush1.msra.mxu0 %v4751
    %4793 = vmatprep.subr.mxu0 0.0
    %4794 = vmatpush1.msra.mxu0 %v4752
    %4795 = vmatprep.subr.mxu0 0.0
    %4796 = vmatpush1.msra.mxu0 %v4753
    %4797 = vmatprep.subr.mxu0 0.0
    %4798 = vmatpush1.msra.mxu0 %v4754
    %4799 = vmatprep.subr.mxu0 0.0
    %4800 = vmatpush1.msra.mxu0 %v4755
    %4801 = vmatprep.subr.mxu0 0.0
    %4802 = vmatpush1.msra.mxu0 %v4756
    %4803 = vmatprep.subr.mxu0 0.0
    %4804 = vmatpush1.msra.mxu0 %v4757
    %4805 = vmatprep.subr.mxu0 0.0
    %4806 = vmatpush1.msra.mxu0 %v4758
    %4807 = vmatprep.subr.mxu0 0.0
    %4808 = vmatpush1.msra.mxu0 %v4759
    %4809 = vmatprep.subr.mxu0 0.0
    %4810 = vmatpush1.msra.mxu0 %v4760
    %4811 = vmatprep.subr.mxu0 0.0
    %4812 = vmatpush1.msra.mxu0 %v4761
    %4813 = vmatprep.subr.mxu0 0.0
    %4814 = vmatpush1.msra.mxu0 %v4762
    %4815 = vmatprep.subr.mxu0 0.0
    %4816 = vmatpush1.msra.mxu0 %v4763
    %4817 = vmatprep.subr.mxu0 0.0
    %4818 = vmatpush1.msra.mxu0 %v4764
    %4819 = vmatprep.subr.mxu0 0.0
    %4820 = vmatpush1.msra.mxu0 %v4765
    %4821 = vmatprep.subr.mxu0 0.0
    %4822 = vmatpush1.msra.mxu0 %v4766
    %4823 = vmatprep.subr.mxu0 0.0
    %4824 = vmatpush1.msra.mxu0 %v4767
    %4825 = vmatprep.subr.mxu0 0.0
    %4826 = vmatpush1.msra.mxu0 %v4768
    %4827 = vmatprep.subr.mxu0 0.0
    %4828 = vmatpush1.msra.mxu0 %v4769
    %4829 = vmatprep.subr.mxu0 0.0
    %4830 = vmatpush1.msra.mxu0 0.0
    %4831 = vmatprep.subr.mxu0 0.0
    %4832 = vmatpush1.msra.mxu0 0.0
    %4833 = vmatprep.subr.mxu0 0.0
    %4834 = vmatpush1.msra.mxu0 0.0
    %4835 = vmatprep.subr.mxu0 0.0
    %4836 = vmatpush1.msra.mxu0 0.0
    %4837 = vmatprep.mubr.f32.mxu0 %v4771
    %4838 = vmatmul.mubr.f32.gmra.mrb[0].mxu0 %v4737
    %v4839 = vpop.f32.mrb[0].mxu0
    %v4840 = vadd.f32 0.0, %v4839
    %v4841 = vpop.f32.mrb[0].mxu0
    %4842 = vdwg.mxu0
    %v4843 = vadd.f32 %v4664, %v4840
    %v4844 = vld [vmem:[%s9] sm:$0x1]
    %v4846 = vlaneseq
    %v4847 = vshrl.u32 %v4846, 7
    %v4848 = vsub.s32 0, %v4847
    %v4849 = vrot.slane %v4844, %v4848
    %v4851 = vadd.f32 %v4843, %v4849
    %v4852 = vmax.f32 %v4851, 0.0
    %v4853 = vld [vmem:[%s10] sm:$0x3]
    %vm4854 = vcmask 31744
    %v4856 = vsel %vm4854, %v4853, 0
    %v4859 = vsel %vm1941, %v4852, 0
    %4861 = vmatprep.subr.mxu0 0.0
    %4862 = vmatpush1.msra.mxu0 %v4859
    %4863 = vmatprep.subr.mxu0 0.0
    %4864 = vmatpush1.msra.mxu0 0.0
    %4865 = vmatprep.subr.mxu0 0.0
    %4866 = vmatpush1.msra.mxu0 0.0
    %4867 = vmatprep.subr.mxu0 0.0
    %4868 = vmatpush1.msra.mxu0 0.0
    %4869 = vmatprep.subr.mxu0 0.0
    %4870 = vmatpush1.msra.mxu0 0.0
    %4871 = vmatprep.subr.mxu0 0.0
    %4872 = vmatpush1.msra.mxu0 0.0
    %4873 = vmatprep.subr.mxu0 0.0
    %4874 = vmatpush1.msra.mxu0 0.0
    %4875 = vmatprep.subr.mxu0 0.0
    %4876 = vmatpush1.msra.mxu0 0.0
    %4877 = vmatprep.subr.mxu0 0.0
    %4878 = vmatpush1.msra.mxu0 0.0
    %4879 = vmatprep.subr.mxu0 0.0
    %4880 = vmatpush1.msra.mxu0 0.0
    %4881 = vmatprep.subr.mxu0 0.0
    %4882 = vmatpush1.msra.mxu0 0.0
    %4883 = vmatprep.subr.mxu0 0.0
    %4884 = vmatpush1.msra.mxu0 0.0
    %4885 = vmatprep.subr.mxu0 0.0
    %4886 = vmatpush1.msra.mxu0 0.0
    %4887 = vmatprep.subr.mxu0 0.0
    %4888 = vmatpush1.msra.mxu0 0.0
    %4889 = vmatprep.subr.mxu0 0.0
    %4890 = vmatpush1.msra.mxu0 0.0
    %4891 = vmatprep.subr.mxu0 0.0
    %4892 = vmatpush1.msra.mxu0 0.0
    %4893 = vmatprep.subr.mxu0 0.0
    %4894 = vmatpush1.msra.mxu0 0.0
    %4895 = vmatprep.subr.mxu0 0.0
    %4896 = vmatpush1.msra.mxu0 0.0
    %4897 = vmatprep.subr.mxu0 0.0
    %4898 = vmatpush1.msra.mxu0 0.0
    %4899 = vmatprep.subr.mxu0 0.0
    %4900 = vmatpush1.msra.mxu0 0.0
    %4901 = vmatprep.subr.mxu0 0.0
    %4902 = vmatpush1.msra.mxu0 0.0
    %4903 = vmatprep.subr.mxu0 0.0
    %4904 = vmatpush1.msra.mxu0 0.0
    %4905 = vmatprep.subr.mxu0 0.0
    %4906 = vmatpush1.msra.mxu0 0.0
    %4907 = vmatprep.subr.mxu0 0.0
    %4908 = vmatpush1.msra.mxu0 0.0
    %4909 = vmatprep.subr.mxu0 0.0
    %4910 = vmatpush1.msra.mxu0 0.0
    %4911 = vmatprep.subr.mxu0 0.0
    %4912 = vmatpush1.msra.mxu0 0.0
    %4913 = vmatprep.subr.mxu0 0.0
    %4914 = vmatpush1.msra.mxu0 0.0
    %4915 = vmatprep.subr.mxu0 0.0
    %4916 = vmatpush1.msra.mxu0 0.0
    %4917 = vmatprep.subr.mxu0 0.0
    %4918 = vmatpush1.msra.mxu0 0.0
    %4919 = vmatprep.subr.mxu0 0.0
    %4920 = vmatpush1.msra.mxu0 0.0
    %4921 = vmatprep.subr.mxu0 0.0
    %4922 = vmatpush1.msra.mxu0 0.0
    %4923 = vmatprep.subr.mxu0 0.0
    %4924 = vmatpush1.msra.mxu0 0.0
    %4925 = vmatprep.mubr.f32.mxu0 0.0
    %4926 = vmatmul.mubr.f32.gmra.mrb[0].mxu0 %v4856
    %v4927 = vpop.f32.mrb[0].mxu0
    %v4928 = vadd.f32 0.0, %v4927
    %v4929 = vpop.f32.mrb[0].mxu0
    %4930 = vdwg.mxu0
    %v4931 = vld [vmem:[%s11] sm:$0xff]
    %v4932 = vld [vmem:[%s11 + $0x8] sm:$0xff]
    %v4933 = vld [vmem:[%s11 + $0x10] sm:$0xff]
    %v4934 = vld [vmem:[%s11 + $0x18] sm:$0xff]
    %v4935 = vld [vmem:[%s11 + $0x20] sm:$0xff]
    %v4936 = vld [vmem:[%s11 + $0x28] sm:$0xff]
    %v4937 = vld [vmem:[%s11 + $0x30] sm:$0xff]
    %v4938 = vld [vmem:[%s11 + $0x38] sm:$0xff]
    %s4939 = scalar_lea.vmem %s10, 2
    %v4940 = vld [vmem:[%s4939] sm:$0x3]
    %v4942 = vsel %vm4854, %v4940, 0
    %4944 = vmatprep.subr.mxu0 0.0
    %4945 = vmatpush1.msra.mxu0 %v4859
    %4946 = vmatprep.subr.mxu0 0.0
    %4947 = vmatpush1.msra.mxu0 0.0
    %4948 = vmatprep.subr.mxu0 0.0
    %4949 = vmatpush1.msra.mxu0 0.0
    %4950 = vmatprep.subr.mxu0 0.0
    %4951 = vmatpush1.msra.mxu0 0.0
    %4952 = vmatprep.subr.mxu0 0.0
    %4953 = vmatpush1.msra.mxu0 0.0
    %4954 = vmatprep.subr.mxu0 0.0
    %4955 = vmatpush1.msra.mxu0 0.0
    %4956 = vmatprep.subr.mxu0 0.0
    %4957 = vmatpush1.msra.mxu0 0.0
    %4958 = vmatprep.subr.mxu0 0.0
    %4959 = vmatpush1.msra.mxu0 0.0
    %4960 = vmatprep.subr.mxu0 0.0
    %4961 = vmatpush1.msra.mxu0 0.0
    %4962 = vmatprep.subr.mxu0 0.0
    %4963 = vmatpush1.msra.mxu0 0.0
    %4964 = vmatprep.subr.mxu0 0.0
    %4965 = vmatpush1.msra.mxu0 0.0
    %4966 = vmatprep.subr.mxu0 0.0
    %4967 = vmatpush1.msra.mxu0 0.0
    %4968 = vmatprep.subr.mxu0 0.0
    %4969 = vmatpush1.msra.mxu0 0.0
    %4970 = vmatprep.subr.mxu0 0.0
    %4971 = vmatpush1.msra.mxu0 0.0
    %4972 = vmatprep.subr.mxu0 0.0
    %4973 = vmatpush1.msra.mxu0 0.0
    %4974 = vmatprep.subr.mxu0 0.0
    %4975 = vmatpush1.msra.mxu0 0.0
    %4976 = vmatprep.subr.mxu0 0.0
    %4977 = vmatpush1.msra.mxu0 0.0
    %4978 = vmatprep.subr.mxu0 0.0
    %4979 = vmatpush1.msra.mxu0 0.0
    %4980 = vmatprep.subr.mxu0 0.0
    %4981 = vmatpush1.msra.mxu0 0.0
    %4982 = vmatprep.subr.mxu0 0.0
    %4983 = vmatpush1.msra.mxu0 0.0
    %4984 = vmatprep.subr.mxu0 0.0
    %4985 = vmatpush1.msra.mxu0 0.0
    %4986 = vmatprep.subr.mxu0 0.0
    %4987 = vmatpush1.msra.mxu0 0.0
    %4988 = vmatprep.subr.mxu0 0.0
    %4989 = vmatpush1.msra.mxu0 0.0
    %4990 = vmatprep.subr.mxu0 0.0
    %4991 = vmatpush1.msra.mxu0 0.0
    %4992 = vmatprep.subr.mxu0 0.0
    %4993 = vmatpush1.msra.mxu0 0.0
    %4994 = vmatprep.subr.mxu0 0.0
    %4995 = vmatpush1.msra.mxu0 0.0
    %4996 = vmatprep.subr.mxu0 0.0
    %4997 = vmatpush1.msra.mxu0 0.0
    %4998 = vmatprep.subr.mxu0 0.0
    %4999 = vmatpush1.msra.mxu0 0.0
    %5000 = vmatprep.subr.mxu0 0.0
    %5001 = vmatpush1.msra.mxu0 0.0
    %5002 = vmatprep.subr.mxu0 0.0
    %5003 = vmatpush1.msra.mxu0 0.0
    %5004 = vmatprep.subr.mxu0 0.0
    %5005 = vmatpush1.msra.mxu0 0.0
    %5006 = vmatprep.subr.mxu0 0.0
    %5007 = vmatpush1.msra.mxu0 0.0
    %5008 = vmatprep.mubr.f32.mxu0 0.0
    %5009 = vmatmul.mubr.f32.gmra.mrb[0].mxu0 %v4942
    %v5010 = vpop.f32.mrb[0].mxu0
    %v5011 = vadd.f32 0.0, %v5010
    %v5012 = vpop.f32.mrb[0].mxu0
    %5013 = vdwg.mxu0
    %s5014 = scalar_lea.vmem %s11, 64
    %v5015 = vld [vmem:[%s5014] sm:$0xff]
    %v5016 = vld [vmem:[%s5014 + $0x8] sm:$0xff]
    %v5017 = vld [vmem:[%s5014 + $0x10] sm:$0xff]
    %v5018 = vld [vmem:[%s5014 + $0x18] sm:$0xff]
    %v5019 = vld [vmem:[%s5014 + $0x20] sm:$0xff]
    %v5020 = vld [vmem:[%s5014 + $0x28] sm:$0xff]
    %v5021 = vld [vmem:[%s5014 + $0x30] sm:$0xff]
    %v5022 = vld [vmem:[%s5014 + $0x38] sm:$0xff]
    %vm5023 = vcmask 523264
    %v5025 = vsel %vm5023, %v5011, 0
    %5027 = vmatprep.subr.mxu0 0.0
    %5028 = vmatpush1.msra.mxu0 %v5015
    %5029 = vmatprep.subr.mxu0 0.0
    %5030 = vmatpush1.msra.mxu0 %v5016
    %5031 = vmatprep.subr.mxu0 0.0
    %5032 = vmatpush1.msra.mxu0 %v5017
    %5033 = vmatprep.subr.mxu0 0.0
    %5034 = vmatpush1.msra.mxu0 %v5018
    %5035 = vmatprep.subr.mxu0 0.0
    %5036 = vmatpush1.msra.mxu0 %v5019
    %5037 = vmatprep.subr.mxu0 0.0
    %5038 = vmatpush1.msra.mxu0 %v5020
    %5039 = vmatprep.subr.mxu0 0.0
    %5040 = vmatpush1.msra.mxu0 %v5021
    %5041 = vmatprep.subr.mxu0 0.0
    %5042 = vmatpush1.msra.mxu0 %v5022
    %5043 = vmatprep.subr.mxu0 0.0
    %5044 = vmatpush1.msra.mxu0 0.0
    %5045 = vmatprep.subr.mxu0 0.0
    %5046 = vmatpush1.msra.mxu0 0.0
    %5047 = vmatprep.subr.mxu0 0.0
    %5048 = vmatpush1.msra.mxu0 0.0
    %5049 = vmatprep.subr.mxu0 0.0
    %5050 = vmatpush1.msra.mxu0 0.0
    %5051 = vmatprep.subr.mxu0 0.0
    %5052 = vmatpush1.msra.mxu0 0.0
    %5053 = vmatprep.subr.mxu0 0.0
    %5054 = vmatpush1.msra.mxu0 0.0
    %5055 = vmatprep.subr.mxu0 0.0
    %5056 = vmatpush1.msra.mxu0 0.0
    %5057 = vmatprep.subr.mxu0 0.0
    %5058 = vmatpush1.msra.mxu0 0.0
    %5059 = vmatprep.subr.mxu0 0.0
    %5060 = vmatpush1.msra.mxu0 0.0
    %5061 = vmatprep.subr.mxu0 0.0
    %5062 = vmatpush1.msra.mxu0 0.0
    %5063 = vmatprep.subr.mxu0 0.0
    %5064 = vmatpush1.msra.mxu0 0.0
    %5065 = vmatprep.subr.mxu0 0.0
    %5066 = vmatpush1.msra.mxu0 0.0
    %5067 = vmatprep.subr.mxu0 0.0
    %5068 = vmatpush1.msra.mxu0 0.0
    %5069 = vmatprep.subr.mxu0 0.0
    %5070 = vmatpush1.msra.mxu0 0.0
    %5071 = vmatprep.subr.mxu0 0.0
    %5072 = vmatpush1.msra.mxu0 0.0
    %5073 = vmatprep.subr.mxu0 0.0
    %5074 = vmatpush1.msra.mxu0 0.0
    %5075 = vmatprep.subr.mxu0 0.0
    %5076 = vmatpush1.msra.mxu0 0.0
    %5077 = vmatprep.subr.mxu0 0.0
    %5078 = vmatpush1.msra.mxu0 0.0
    %5079 = vmatprep.subr.mxu0 0.0
    %5080 = vmatpush1.msra.mxu0 0.0
    %5081 = vmatprep.subr.mxu0 0.0
    %5082 = vmatpush1.msra.mxu0 0.0
    %5083 = vmatprep.subr.mxu0 0.0
    %5084 = vmatpush1.msra.mxu0 0.0
    %5085 = vmatprep.subr.mxu0 0.0
    %5086 = vmatpush1.msra.mxu0 0.0
    %5087 = vmatprep.subr.mxu0 0.0
    %5088 = vmatpush1.msra.mxu0 0.0
    %5089 = vmatprep.subr.mxu0 0.0
    %5090 = vmatpush1.msra.mxu0 0.0
    %5091 = vmatprep.mubr.f32.mxu0 0.0
    %5092 = vmatmul.mubr.f32.gmra.mrb[0].mxu0 %v5025
    %v5093 = vpop.f32.mrb[0].mxu0
    %v5094 = vadd.f32 0.0, %v5093
    %v5095 = vpop.f32.mrb[0].mxu0
    %5096 = vdwg.mxu0
    %v5098 = vsel %vm5023, %v4928, 0
    %5100 = vmatprep.subr.mxu0 0.0
    %5101 = vmatpush1.msra.mxu0 %v4931
    %5102 = vmatprep.subr.mxu0 0.0
    %5103 = vmatpush1.msra.mxu0 %v4932
    %5104 = vmatprep.subr.mxu0 0.0
    %5105 = vmatpush1.msra.mxu0 %v4933
    %5106 = vmatprep.subr.mxu0 0.0
    %5107 = vmatpush1.msra.mxu0 %v4934
    %5108 = vmatprep.subr.mxu0 0.0
    %5109 = vmatpush1.msra.mxu0 %v4935
    %5110 = vmatprep.subr.mxu0 0.0
    %5111 = vmatpush1.msra.mxu0 %v4936
    %5112 = vmatprep.subr.mxu0 0.0
    %5113 = vmatpush1.msra.mxu0 %v4937
    %5114 = vmatprep.subr.mxu0 0.0
    %5115 = vmatpush1.msra.mxu0 %v4938
    %5116 = vmatprep.subr.mxu0 0.0
    %5117 = vmatpush1.msra.mxu0 0.0
    %5118 = vmatprep.subr.mxu0 0.0
    %5119 = vmatpush1.msra.mxu0 0.0
    %5120 = vmatprep.subr.mxu0 0.0
    %5121 = vmatpush1.msra.mxu0 0.0
    %5122 = vmatprep.subr.mxu0 0.0
    %5123 = vmatpush1.msra.mxu0 0.0
    %5124 = vmatprep.subr.mxu0 0.0
    %5125 = vmatpush1.msra.mxu0 0.0
    %5126 = vmatprep.subr.mxu0 0.0
    %5127 = vmatpush1.msra.mxu0 0.0
    %5128 = vmatprep.subr.mxu0 0.0
    %5129 = vmatpush1.msra.mxu0 0.0
    %5130 = vmatprep.subr.mxu0 0.0
    %5131 = vmatpush1.msra.mxu0 0.0
    %5132 = vmatprep.subr.mxu0 0.0
    %5133 = vmatpush1.msra.mxu0 0.0
    %5134 = vmatprep.subr.mxu0 0.0
    %5135 = vmatpush1.msra.mxu0 0.0
    %5136 = vmatprep.subr.mxu0 0.0
    %5137 = vmatpush1.msra.mxu0 0.0
    %5138 = vmatprep.subr.mxu0 0.0
    %5139 = vmatpush1.msra.mxu0 0.0
    %5140 = vmatprep.subr.mxu0 0.0
    %5141 = vmatpush1.msra.mxu0 0.0
    %5142 = vmatprep.subr.mxu0 0.0
    %5143 = vmatpush1.msra.mxu0 0.0
    %5144 = vmatprep.subr.mxu0 0.0
    %5145 = vmatpush1.msra.mxu0 0.0
    %5146 = vmatprep.subr.mxu0 0.0
    %5147 = vmatpush1.msra.mxu0 0.0
    %5148 = vmatprep.subr.mxu0 0.0
    %5149 = vmatpush1.msra.mxu0 0.0
    %5150 = vmatprep.subr.mxu0 0.0
    %5151 = vmatpush1.msra.mxu0 0.0
    %5152 = vmatprep.subr.mxu0 0.0
    %5153 = vmatpush1.msra.mxu0 0.0
    %5154 = vmatprep.subr.mxu0 0.0
    %5155 = vmatpush1.msra.mxu0 0.0
    %5156 = vmatprep.subr.mxu0 0.0
    %5157 = vmatpush1.msra.mxu0 0.0
    %5158 = vmatprep.subr.mxu0 0.0
    %5159 = vmatpush1.msra.mxu0 0.0
    %5160 = vmatprep.subr.mxu0 0.0
    %5161 = vmatpush1.msra.mxu0 0.0
    %5162 = vmatprep.subr.mxu0 0.0
    %5163 = vmatpush1.msra.mxu0 0.0
    %5164 = vmatprep.mubr.f32.mxu0 0.0
    %5165 = vmatmul.mubr.f32.gmra.mrb[0].mxu0 %v5098
    %v5166 = vpop.f32.mrb[0].mxu0
    %v5167 = vadd.f32 %v5094, %v5166
    %v5168 = vpop.f32.mrb[0].mxu0
    %5169 = vdwg.mxu0
    %v5170 = vld [vmem:[%s12] sm:$0x1]
    %v5172 = vlaneseq
    %v5173 = vshrl.u32 %v5172, 7
    %v5174 = vsub.s32 0, %v5173
    %v5175 = vrot.slane %v5170, %v5174
    %v5177 = vadd.f32 %v5167, %v5175
    %vm5178 = vcmask 91136
    %5179 = vst.msk [vmem:[#allocation2] sm:$0x3] %vm5178, %v5177
    // Predicated region
    $region54: #{tpu_custom_call.1} parent=1 // pred_check
      _
    $region55: #{tpu_custom_call.1} parent=1 // pred_check_branch
      %5181 = sbr.rel (0) target = $region57
    $region56: #{tpu_custom_call.1} parent=1 // pred_region
      %s5183 = ssub.s32 32, 32
      %5184 = vsyncadd [#allocation3], %s5183
      %s5186 = sshll.u32 [#allocation2], 4
      %s5187 = int_to_ptr.vmem [resolvable:$true] %s5186
      %5189 = dma.vmem_to_hbm [thread:$0]  %s5187, 32, %s13, [#allocation3]
    $region57: #{tpu_custom_call.1} parent=1 // pred_fallthru
      _
    // Predicated region
    $region58: #{tpu_custom_call.1} parent=1 // pred_check
      _
    $region59: #{tpu_custom_call.1} parent=1 // pred_check_branch
      %5191 = sbr.rel (0) target = $region61
    $region60: #{tpu_custom_call.1} parent=1 // pred_region
      %5192 = dma.done [#allocation3], 32
    $region61: #{tpu_custom_call.1} parent=1 // pred_fallthru
      _
    %5193 = vsyncpa [#allocation3], 1

</llo_original>
